<compile_context>
chip_gen: v7x
topology: tpu7x:2x2x1
jax: 0.10.0
libtpu: 0.0.40
codegen_flags: <defaults>
</compile_context>

<pallas_src>
import jax
import jax.numpy as jnp
from jax.experimental import pallas as pl
from jax.experimental.pallas import tpu as pltpu

BN_EPS = 1e-3


def _round_up(a, b):
    return (a + b - 1) // b * b


# ---------------------------------------------------------------------------
# Kernel 1: fused 1x1 convs (branch1 + branch2-reduce + branch3-reduce)
# ---------------------------------------------------------------------------
def _stem_kernel(x_ref, w_ref, b_ref, o_ref):
    acc = jnp.dot(x_ref[...], w_ref[...], preferred_element_type=jnp.float32)
    o_ref[...] = jnp.maximum(acc + b_ref[...], 0.0).astype(o_ref.dtype)


def _fused_1x1(x2d_bf16, w_bf16, bias_f32):
    """relu(x @ w + b); x:(M,K) bf16, w:(K,N) bf16, bias:(N,) f32 -> (M,N) bf16."""
    M, K = x2d_bf16.shape
    Nout = w_bf16.shape[1]
    TM = min(1024, _round_up(M, 8))
    Mp = _round_up(M, TM)
    x_in = x2d_bf16 if Mp == M else jnp.pad(x2d_bf16, ((0, Mp - M), (0, 0)))
    out = pl.pallas_call(
        _stem_kernel,
        out_shape=jax.ShapeDtypeStruct((Mp, Nout), jnp.bfloat16),
        grid=(Mp // TM,),
        in_specs=[
            pl.BlockSpec((TM, K), lambda i: (i, 0)),
            pl.BlockSpec((K, Nout), lambda i: (0, 0)),
            pl.BlockSpec((1, Nout), lambda i: (0, 0)),
        ],
        out_specs=pl.BlockSpec((TM, Nout), lambda i: (i, 0)),
        compiler_params=pltpu.CompilerParams(dimension_semantics=("parallel",)),
    )(x_in, w_bf16, bias_f32.reshape(1, Nout))
    return out if Mp == M else out[:M]


# ---------------------------------------------------------------------------
# Kernel 2: per image — single fused matmul for all four branches
# ---------------------------------------------------------------------------
def _make_spatial_kernel(H, W, C_stem, Cin):
    HW = H * W

    def kernel(stem_ref, x_ref, w_ref, b_ref, o_ref):
        stem = stem_ref[0]        # (H+2, W+2, C_stem) bf16, zero halo
        xin = x_ref[0]            # (H+2, W+2, Cin)    bf16, -inf halo

        # 9 shifted stem patches = the 3x3 conv taps for branch2/branch3; the
        # centre tap also carries the branch1 passthrough via an identity
        # block in the fused weight.  Concat pieces kept in f32 (native
        # (8,128) tiling) before the single bf16 cast.
        pieces = [
            stem[dh:dh + H, dw:dw + W, :].astype(jnp.float32).reshape(HW, C_stem)
            for dh in range(3) for dw in range(3)
        ]

        # branch4: 3x3 / stride-1 max pool over the -inf padded input.
        pooled = None
        for dh in range(3):
            for dw in range(3):
                win = xin[dh:dh + H, dw:dw + W, :]
                pooled = win if pooled is None else jnp.maximum(pooled, win)
        pieces.append(pooled.astype(jnp.float32).reshape(HW, Cin))

        # One MXU push: (HW, 9*C_stem+Cin) x (9*C_stem+Cin, C_total).
        lhs = jnp.concatenate(pieces, axis=-1).astype(jnp.bfloat16)
        acc = jnp.dot(lhs, w_ref[...], preferred_element_type=jnp.float32)
        out = jnp.maximum(acc + b_ref[...], 0.0)

        # Single lane-dense store of the already channel-concatenated output.
        o_ref[0] = out.reshape(H, W, -1).astype(o_ref.dtype)

    return kernel


def _spatial_branches(stem_pad, x_pad, w_big, b_big):
    N, Hp2, Wp2, C_stem = stem_pad.shape
    H, W = Hp2 - 2, Wp2 - 2
    Cin = x_pad.shape[-1]
    Kt, C_total = w_big.shape

    return pl.pallas_call(
        _make_spatial_kernel(H, W, C_stem, Cin),
        out_shape=jax.ShapeDtypeStruct((N, H, W, C_total), jnp.float32),
        grid=(N,),
        in_specs=[
            pl.BlockSpec((1, Hp2, Wp2, C_stem), lambda n: (n, 0, 0, 0)),
            pl.BlockSpec((1, Hp2, Wp2, Cin), lambda n: (n, 0, 0, 0)),
            pl.BlockSpec((Kt, C_total), lambda n: (0, 0)),
            pl.BlockSpec((1, C_total), lambda n: (0, 0)),
        ],
        out_specs=pl.BlockSpec((1, H, W, C_total), lambda n: (n, 0, 0, 0)),
        compiler_params=pltpu.CompilerParams(dimension_semantics=("parallel",)),
    )(stem_pad, x_pad, w_big, b_big)


# ---------------------------------------------------------------------------
# BatchNorm folding (eval mode, running stats)
# ---------------------------------------------------------------------------
def _fold_bn_1x1(w, bn):
    # w: (Cout, Cin) -> (Cin, Cout) effective weight + bias
    gamma, beta, mean, var = bn
    scale = gamma / jnp.sqrt(var + BN_EPS)
    return (w * scale[:, None]).T, beta - mean * scale


def _fold_bn_3x3(w, bn):
    # w: (Cout, Cin, 3, 3) -> (9, Cin, Cout) per-tap effective weights + bias
    gamma, beta, mean, var = bn
    scale = gamma / jnp.sqrt(var + BN_EPS)
    cout, cin = w.shape[0], w.shape[1]
    w_t = jnp.transpose(w * scale[:, None, None, None], (2, 3, 1, 0))
    return w_t.reshape(9, cin, cout), beta - mean * scale


# ---------------------------------------------------------------------------
# Parameter init (deterministic, synthetic) and full Inception forward
# ---------------------------------------------------------------------------
def _init_conv_block(key, cin, cout, ksize):
    kw, kg, kb, km, kv = jax.random.split(key, 5)
    fan_in = cin * ksize * ksize
    if ksize == 1:
        w = jax.random.normal(kw, (cout, cin), jnp.float32) / jnp.sqrt(fan_in)
    else:
        w = jax.random.normal(kw, (cout, cin, ksize, ksize), jnp.float32) / jnp.sqrt(fan_in)
    gamma = jax.random.uniform(kg, (cout,), jnp.float32, 0.5, 1.5)
    beta = 0.1 * jax.random.normal(kb, (cout,), jnp.float32)
    mean = 0.1 * jax.random.normal(km, (cout,), jnp.float32)
    var = jax.random.uniform(kv, (cout,), jnp.float32, 0.5, 1.5)
    return (w, (gamma, beta, mean, var))


def init_inception_params(key, in_channels, ch1x1, ch3x3red, ch3x3,
                          ch5x5red, ch5x5, pool_proj):
    ks = jax.random.split(key, 7)
    return {
        "branch1":   _init_conv_block(ks[0], in_channels, ch1x1, 1),
        "branch2_0": _init_conv_block(ks[1], in_channels, ch3x3red, 1),
        "branch2_1": _init_conv_block(ks[2], ch3x3red, ch3x3, 3),
        "branch3_0": _init_conv_block(ks[3], in_channels, ch5x5red, 1),
        "branch3_1": _init_conv_block(ks[4], ch5x5red, ch5x5, 3),
        "branch4_1": _init_conv_block(ks[5], in_channels, pool_proj, 1),
    }


def inception_forward(x_nchw, params):
    x = jnp.transpose(x_nchw, (0, 2, 3, 1))  # NCHW -> NHWC
    N, H, W, Cin = x.shape
    xbf = x.astype(jnp.bfloat16)

    # ---- fold BN, build fused weights -------------------------------------
    w1, b1 = _fold_bn_1x1(*params["branch1"])
    w2r, b2r = _fold_bn_1x1(*params["branch2_0"])
    w3r, b3r = _fold_bn_1x1(*params["branch3_0"])
    w2, b2 = _fold_bn_3x3(*params["branch2_1"])
    w3, b3 = _fold_bn_3x3(*params["branch3_1"])
    w4, b4 = _fold_bn_1x1(*params["branch4_1"])

    C1, C2r, C3r = w1.shape[1], w2r.shape[1], w3r.shape[1]
    C2, C3, C4 = w2.shape[2], w3.shape[2], w4.shape[1]
    C_stem = C1 + C2r + C3r
    C23 = C2 + C3
    C_total = C1 + C23 + C4

    # fused 1x1 stem: branch1 | branch2-reduce | branch3-reduce share input x
    w_stem = jnp.concatenate([w1, w2r, w3r], axis=1).astype(jnp.bfloat16)
    b_stem = jnp.concatenate([b1, b2r, b3r])

    # block-diagonal 3x3 weight over the stem slab -> [branch2 | branch3]
    w9 = jnp.zeros((9, C_stem, C23), jnp.float32)
    w9 = w9.at[:, C1:C1 + C2r, :C2].set(w2)
    w9 = w9.at[:, C1 + C2r:, C2:].set(w3)

    # One fused weight for the whole spatial kernel.
    # Rows: [tap0 stem | ... | tap8 stem | pooled x]; cols: [b1 | b2 | b3 | b4]
    Kt = 9 * C_stem + Cin
    w_big = jnp.zeros((Kt, C_total), jnp.float32)
    w_big = w_big.at[:9 * C_stem, C1:C1 + C23].set(w9.reshape(9 * C_stem, C23))
    # branch1 = passthrough of first C1 stem channels at the centre tap (dh=dw=1)
    w_big = w_big.at[4 * C_stem:4 * C_stem + C1, :C1].set(
        jnp.eye(C1, dtype=jnp.float32))
    # branch4 = pooled-x 1x1 projection
    w_big = w_big.at[9 * C_stem:, C1 + C23:].set(w4)
    w_big = w_big.astype(jnp.bfloat16)
    b_big = jnp.concatenate(
        [jnp.zeros((C1,), jnp.float32), b2, b3, b4]).reshape(1, C_total)

    # ---- kernel 1: fused 1x1 convs over the (M, Cin) slab (bf16 output) ----
    stem = _fused_1x1(xbf.reshape(-1, Cin), w_stem, b_stem)      # (M, C_stem) bf16
    stem_nhwc = stem.reshape(N, H, W, C_stem)

    # spatial halo padding (zero for the conv stencil, -inf for the max pool)
    stem_pad = jnp.pad(stem_nhwc, ((0, 0), (1, 1), (1, 1), (0, 0)))
    x_pad = jnp.pad(xbf, ((0, 0), (1, 1), (1, 1), (0, 0)),
                    constant_values=-jnp.inf)

    # ---- kernel 2: all four branches, one matmul, one lane-dense store -----
    out = _spatial_branches(stem_pad, x_pad, w_big, b_big)   # (N,H,W,C_total)
    return jnp.transpose(out, (0, 3, 1, 2))                  # back to NCHW


if __name__ == "__main__":
    key = jax.random.PRNGKey(0)
    kx, kp = jax.random.split(key)

    # Small Inception config: in=8 -> out channels 8 + 16 + 8 + 8 = 40
    in_channels, ch1x1, ch3x3red, ch3x3, ch5x5red, ch5x5, pool_proj = (
        8, 8, 8, 16, 4, 8, 8
    )
    N, H, W = 2, 16, 16

    x = jax.random.normal(kx, (N, in_channels, H, W), jnp.float32)  # NCHW input
    params = init_inception_params(
        kp, in_channels, ch1x1, ch3x3red, ch3x3, ch5x5red, ch5x5, pool_proj
    )

    out = jax.jit(inception_forward)(x, params)
    out = jax.block_until_ready(out)

    expected_c = ch1x1 + ch3x3 + ch5x5 + pool_proj
    assert out.shape == (N, expected_c, H, W), out.shape
    assert bool(jnp.all(jnp.isfinite(out)))
    print("KERNEL_OK")
</pallas_src>

<mosaic_0001>
module attributes {stable_mosaic.version = 11 : i64} {
  func.func @_stem_kernel(%arg0: i32, %arg1: memref<512x8xbf16, #tpu.memory_space<vmem>>, %arg2: memref<8x20xbf16, #tpu.memory_space<vmem>>, %arg3: memref<1x20xf32, #tpu.memory_space<vmem>>, %arg4: memref<512x20xbf16, #tpu.memory_space<vmem>>) attributes {dimension_semantics = [#tpu.dimension_semantics<parallel>], iteration_bounds = array<i64: 1>, scalar_prefetch = 0 : i64, scratch_operands = 0 : i64, tpu.core_type = #tpu.core_type<tc>, window_params = [{transform_indices = @transform_0, window_bounds = array<i64: 512, 8>}, {pipeline_mode = #tpu.pipeline_mode<synchronous>, transform_indices = @transform_1, window_bounds = array<i64: 8, 20>}, {pipeline_mode = #tpu.pipeline_mode<synchronous>, transform_indices = @transform_2, window_bounds = array<i64: 1, 20>}, {transform_indices = @transform_3, window_bounds = array<i64: 512, 20>}]} {
    %c0 = arith.constant 0 : index
    %c0_0 = arith.constant 0 : index
    %0 = vector.load %arg1[%c0, %c0_0] : memref<512x8xbf16, #tpu.memory_space<vmem>>, vector<512x8xbf16>
    %c0_1 = arith.constant 0 : index
    %c0_2 = arith.constant 0 : index
    %1 = vector.load %arg2[%c0_1, %c0_2] : memref<8x20xbf16, #tpu.memory_space<vmem>>, vector<8x20xbf16>
    %cst = arith.constant dense<0.000000e+00> : vector<512x20xf32>
    %2 = tpu.matmul %0, %1, %cst {dimension_numbers = #tpu.dot_dimension_numbers<[1], [0], [0], [1], [0, 0, 1, 1], [], []>} : vector<512x8xbf16>, vector<8x20xbf16>, vector<512x20xf32> -> vector<512x20xf32>
    %c0_3 = arith.constant 0 : index
    %c0_4 = arith.constant 0 : index
    %3 = vector.load %arg3[%c0_3, %c0_4] : memref<1x20xf32, #tpu.memory_space<vmem>>, vector<1x20xf32>
    %4 = vector.broadcast %3 : vector<1x20xf32> to vector<512x20xf32>
    %5 = arith.addf %2, %4 : vector<512x20xf32>
    %cst_5 = arith.constant 0.000000e+00 : f32
    %6 = vector.broadcast %cst_5 : f32 to vector<512x20xf32>
    %7 = arith.maximumf %5, %6 : vector<512x20xf32>
    %8 = arith.truncf %7 : vector<512x20xf32> to vector<512x20xbf16>
    %c0_6 = arith.constant 0 : index
    %c0_7 = arith.constant 0 : index
    %9 = vector.load %arg4[%c0_6, %c0_7] : memref<512x20xbf16, #tpu.memory_space<vmem>>, vector<512x20xbf16>
    tpu.vector_store %arg4[%c0_6, %c0_7], %8 {strides = array<i32>} : memref<512x20xbf16, #tpu.memory_space<vmem>>, vector<512x20xbf16>,
    return
  }
  func.func @transform_0(%arg0: i32) -> (i32, i32) {
    %c0_i32 = arith.constant 0 : i32
    %c0_i32_0 = arith.constant 0 : i32
    return %arg0, %c0_i32 : i32, i32
  }
  func.func @transform_1(%arg0: i32) -> (i32, i32) {
    %c0_i32 = arith.constant 0 : i32
    %c0_i32_0 = arith.constant 0 : i32
    %c0_i32_1 = arith.constant 0 : i32
    return %c0_i32, %c0_i32_0 : i32, i32
  }
  func.func @transform_2(%arg0: i32) -> (i32, i32) {
    %c0_i32 = arith.constant 0 : i32
    %c0_i32_0 = arith.constant 0 : i32
    %c0_i32_1 = arith.constant 0 : i32
    return %c0_i32, %c0_i32_0 : i32, i32
  }
  func.func @transform_3(%arg0: i32) -> (i32, i32) {
    %c0_i32 = arith.constant 0 : i32
    %c0_i32_0 = arith.constant 0 : i32
    return %arg0, %c0_i32 : i32, i32
  }
}

module attributes {stable_mosaic.version = 11 : i64} {
  func.func @kernel(%arg0: i32, %arg1: memref<1x18x18x20xbf16, #tpu.memory_space<vmem>>, %arg2: memref<1x18x18x8xbf16, #tpu.memory_space<vmem>>, %arg3: memref<188x40xbf16, #tpu.memory_space<vmem>>, %arg4: memref<1x40xf32, #tpu.memory_space<vmem>>, %arg5: memref<1x16x16x40xf32, #tpu.memory_space<vmem>>) attributes {dimension_semantics = [#tpu.dimension_semantics<parallel>], iteration_bounds = array<i64: 2>, scalar_prefetch = 0 : i64, scratch_operands = 0 : i64, tpu.core_type = #tpu.core_type<tc>, window_params = [{transform_indices = @transform_0, window_bounds = array<i64: 1, 18, 18, 20>}, {transform_indices = @transform_1, window_bounds = array<i64: 1, 18, 18, 8>}, {pipeline_mode = #tpu.pipeline_mode<synchronous>, transform_indices = @transform_2, window_bounds = array<i64: 188, 40>}, {pipeline_mode = #tpu.pipeline_mode<synchronous>, transform_indices = @transform_3, window_bounds = array<i64: 1, 40>}, {transform_indices = @transform_4, window_bounds = array<i64: 1, 16, 16, 40>}]} {
    %c0 = arith.constant 0 : index
    %c0_0 = arith.constant 0 : index
    %c0_1 = arith.constant 0 : index
    %c0_2 = arith.constant 0 : index
    %0 = vector.load %arg1[%c0, %c0_0, %c0_1, %c0_2] : memref<1x18x18x20xbf16, #tpu.memory_space<vmem>>, vector<1x18x18x20xbf16>
    %1 = vector.shape_cast %0 : vector<1x18x18x20xbf16> to vector<18x18x20xbf16>
    %c0_3 = arith.constant 0 : index
    %c0_4 = arith.constant 0 : index
    %c0_5 = arith.constant 0 : index
    %c0_6 = arith.constant 0 : index
    %2 = vector.load %arg2[%c0_3, %c0_4, %c0_5, %c0_6] : memref<1x18x18x8xbf16, #tpu.memory_space<vmem>>, vector<1x18x18x8xbf16>
    %3 = vector.shape_cast %2 : vector<1x18x18x8xbf16> to vector<18x18x8xbf16>
    %4 = vector.extract_strided_slice %1 {offsets = [0, 0, 0], sizes = [16, 16, 20], strides = [1, 1, 1]} : vector<18x18x20xbf16> to vector<16x16x20xbf16>
    %5 = arith.extf %4 : vector<16x16x20xbf16> to vector<16x16x20xf32>
    %6 = vector.shape_cast %5 : vector<16x16x20xf32> to vector<256x20xf32>
    %7 = vector.extract_strided_slice %1 {offsets = [0, 1, 0], sizes = [16, 16, 20], strides = [1, 1, 1]} : vector<18x18x20xbf16> to vector<16x16x20xbf16>
    %8 = arith.extf %7 : vector<16x16x20xbf16> to vector<16x16x20xf32>
    %9 = vector.shape_cast %8 : vector<16x16x20xf32> to vector<256x20xf32>
    %10 = vector.extract_strided_slice %1 {offsets = [0, 2, 0], sizes = [16, 16, 20], strides = [1, 1, 1]} : vector<18x18x20xbf16> to vector<16x16x20xbf16>
    %11 = arith.extf %10 : vector<16x16x20xbf16> to vector<16x16x20xf32>
    %12 = vector.shape_cast %11 : vector<16x16x20xf32> to vector<256x20xf32>
    %13 = vector.extract_strided_slice %1 {offsets = [1, 0, 0], sizes = [16, 16, 20], strides = [1, 1, 1]} : vector<18x18x20xbf16> to vector<16x16x20xbf16>
    %14 = arith.extf %13 : vector<16x16x20xbf16> to vector<16x16x20xf32>
    %15 = vector.shape_cast %14 : vector<16x16x20xf32> to vector<256x20xf32>
    %16 = vector.extract_strided_slice %1 {offsets = [1, 1, 0], sizes = [16, 16, 20], strides = [1, 1, 1]} : vector<18x18x20xbf16> to vector<16x16x20xbf16>
    %17 = arith.extf %16 : vector<16x16x20xbf16> to vector<16x16x20xf32>
    %18 = vector.shape_cast %17 : vector<16x16x20xf32> to vector<256x20xf32>
    %19 = vector.extract_strided_slice %1 {offsets = [1, 2, 0], sizes = [16, 16, 20], strides = [1, 1, 1]} : vector<18x18x20xbf16> to vector<16x16x20xbf16>
    %20 = arith.extf %19 : vector<16x16x20xbf16> to vector<16x16x20xf32>
    %21 = vector.shape_cast %20 : vector<16x16x20xf32> to vector<256x20xf32>
    %22 = vector.extract_strided_slice %1 {offsets = [2, 0, 0], sizes = [16, 16, 20], strides = [1, 1, 1]} : vector<18x18x20xbf16> to vector<16x16x20xbf16>
    %23 = arith.extf %22 : vector<16x16x20xbf16> to vector<16x16x20xf32>
    %24 = vector.shape_cast %23 : vector<16x16x20xf32> to vector<256x20xf32>
    %25 = vector.extract_strided_slice %1 {offsets = [2, 1, 0], sizes = [16, 16, 20], strides = [1, 1, 1]} : vector<18x18x20xbf16> to vector<16x16x20xbf16>
    %26 = arith.extf %25 : vector<16x16x20xbf16> to vector<16x16x20xf32>
    %27 = vector.shape_cast %26 : vector<16x16x20xf32> to vector<256x20xf32>
    %28 = vector.extract_strided_slice %1 {offsets = [2, 2, 0], sizes = [16, 16, 20], strides = [1, 1, 1]} : vector<18x18x20xbf16> to vector<16x16x20xbf16>
    %29 = arith.extf %28 : vector<16x16x20xbf16> to vector<16x16x20xf32>
    %30 = vector.shape_cast %29 : vector<16x16x20xf32> to vector<256x20xf32>
    %31 = vector.extract_strided_slice %3 {offsets = [0, 0, 0], sizes = [16, 16, 8], strides = [1, 1, 1]} : vector<18x18x8xbf16> to vector<16x16x8xbf16>
    %32 = vector.extract_strided_slice %3 {offsets = [0, 1, 0], sizes = [16, 16, 8], strides = [1, 1, 1]} : vector<18x18x8xbf16> to vector<16x16x8xbf16>
    %33 = arith.maximumf %31, %32 : vector<16x16x8xbf16>
    %34 = vector.extract_strided_slice %3 {offsets = [0, 2, 0], sizes = [16, 16, 8], strides = [1, 1, 1]} : vector<18x18x8xbf16> to vector<16x16x8xbf16>
    %35 = arith.maximumf %33, %34 : vector<16x16x8xbf16>
    %36 = vector.extract_strided_slice %3 {offsets = [1, 0, 0], sizes = [16, 16, 8], strides = [1, 1, 1]} : vector<18x18x8xbf16> to vector<16x16x8xbf16>
    %37 = arith.maximumf %35, %36 : vector<16x16x8xbf16>
    %38 = vector.extract_strided_slice %3 {offsets = [1, 1, 0], sizes = [16, 16, 8], strides = [1, 1, 1]} : vector<18x18x8xbf16> to vector<16x16x8xbf16>
    %39 = arith.maximumf %37, %38 : vector<16x16x8xbf16>
    %40 = vector.extract_strided_slice %3 {offsets = [1, 2, 0], sizes = [16, 16, 8], strides = [1, 1, 1]} : vector<18x18x8xbf16> to vector<16x16x8xbf16>
    %41 = arith.maximumf %39, %40 : vector<16x16x8xbf16>
    %42 = vector.extract_strided_slice %3 {offsets = [2, 0, 0], sizes = [16, 16, 8], strides = [1, 1, 1]} : vector<18x18x8xbf16> to vector<16x16x8xbf16>
    %43 = arith.maximumf %41, %42 : vector<16x16x8xbf16>
    %44 = vector.extract_strided_slice %3 {offsets = [2, 1, 0], sizes = [16, 16, 8], strides = [1, 1, 1]} : vector<18x18x8xbf16> to vector<16x16x8xbf16>
    %45 = arith.maximumf %43, %44 : vector<16x16x8xbf16>
    %46 = vector.extract_strided_slice %3 {offsets = [2, 2, 0], sizes = [16, 16, 8], strides = [1, 1, 1]} : vector<18x18x8xbf16> to vector<16x16x8xbf16>
    %47 = arith.maximumf %45, %46 : vector<16x16x8xbf16>
    %48 = arith.extf %47 : vector<16x16x8xbf16> to vector<16x16x8xf32>
    %49 = vector.shape_cast %48 : vector<16x16x8xf32> to vector<256x8xf32>
    %50 = tpu.concatenate %6, %9, %12, %15, %18, %21, %24, %27, %30, %49 in 1 : vector<256x20xf32>, vector<256x20xf32>, vector<256x20xf32>, vector<256x20xf32>, vector<256x20xf32>, vector<256x20xf32>, vector<256x20xf32>, vector<256x20xf32>, vector<256x20xf32>, vector<256x8xf32> -> vector<256x188xf32>
    %51 = arith.truncf %50 : vector<256x188xf32> to vector<256x188xbf16>
    %c0_7 = arith.constant 0 : index
    %c0_8 = arith.constant 0 : index
    %52 = vector.load %arg3[%c0_7, %c0_8] : memref<188x40xbf16, #tpu.memory_space<vmem>>, vector<188x40xbf16>
    %cst = arith.constant dense<0.000000e+00> : vector<256x40xf32>
    %53 = tpu.matmul %51, %52, %cst {dimension_numbers = #tpu.dot_dimension_numbers<[1], [0], [0], [1], [0, 0, 1, 1], [], []>} : vector<256x188xbf16>, vector<188x40xbf16>, vector<256x40xf32> -> vector<256x40xf32>
    %c0_9 = arith.constant 0 : index
    %c0_10 = arith.constant 0 : index
    %54 = vector.load %arg4[%c0_9, %c0_10] : memref<1x40xf32, #tpu.memory_space<vmem>>, vector<1x40xf32>
    %55 = vector.broadcast %54 : vector<1x40xf32> to vector<256x40xf32>
    %56 = arith.addf %53, %55 : vector<256x40xf32>
    %cst_11 = arith.constant 0.000000e+00 : f32
    %57 = vector.broadcast %cst_11 : f32 to vector<256x40xf32>
    %58 = arith.maximumf %56, %57 : vector<256x40xf32>
    %59 = vector.shape_cast %58 : vector<256x40xf32> to vector<16x16x40xf32>
    %c0_12 = arith.constant 0 : index
    %c0_13 = arith.constant 0 : index
    %c0_14 = arith.constant 0 : index
    %c0_15 = arith.constant 0 : index
    %60 = vector.load %arg5[%c0_12, %c0_13, %c0_14, %c0_15] : memref<1x16x16x40xf32, #tpu.memory_space<vmem>>, vector<1x16x16x40xf32>
    %61 = vector.shape_cast %60 : vector<1x16x16x40xf32> to vector<16x16x40xf32>
    %62 = vector.shape_cast %59 : vector<16x16x40xf32> to vector<1x16x16x40xf32>
    tpu.vector_store %arg5[%c0_12, %c0_13, %c0_14, %c0_15], %62 {strides = array<i32>} : memref<1x16x16x40xf32, #tpu.memory_space<vmem>>, vector<1x16x16x40xf32>,
    return
  }
  func.func @transform_0(%arg0: i32) -> (i32, i32, i32, i32) {
    %c0_i32 = arith.constant 0 : i32
    %c0_i32_0 = arith.constant 0 : i32
    %c0_i32_1 = arith.constant 0 : i32
    %c0_i32_2 = arith.constant 0 : i32
    return %arg0, %c0_i32, %c0_i32_0, %c0_i32_1 : i32, i32, i32, i32
  }
  func.func @transform_1(%arg0: i32) -> (i32, i32, i32, i32) {
    %c0_i32 = arith.constant 0 : i32
    %c0_i32_0 = arith.constant 0 : i32
    %c0_i32_1 = arith.constant 0 : i32
    %c0_i32_2 = arith.constant 0 : i32
    return %arg0, %c0_i32, %c0_i32_0, %c0_i32_1 : i32, i32, i32, i32
  }
  func.func @transform_2(%arg0: i32) -> (i32, i32) {
    %c0_i32 = arith.constant 0 : i32
    %c0_i32_0 = arith.constant 0 : i32
    %c0_i32_1 = arith.constant 0 : i32
    return %c0_i32, %c0_i32_0 : i32, i32
  }
  func.func @transform_3(%arg0: i32) -> (i32, i32) {
    %c0_i32 = arith.constant 0 : i32
    %c0_i32_0 = arith.constant 0 : i32
    %c0_i32_1 = arith.constant 0 : i32
    return %c0_i32, %c0_i32_0 : i32, i32
  }
  func.func @transform_4(%arg0: i32) -> (i32, i32, i32, i32) {
    %c0_i32 = arith.constant 0 : i32
    %c0_i32_0 = arith.constant 0 : i32
    %c0_i32_1 = arith.constant 0 : i32
    %c0_i32_2 = arith.constant 0 : i32
    return %arg0, %c0_i32, %c0_i32_0, %c0_i32_1 : i32, i32, i32, i32
  }
}

</mosaic_0001>

<llo_original>
// kernel: inception_forward.2
$region0: #{inception_forward.2}
  #allocation0 [shape = 'u32[]', space=smem, size = 0x4, offset = 0x4, fixed_abs, tag = 'smem constant byte address 0x4 - core index']
  #allocation1 [shape = 'u32[144,128]{1,0:T(1,128)}', space=vmem, size = 0x12000, scoped, tag = 'internal scratch']
  %s0 = inlined_call_operand.vmem [shape: bf16[512,8], index: 0, kind: input, shape index: {}]
  %s1 = inlined_call_operand.vmem [shape: bf16[8,20], index: 1, kind: input, shape index: {}]
  %s2 = inlined_call_operand.vmem [shape: f32[1,20], index: 2, kind: input, shape index: {}]
  %s3 = inlined_call_operand.vmem [shape: bf16[512,20], index: 3, kind: output, shape index: {}]
  %s4 = sld [smem:[#allocation0]]
  $region22: #{inception_forward.2} parent=0
    _
  %s6 = ssub.s32 1, %s4
  %s7 = scalar_select 0, %s6, %s4
  // Predicated region
  $region2: #{inception_forward.2} parent=0 // pred_check
    _
  $region3: #{inception_forward.2} parent=0 // pred_check_branch
    %9 = sbr.rel (0) target = $region5
  $region4: #{inception_forward.2} parent=0 // pred_region
    _
  $region5: #{inception_forward.2} parent=0 // pred_fallthru
    _
  // Predicated region
  $region6: #{inception_forward.2} parent=0 // pred_check
    _
  $region7: #{inception_forward.2} parent=0 // pred_check_branch
    %11 = sbr.rel (0) target = $region9
  $region8: #{inception_forward.2} parent=0 // pred_region
    _
  $region9: #{inception_forward.2} parent=0 // pred_fallthru
    _
  // Predicated region
  $region10: #{inception_forward.2} parent=0 // pred_check
    _
  $region11: #{inception_forward.2} parent=0 // pred_check_branch
    %13 = sbr.rel (0) target = $region13
  $region12: #{inception_forward.2} parent=0 // pred_region
    _
  $region13: #{inception_forward.2} parent=0 // pred_fallthru
    _
  %v15 = vld [vmem:[%s0] sm:$0xf]
  %v16 = vld [vmem:[%s0 + $0x4] sm:$0xf]
  %v17 = vld [vmem:[%s0 + $0x8] sm:$0xf]
  %v18 = vld [vmem:[%s0 + $0xc] sm:$0xf]
  %v19 = vld [vmem:[%s0 + $0x10] sm:$0xf]
  %v20 = vld [vmem:[%s0 + $0x14] sm:$0xf]
  %v21 = vld [vmem:[%s0 + $0x18] sm:$0xf]
  %v22 = vld [vmem:[%s0 + $0x1c] sm:$0xf]
  %v23 = vld [vmem:[%s0 + $0x20] sm:$0xf]
  %v24 = vld [vmem:[%s0 + $0x24] sm:$0xf]
  %v25 = vld [vmem:[%s0 + $0x28] sm:$0xf]
  %v26 = vld [vmem:[%s0 + $0x2c] sm:$0xf]
  %v27 = vld [vmem:[%s0 + $0x30] sm:$0xf]
  %v28 = vld [vmem:[%s0 + $0x34] sm:$0xf]
  %v29 = vld [vmem:[%s0 + $0x38] sm:$0xf]
  %v30 = vld [vmem:[%s0 + $0x3c] sm:$0xf]
  %v31 = vld [vmem:[%s0 + $0x40] sm:$0xf]
  %v32 = vld [vmem:[%s0 + $0x44] sm:$0xf]
  %v33 = vld [vmem:[%s0 + $0x48] sm:$0xf]
  %v34 = vld [vmem:[%s0 + $0x4c] sm:$0xf]
  %v35 = vld [vmem:[%s0 + $0x50] sm:$0xf]
  %v36 = vld [vmem:[%s0 + $0x54] sm:$0xf]
  %v37 = vld [vmem:[%s0 + $0x58] sm:$0xf]
  %v38 = vld [vmem:[%s0 + $0x5c] sm:$0xf]
  %v39 = vld [vmem:[%s0 + $0x60] sm:$0xf]
  %v40 = vld [vmem:[%s0 + $0x64] sm:$0xf]
  %v41 = vld [vmem:[%s0 + $0x68] sm:$0xf]
  %v42 = vld [vmem:[%s0 + $0x6c] sm:$0xf]
  %v43 = vld [vmem:[%s0 + $0x70] sm:$0xf]
  %v44 = vld [vmem:[%s0 + $0x74] sm:$0xf]
  %v45 = vld [vmem:[%s0 + $0x78] sm:$0xf]
  %v46 = vld [vmem:[%s0 + $0x7c] sm:$0xf]
  %v47 = vld [vmem:[%s0 + $0x80] sm:$0xf]
  %v48 = vld [vmem:[%s0 + $0x84] sm:$0xf]
  %v49 = vld [vmem:[%s0 + $0x88] sm:$0xf]
  %v50 = vld [vmem:[%s0 + $0x8c] sm:$0xf]
  %v51 = vld [vmem:[%s0 + $0x90] sm:$0xf]
  %v52 = vld [vmem:[%s0 + $0x94] sm:$0xf]
  %v53 = vld [vmem:[%s0 + $0x98] sm:$0xf]
  %v54 = vld [vmem:[%s0 + $0x9c] sm:$0xf]
  %v55 = vld [vmem:[%s0 + $0xa0] sm:$0xf]
  %v56 = vld [vmem:[%s0 + $0xa4] sm:$0xf]
  %v57 = vld [vmem:[%s0 + $0xa8] sm:$0xf]
  %v58 = vld [vmem:[%s0 + $0xac] sm:$0xf]
  %v59 = vld [vmem:[%s0 + $0xb0] sm:$0xf]
  %v60 = vld [vmem:[%s0 + $0xb4] sm:$0xf]
  %v61 = vld [vmem:[%s0 + $0xb8] sm:$0xf]
  %v62 = vld [vmem:[%s0 + $0xbc] sm:$0xf]
  %v63 = vld [vmem:[%s0 + $0xc0] sm:$0xf]
  %v64 = vld [vmem:[%s0 + $0xc4] sm:$0xf]
  %v65 = vld [vmem:[%s0 + $0xc8] sm:$0xf]
  %v66 = vld [vmem:[%s0 + $0xcc] sm:$0xf]
  %v67 = vld [vmem:[%s0 + $0xd0] sm:$0xf]
  %v68 = vld [vmem:[%s0 + $0xd4] sm:$0xf]
  %v69 = vld [vmem:[%s0 + $0xd8] sm:$0xf]
  %v70 = vld [vmem:[%s0 + $0xdc] sm:$0xf]
  %v71 = vld [vmem:[%s0 + $0xe0] sm:$0xf]
  %v72 = vld [vmem:[%s0 + $0xe4] sm:$0xf]
  %v73 = vld [vmem:[%s0 + $0xe8] sm:$0xf]
  %v74 = vld [vmem:[%s0 + $0xec] sm:$0xf]
  %v75 = vld [vmem:[%s0 + $0xf0] sm:$0xf]
  %v76 = vld [vmem:[%s0 + $0xf4] sm:$0xf]
  %v77 = vld [vmem:[%s0 + $0xf8] sm:$0xf]
  %v78 = vld [vmem:[%s0 + $0xfc] sm:$0xf]
  %v79 = vld [vmem:[%s1] sm:$0xf]
  %v80 = vld [vmem:[%s2] sm:$0x1]
  %v82 = vlaneseq
  %v83 = vshrl.u32 %v82, 7
  %v84 = vsub.s32 0, %v83
  %v85 = vrot.slane %v80, %v84
  %v151 = vunpack.c.l.b16 %v15
  %v152 = vunpack.c.l.b16 %v16
  %v153 = vunpack.c.l.b16 %v17
  %v154 = vunpack.c.l.b16 %v18
  %v155 = vunpack.c.l.b16 %v19
  %v156 = vunpack.c.l.b16 %v20
  %v157 = vunpack.c.l.b16 %v21
  %v158 = vunpack.c.l.b16 %v22
  %v159 = vunpack.c.l.b16 %v23
  %v160 = vunpack.c.l.b16 %v24
  %v161 = vunpack.c.l.b16 %v25
  %v162 = vunpack.c.l.b16 %v26
  %v163 = vunpack.c.l.b16 %v27
  %v164 = vunpack.c.l.b16 %v28
  %v165 = vunpack.c.l.b16 %v29
  %v166 = vunpack.c.l.b16 %v30
  %v167 = vunpack.c.l.b16 %v31
  %v168 = vunpack.c.l.b16 %v32
  %v169 = vunpack.c.l.b16 %v33
  %v170 = vunpack.c.l.b16 %v34
  %v171 = vunpack.c.l.b16 %v35
  %v172 = vunpack.c.l.b16 %v36
  %v173 = vunpack.c.l.b16 %v37
  %v174 = vunpack.c.l.b16 %v38
  %v175 = vunpack.c.l.b16 %v39
  %v176 = vunpack.c.l.b16 %v40
  %v177 = vunpack.c.l.b16 %v41
  %v178 = vunpack.c.l.b16 %v42
  %v179 = vunpack.c.l.b16 %v43
  %v180 = vunpack.c.l.b16 %v44
  %v181 = vunpack.c.l.b16 %v45
  %v182 = vunpack.c.l.b16 %v46
  %v183 = vunpack.c.l.b16 %v47
  %v184 = vunpack.c.l.b16 %v48
  %v185 = vunpack.c.l.b16 %v49
  %v186 = vunpack.c.l.b16 %v50
  %v187 = vunpack.c.l.b16 %v51
  %v188 = vunpack.c.l.b16 %v52
  %v189 = vunpack.c.l.b16 %v53
  %v190 = vunpack.c.l.b16 %v54
  %v191 = vunpack.c.l.b16 %v55
  %v192 = vunpack.c.l.b16 %v56
  %v193 = vunpack.c.l.b16 %v57
  %v194 = vunpack.c.l.b16 %v58
  %v195 = vunpack.c.l.b16 %v59
  %v196 = vunpack.c.l.b16 %v60
  %v197 = vunpack.c.l.b16 %v61
  %v198 = vunpack.c.l.b16 %v62
  %v199 = vunpack.c.l.b16 %v63
  %v200 = vunpack.c.l.b16 %v64
  %v201 = vunpack.c.l.b16 %v65
  %v202 = vunpack.c.l.b16 %v66
  %v203 = vunpack.c.l.b16 %v67
  %v204 = vunpack.c.l.b16 %v68
  %v205 = vunpack.c.l.b16 %v69
  %v206 = vunpack.c.l.b16 %v70
  %v207 = vunpack.c.l.b16 %v71
  %v208 = vunpack.c.l.b16 %v72
  %v209 = vunpack.c.l.b16 %v73
  %v210 = vunpack.c.l.b16 %v74
  %v211 = vunpack.c.l.b16 %v75
  %v212 = vunpack.c.l.b16 %v76
  %v213 = vunpack.c.l.b16 %v77
  %v214 = vunpack.c.l.b16 %v78
  %v215 = vpack.c.b16 %v152, %v151
  %v216 = vpack.c.b16 %v154, %v153
  %v217 = vpack.c.b16 %v156, %v155
  %v218 = vpack.c.b16 %v158, %v157
  %v219 = vpack.c.b16 %v160, %v159
  %v220 = vpack.c.b16 %v162, %v161
  %v221 = vpack.c.b16 %v164, %v163
  %v222 = vpack.c.b16 %v166, %v165
  %v223 = vpack.c.b16 %v168, %v167
  %v224 = vpack.c.b16 %v170, %v169
  %v225 = vpack.c.b16 %v172, %v171
  %v226 = vpack.c.b16 %v174, %v173
  %v227 = vpack.c.b16 %v176, %v175
  %v228 = vpack.c.b16 %v178, %v177
  %v229 = vpack.c.b16 %v180, %v179
  %v230 = vpack.c.b16 %v182, %v181
  %v231 = vpack.c.b16 %v184, %v183
  %v232 = vpack.c.b16 %v186, %v185
  %v233 = vpack.c.b16 %v188, %v187
  %v234 = vpack.c.b16 %v190, %v189
  %v235 = vpack.c.b16 %v192, %v191
  %v236 = vpack.c.b16 %v194, %v193
  %v237 = vpack.c.b16 %v196, %v195
  %v238 = vpack.c.b16 %v198, %v197
  %v239 = vpack.c.b16 %v200, %v199
  %v240 = vpack.c.b16 %v202, %v201
  %v241 = vpack.c.b16 %v204, %v203
  %v242 = vpack.c.b16 %v206, %v205
  %v243 = vpack.c.b16 %v208, %v207
  %v244 = vpack.c.b16 %v210, %v209
  %v245 = vpack.c.b16 %v212, %v211
  %v246 = vpack.c.b16 %v214, %v213
  %vm247 = vcmask 64512
  %v249 = vsel %vm247, %v215, 0
  %v252 = vsel %vm247, %v216, 0
  %v255 = vsel %vm247, %v217, 0
  %v258 = vsel %vm247, %v218, 0
  %v261 = vsel %vm247, %v219, 0
  %v264 = vsel %vm247, %v220, 0
  %v267 = vsel %vm247, %v221, 0
  %v270 = vsel %vm247, %v222, 0
  %v273 = vsel %vm247, %v223, 0
  %v276 = vsel %vm247, %v224, 0
  %v279 = vsel %vm247, %v225, 0
  %v282 = vsel %vm247, %v226, 0
  %v285 = vsel %vm247, %v227, 0
  %v288 = vsel %vm247, %v228, 0
  %v291 = vsel %vm247, %v229, 0
  %v294 = vsel %vm247, %v230, 0
  %v297 = vsel %vm247, %v231, 0
  %v300 = vsel %vm247, %v232, 0
  %v303 = vsel %vm247, %v233, 0
  %v306 = vsel %vm247, %v234, 0
  %v309 = vsel %vm247, %v235, 0
  %v312 = vsel %vm247, %v236, 0
  %v315 = vsel %vm247, %v237, 0
  %v318 = vsel %vm247, %v238, 0
  %v321 = vsel %vm247, %v239, 0
  %v324 = vsel %vm247, %v240, 0
  %v327 = vsel %vm247, %v241, 0
  %v330 = vsel %vm247, %v242, 0
  %v333 = vsel %vm247, %v243, 0
  %v336 = vsel %vm247, %v244, 0
  %v339 = vsel %vm247, %v245, 0
  %v342 = vsel %vm247, %v246, 0
  %vm344 = vcmask 1043456
  %v346 = vsel %vm344, %v79, 0
  %348 = vmatprep.subr.bf16.mxu0 0
  %349 = vmatpush1.bf16.msra.mxu0 %v346
  %350 = vmatprep.subr.bf16.mxu0 0
  %351 = vmatpush1.bf16.msra.mxu0 0
  %352 = vmatprep.subr.bf16.mxu0 0
  %353 = vmatpush1.bf16.msra.mxu0 0
  %354 = vmatprep.subr.bf16.mxu0 0
  %355 = vmatpush1.bf16.msra.mxu0 0
  %356 = vmatprep.subr.bf16.mxu0 0
  %357 = vmatpush1.bf16.msra.mxu0 0
  %358 = vmatprep.subr.bf16.mxu0 0
  %359 = vmatpush1.bf16.msra.mxu0 0
  %360 = vmatprep.subr.bf16.mxu0 0
  %361 = vmatpush1.bf16.msra.mxu0 0
  %362 = vmatprep.subr.bf16.mxu0 0
  %363 = vmatpush1.bf16.msra.mxu0 0
  %364 = vmatprep.subr.bf16.mxu0 0
  %365 = vmatpush1.bf16.msra.mxu0 0
  %366 = vmatprep.subr.bf16.mxu0 0
  %367 = vmatpush1.bf16.msra.mxu0 0
  %368 = vmatprep.subr.bf16.mxu0 0
  %369 = vmatpush1.bf16.msra.mxu0 0
  %370 = vmatprep.subr.bf16.mxu0 0
  %371 = vmatpush1.bf16.msra.mxu0 0
  %372 = vmatprep.subr.bf16.mxu0 0
  %373 = vmatpush1.bf16.msra.mxu0 0
  %374 = vmatprep.subr.bf16.mxu0 0
  %375 = vmatpush1.bf16.msra.mxu0 0
  %376 = vmatprep.subr.bf16.mxu0 0
  %377 = vmatpush1.bf16.msra.mxu0 0
  %378 = vmatprep.subr.bf16.mxu0 0
  %379 = vmatpush1.bf16.msra.mxu0 0
  %380 = vmatprep.mubr.bf16.mxu0 0
  %381 = vmatmul.mubr.bf16.gmra.mrb[0].mxu0 %v249
  %v382 = vpop.f32.mrb[0].mxu0
  %v383 = vadd.f32 %v85, %v382
  %v384 = vpop.f32.mrb[0].mxu0
  %v385 = vpop.f32.mrb[0].mxu0
  %v386 = vadd.f32 %v85, %v385
  %v387 = vpop.f32.mrb[0].mxu0
  %388 = vmatprep.mubr.bf16.mxu0 0
  %389 = vmatmul.mubr.bf16.gmra.mrb[0].mxu0 %v252
  %v390 = vpop.f32.mrb[0].mxu0
  %v391 = vadd.f32 %v85, %v390
  %v392 = vpop.f32.mrb[0].mxu0
  %v393 = vpop.f32.mrb[0].mxu0
  %v394 = vadd.f32 %v85, %v393
  %v395 = vpop.f32.mrb[0].mxu0
  %396 = vmatprep.mubr.bf16.mxu0 0
  %397 = vmatmul.mubr.bf16.gmra.mrb[0].mxu0 %v255
  %v398 = vpop.f32.mrb[0].mxu0
  %v399 = vadd.f32 %v85, %v398
  %v400 = vpop.f32.mrb[0].mxu0
  %v401 = vpop.f32.mrb[0].mxu0
  %v402 = vadd.f32 %v85, %v401
  %v403 = vpop.f32.mrb[0].mxu0
  %404 = vmatprep.mubr.bf16.mxu0 0
  %405 = vmatmul.mubr.bf16.gmra.mrb[0].mxu0 %v258
  %v406 = vpop.f32.mrb[0].mxu0
  %v407 = vadd.f32 %v85, %v406
  %v408 = vpop.f32.mrb[0].mxu0
  %v409 = vpop.f32.mrb[0].mxu0
  %v410 = vadd.f32 %v85, %v409
  %v411 = vpop.f32.mrb[0].mxu0
  %412 = vmatprep.mubr.bf16.mxu0 0
  %413 = vmatmul.mubr.bf16.gmra.mrb[0].mxu0 %v261
  %v414 = vpop.f32.mrb[0].mxu0
  %v415 = vadd.f32 %v85, %v414
  %v416 = vpop.f32.mrb[0].mxu0
  %v417 = vpop.f32.mrb[0].mxu0
  %v418 = vadd.f32 %v85, %v417
  %v419 = vpop.f32.mrb[0].mxu0
  %420 = vmatprep.mubr.bf16.mxu0 0
  %421 = vmatmul.mubr.bf16.gmra.mrb[0].mxu0 %v264
  %v422 = vpop.f32.mrb[0].mxu0
  %v423 = vadd.f32 %v85, %v422
  %v424 = vpop.f32.mrb[0].mxu0
  %v425 = vpop.f32.mrb[0].mxu0
  %v426 = vadd.f32 %v85, %v425
  %v427 = vpop.f32.mrb[0].mxu0
  %428 = vmatprep.mubr.bf16.mxu0 0
  %429 = vmatmul.mubr.bf16.gmra.mrb[0].mxu0 %v267
  %v430 = vpop.f32.mrb[0].mxu0
  %v431 = vadd.f32 %v85, %v430
  %v432 = vpop.f32.mrb[0].mxu0
  %v433 = vpop.f32.mrb[0].mxu0
  %v434 = vadd.f32 %v85, %v433
  %v435 = vpop.f32.mrb[0].mxu0
  %436 = vmatprep.mubr.bf16.mxu0 0
  %437 = vmatmul.mubr.bf16.gmra.mrb[0].mxu0 %v270
  %v438 = vpop.f32.mrb[0].mxu0
  %v439 = vadd.f32 %v85, %v438
  %v440 = vpop.f32.mrb[0].mxu0
  %v441 = vpop.f32.mrb[0].mxu0
  %v442 = vadd.f32 %v85, %v441
  %v443 = vpop.f32.mrb[0].mxu0
  %444 = vmatprep.mubr.bf16.mxu0 0
  %445 = vmatmul.mubr.bf16.gmra.mrb[0].mxu0 %v273
  %v446 = vpop.f32.mrb[0].mxu0
  %v447 = vadd.f32 %v85, %v446
  %v448 = vpop.f32.mrb[0].mxu0
  %v449 = vpop.f32.mrb[0].mxu0
  %v450 = vadd.f32 %v85, %v449
  %v451 = vpop.f32.mrb[0].mxu0
  %452 = vmatprep.mubr.bf16.mxu0 0
  %453 = vmatmul.mubr.bf16.gmra.mrb[0].mxu0 %v276
  %v454 = vpop.f32.mrb[0].mxu0
  %v455 = vadd.f32 %v85, %v454
  %v456 = vpop.f32.mrb[0].mxu0
  %v457 = vpop.f32.mrb[0].mxu0
  %v458 = vadd.f32 %v85, %v457
  %v459 = vpop.f32.mrb[0].mxu0
  %460 = vmatprep.mubr.bf16.mxu0 0
  %461 = vmatmul.mubr.bf16.gmra.mrb[0].mxu0 %v279
  %v462 = vpop.f32.mrb[0].mxu0
  %v463 = vadd.f32 %v85, %v462
  %v464 = vpop.f32.mrb[0].mxu0
  %v465 = vpop.f32.mrb[0].mxu0
  %v466 = vadd.f32 %v85, %v465
  %v467 = vpop.f32.mrb[0].mxu0
  %468 = vmatprep.mubr.bf16.mxu0 0
  %469 = vmatmul.mubr.bf16.gmra.mrb[0].mxu0 %v282
  %v470 = vpop.f32.mrb[0].mxu0
  %v471 = vadd.f32 %v85, %v470
  %v472 = vpop.f32.mrb[0].mxu0
  %v473 = vpop.f32.mrb[0].mxu0
  %v474 = vadd.f32 %v85, %v473
  %v475 = vpop.f32.mrb[0].mxu0
  %476 = vmatprep.mubr.bf16.mxu0 0
  %477 = vmatmul.mubr.bf16.gmra.mrb[0].mxu0 %v285
  %v478 = vpop.f32.mrb[0].mxu0
  %v479 = vadd.f32 %v85, %v478
  %v480 = vpop.f32.mrb[0].mxu0
  %v481 = vpop.f32.mrb[0].mxu0
  %v482 = vadd.f32 %v85, %v481
  %v483 = vpop.f32.mrb[0].mxu0
  %484 = vmatprep.mubr.bf16.mxu0 0
  %485 = vmatmul.mubr.bf16.gmra.mrb[0].mxu0 %v288
  %v486 = vpop.f32.mrb[0].mxu0
  %v487 = vadd.f32 %v85, %v486
  %v488 = vpop.f32.mrb[0].mxu0
  %v489 = vpop.f32.mrb[0].mxu0
  %v490 = vadd.f32 %v85, %v489
  %v491 = vpop.f32.mrb[0].mxu0
  %492 = vmatprep.mubr.bf16.mxu0 0
  %493 = vmatmul.mubr.bf16.gmra.mrb[0].mxu0 %v291
  %v494 = vpop.f32.mrb[0].mxu0
  %v495 = vadd.f32 %v85, %v494
  %v496 = vpop.f32.mrb[0].mxu0
  %v497 = vpop.f32.mrb[0].mxu0
  %v498 = vadd.f32 %v85, %v497
  %v499 = vpop.f32.mrb[0].mxu0
  %500 = vmatprep.mubr.bf16.mxu0 0
  %501 = vmatmul.mubr.bf16.gmra.mrb[0].mxu0 %v294
  %v502 = vpop.f32.mrb[0].mxu0
  %v503 = vadd.f32 %v85, %v502
  %v504 = vpop.f32.mrb[0].mxu0
  %v505 = vpop.f32.mrb[0].mxu0
  %v506 = vadd.f32 %v85, %v505
  %v507 = vpop.f32.mrb[0].mxu0
  %508 = vmatprep.mubr.bf16.mxu0 0
  %509 = vmatmul.mubr.bf16.gmra.mrb[0].mxu0 %v297
  %v510 = vpop.f32.mrb[0].mxu0
  %v511 = vadd.f32 %v85, %v510
  %v512 = vpop.f32.mrb[0].mxu0
  %v513 = vpop.f32.mrb[0].mxu0
  %v514 = vadd.f32 %v85, %v513
  %v515 = vpop.f32.mrb[0].mxu0
  %516 = vmatprep.mubr.bf16.mxu0 0
  %517 = vmatmul.mubr.bf16.gmra.mrb[0].mxu0 %v300
  %v518 = vpop.f32.mrb[0].mxu0
  %v519 = vadd.f32 %v85, %v518
  %v520 = vpop.f32.mrb[0].mxu0
  %v521 = vpop.f32.mrb[0].mxu0
  %v522 = vadd.f32 %v85, %v521
  %v523 = vpop.f32.mrb[0].mxu0
  %524 = vmatprep.mubr.bf16.mxu0 0
  %525 = vmatmul.mubr.bf16.gmra.mrb[0].mxu0 %v303
  %v526 = vpop.f32.mrb[0].mxu0
  %v527 = vadd.f32 %v85, %v526
  %v528 = vpop.f32.mrb[0].mxu0
  %v529 = vpop.f32.mrb[0].mxu0
  %v530 = vadd.f32 %v85, %v529
  %v531 = vpop.f32.mrb[0].mxu0
  %532 = vmatprep.mubr.bf16.mxu0 0
  %533 = vmatmul.mubr.bf16.gmra.mrb[0].mxu0 %v306
  %v534 = vpop.f32.mrb[0].mxu0
  %v535 = vadd.f32 %v85, %v534
  %v536 = vpop.f32.mrb[0].mxu0
  %v537 = vpop.f32.mrb[0].mxu0
  %v538 = vadd.f32 %v85, %v537
  %v539 = vpop.f32.mrb[0].mxu0
  %540 = vmatprep.mubr.bf16.mxu0 0
  %541 = vmatmul.mubr.bf16.gmra.mrb[0].mxu0 %v309
  %v542 = vpop.f32.mrb[0].mxu0
  %v543 = vadd.f32 %v85, %v542
  %v544 = vpop.f32.mrb[0].mxu0
  %v545 = vpop.f32.mrb[0].mxu0
  %v546 = vadd.f32 %v85, %v545
  %v547 = vpop.f32.mrb[0].mxu0
  %548 = vmatprep.mubr.bf16.mxu0 0
  %549 = vmatmul.mubr.bf16.gmra.mrb[0].mxu0 %v312
  %v550 = vpop.f32.mrb[0].mxu0
  %v551 = vadd.f32 %v85, %v550
  %v552 = vpop.f32.mrb[0].mxu0
  %v553 = vpop.f32.mrb[0].mxu0
  %v554 = vadd.f32 %v85, %v553
  %v555 = vpop.f32.mrb[0].mxu0
  %556 = vmatprep.mubr.bf16.mxu0 0
  %557 = vmatmul.mubr.bf16.gmra.mrb[0].mxu0 %v315
  %v558 = vpop.f32.mrb[0].mxu0
  %v559 = vadd.f32 %v85, %v558
  %v560 = vpop.f32.mrb[0].mxu0
  %v561 = vpop.f32.mrb[0].mxu0
  %v562 = vadd.f32 %v85, %v561
  %v563 = vpop.f32.mrb[0].mxu0
  %564 = vmatprep.mubr.bf16.mxu0 0
  %565 = vmatmul.mubr.bf16.gmra.mrb[0].mxu0 %v318
  %v566 = vpop.f32.mrb[0].mxu0
  %v567 = vadd.f32 %v85, %v566
  %v568 = vpop.f32.mrb[0].mxu0
  %v569 = vpop.f32.mrb[0].mxu0
  %v570 = vadd.f32 %v85, %v569
  %v571 = vpop.f32.mrb[0].mxu0
  %572 = vmatprep.mubr.bf16.mxu0 0
  %573 = vmatmul.mubr.bf16.gmra.mrb[0].mxu0 %v321
  %v574 = vpop.f32.mrb[0].mxu0
  %v575 = vadd.f32 %v85, %v574
  %v576 = vpop.f32.mrb[0].mxu0
  %v577 = vpop.f32.mrb[0].mxu0
  %v578 = vadd.f32 %v85, %v577
  %v579 = vpop.f32.mrb[0].mxu0
  %580 = vmatprep.mubr.bf16.mxu0 0
  %581 = vmatmul.mubr.bf16.gmra.mrb[0].mxu0 %v324
  %v582 = vpop.f32.mrb[0].mxu0
  %v583 = vadd.f32 %v85, %v582
  %v584 = vpop.f32.mrb[0].mxu0
  %v585 = vpop.f32.mrb[0].mxu0
  %v586 = vadd.f32 %v85, %v585
  %v587 = vpop.f32.mrb[0].mxu0
  %588 = vmatprep.mubr.bf16.mxu0 0
  %589 = vmatmul.mubr.bf16.gmra.mrb[0].mxu0 %v327
  %v590 = vpop.f32.mrb[0].mxu0
  %v591 = vadd.f32 %v85, %v590
  %v592 = vpop.f32.mrb[0].mxu0
  %v593 = vpop.f32.mrb[0].mxu0
  %v594 = vadd.f32 %v85, %v593
  %v595 = vpop.f32.mrb[0].mxu0
  %596 = vmatprep.mubr.bf16.mxu0 0
  %597 = vmatmul.mubr.bf16.gmra.mrb[0].mxu0 %v330
  %v598 = vpop.f32.mrb[0].mxu0
  %v599 = vadd.f32 %v85, %v598
  %v600 = vpop.f32.mrb[0].mxu0
  %v601 = vpop.f32.mrb[0].mxu0
  %v602 = vadd.f32 %v85, %v601
  %v603 = vpop.f32.mrb[0].mxu0
  %604 = vmatprep.mubr.bf16.mxu0 0
  %605 = vmatmul.mubr.bf16.gmra.mrb[0].mxu0 %v333
  %v606 = vpop.f32.mrb[0].mxu0
  %v607 = vadd.f32 %v85, %v606
  %v608 = vpop.f32.mrb[0].mxu0
  %v609 = vpop.f32.mrb[0].mxu0
  %v610 = vadd.f32 %v85, %v609
  %v611 = vpop.f32.mrb[0].mxu0
  %612 = vmatprep.mubr.bf16.mxu0 0
  %613 = vmatmul.mubr.bf16.gmra.mrb[0].mxu0 %v336
  %v614 = vpop.f32.mrb[0].mxu0
  %v615 = vadd.f32 %v85, %v614
  %v616 = vpop.f32.mrb[0].mxu0
  %v617 = vpop.f32.mrb[0].mxu0
  %v618 = vadd.f32 %v85, %v617
  %v619 = vpop.f32.mrb[0].mxu0
  %620 = vmatprep.mubr.bf16.mxu0 0
  %621 = vmatmul.mubr.bf16.gmra.mrb[0].mxu0 %v339
  %v622 = vpop.f32.mrb[0].mxu0
  %v623 = vadd.f32 %v85, %v622
  %v624 = vpop.f32.mrb[0].mxu0
  %v625 = vpop.f32.mrb[0].mxu0
  %v626 = vadd.f32 %v85, %v625
  %v627 = vpop.f32.mrb[0].mxu0
  %628 = vmatprep.mubr.bf16.mxu0 0
  %629 = vmatmul.mubr.bf16.gmra.mrb[0].mxu0 %v342
  %v630 = vpop.f32.mrb[0].mxu0
  %v631 = vadd.f32 %v85, %v630
  %v632 = vpop.f32.mrb[0].mxu0
  %v633 = vpop.f32.mrb[0].mxu0
  %v634 = vadd.f32 %v85, %v633
  %v635 = vpop.f32.mrb[0].mxu0
  %636 = vdwg.mxu0
  %v637 = vmax.f32 %v383, 0.0
  %v638 = vmax.f32 %v386, 0.0
  %v639 = vmax.f32 %v391, 0.0
  %v640 = vmax.f32 %v394, 0.0
  %v641 = vmax.f32 %v399, 0.0
  %v642 = vmax.f32 %v402, 0.0
  %v643 = vmax.f32 %v407, 0.0
  %v644 = vmax.f32 %v410, 0.0
  %v645 = vmax.f32 %v415, 0.0
  %v646 = vmax.f32 %v418, 0.0
  %v647 = vmax.f32 %v423, 0.0
  %v648 = vmax.f32 %v426, 0.0
  %v649 = vmax.f32 %v431, 0.0
  %v650 = vmax.f32 %v434, 0.0
  %v651 = vmax.f32 %v439, 0.0
  %v652 = vmax.f32 %v442, 0.0
  %v653 = vmax.f32 %v447, 0.0
  %v654 = vmax.f32 %v450, 0.0
  %v655 = vmax.f32 %v455, 0.0
  %v656 = vmax.f32 %v458, 0.0
  %v657 = vmax.f32 %v463, 0.0
  %v658 = vmax.f32 %v466, 0.0
  %v659 = vmax.f32 %v471, 0.0
  %v660 = vmax.f32 %v474, 0.0
  %v661 = vmax.f32 %v479, 0.0
  %v662 = vmax.f32 %v482, 0.0
  %v663 = vmax.f32 %v487, 0.0
  %v664 = vmax.f32 %v490, 0.0
  %v665 = vmax.f32 %v495, 0.0
  %v666 = vmax.f32 %v498, 0.0
  %v667 = vmax.f32 %v503, 0.0
  %v668 = vmax.f32 %v506, 0.0
  %v669 = vmax.f32 %v511, 0.0
  %v670 = vmax.f32 %v514, 0.0
  %v671 = vmax.f32 %v519, 0.0
  %v672 = vmax.f32 %v522, 0.0
  %v673 = vmax.f32 %v527, 0.0
  %v674 = vmax.f32 %v530, 0.0
  %v675 = vmax.f32 %v535, 0.0
  %v676 = vmax.f32 %v538, 0.0
  %v677 = vmax.f32 %v543, 0.0
  %v678 = vmax.f32 %v546, 0.0
  %v679 = vmax.f32 %v551, 0.0
  %v680 = vmax.f32 %v554, 0.0
  %v681 = vmax.f32 %v559, 0.0
  %v682 = vmax.f32 %v562, 0.0
  %v683 = vmax.f32 %v567, 0.0
  %v684 = vmax.f32 %v570, 0.0
  %v685 = vmax.f32 %v575, 0.0
  %v686 = vmax.f32 %v578, 0.0
  %v687 = vmax.f32 %v583, 0.0
  %v688 = vmax.f32 %v586, 0.0
  %v689 = vmax.f32 %v591, 0.0
  %v690 = vmax.f32 %v594, 0.0
  %v691 = vmax.f32 %v599, 0.0
  %v692 = vmax.f32 %v602, 0.0
  %v693 = vmax.f32 %v607, 0.0
  %v694 = vmax.f32 %v610, 0.0
  %v695 = vmax.f32 %v615, 0.0
  %v696 = vmax.f32 %v618, 0.0
  %v697 = vmax.f32 %v623, 0.0
  %v698 = vmax.f32 %v626, 0.0
  %v699 = vmax.f32 %v631, 0.0
  %v700 = vmax.f32 %v634, 0.0
  %v701 = vpack.c.bf16 %v638, %v637
  %v702 = vpack.c.bf16 %v640, %v639
  %v703 = vpack.c.bf16 %v642, %v641
  %v704 = vpack.c.bf16 %v644, %v643
  %v705 = vpack.c.bf16 %v646, %v645
  %v706 = vpack.c.bf16 %v648, %v647
  %v707 = vpack.c.bf16 %v650, %v649
  %v708 = vpack.c.bf16 %v652, %v651
  %v709 = vpack.c.bf16 %v654, %v653
  %v710 = vpack.c.bf16 %v656, %v655
  %v711 = vpack.c.bf16 %v658, %v657
  %v712 = vpack.c.bf16 %v660, %v659
  %v713 = vpack.c.bf16 %v662, %v661
  %v714 = vpack.c.bf16 %v664, %v663
  %v715 = vpack.c.bf16 %v666, %v665
  %v716 = vpack.c.bf16 %v668, %v667
  %v717 = vpack.c.bf16 %v670, %v669
  %v718 = vpack.c.bf16 %v672, %v671
  %v719 = vpack.c.bf16 %v674, %v673
  %v720 = vpack.c.bf16 %v676, %v675
  %v721 = vpack.c.bf16 %v678, %v677
  %v722 = vpack.c.bf16 %v680, %v679
  %v723 = vpack.c.bf16 %v682, %v681
  %v724 = vpack.c.bf16 %v684, %v683
  %v725 = vpack.c.bf16 %v686, %v685
  %v726 = vpack.c.bf16 %v688, %v687
  %v727 = vpack.c.bf16 %v690, %v689
  %v728 = vpack.c.bf16 %v692, %v691
  %v729 = vpack.c.bf16 %v694, %v693
  %v730 = vpack.c.bf16 %v696, %v695
  %v731 = vpack.c.bf16 %v698, %v697
  %v732 = vpack.c.bf16 %v700, %v699
  %v765 = vunpack.c.l.b16 %v701
  %v766 = vunpack.c.h.b16 %v701
  %v767 = vunpack.c.l.b16 %v702
  %v768 = vunpack.c.h.b16 %v702
  %v769 = vunpack.c.l.b16 %v703
  %v770 = vunpack.c.h.b16 %v703
  %v771 = vunpack.c.l.b16 %v704
  %v772 = vunpack.c.h.b16 %v704
  %v773 = vunpack.c.l.b16 %v705
  %v774 = vunpack.c.h.b16 %v705
  %v775 = vunpack.c.l.b16 %v706
  %v776 = vunpack.c.h.b16 %v706
  %v777 = vunpack.c.l.b16 %v707
  %v778 = vunpack.c.h.b16 %v707
  %v779 = vunpack.c.l.b16 %v708
  %v780 = vunpack.c.h.b16 %v708
  %v781 = vunpack.c.l.b16 %v709
  %v782 = vunpack.c.h.b16 %v709
  %v783 = vunpack.c.l.b16 %v710
  %v784 = vunpack.c.h.b16 %v710
  %v785 = vunpack.c.l.b16 %v711
  %v786 = vunpack.c.h.b16 %v711
  %v787 = vunpack.c.l.b16 %v712
  %v788 = vunpack.c.h.b16 %v712
  %v789 = vunpack.c.l.b16 %v713
  %v790 = vunpack.c.h.b16 %v713
  %v791 = vunpack.c.l.b16 %v714
  %v792 = vunpack.c.h.b16 %v714
  %v793 = vunpack.c.l.b16 %v715
  %v794 = vunpack.c.h.b16 %v715
  %v795 = vunpack.c.l.b16 %v716
  %v796 = vunpack.c.h.b16 %v716
  %v797 = vunpack.c.l.b16 %v717
  %v798 = vunpack.c.h.b16 %v717
  %v799 = vunpack.c.l.b16 %v718
  %v800 = vunpack.c.h.b16 %v718
  %v801 = vunpack.c.l.b16 %v719
  %v802 = vunpack.c.h.b16 %v719
  %v803 = vunpack.c.l.b16 %v720
  %v804 = vunpack.c.h.b16 %v720
  %v805 = vunpack.c.l.b16 %v721
  %v806 = vunpack.c.h.b16 %v721
  %v807 = vunpack.c.l.b16 %v722
  %v808 = vunpack.c.h.b16 %v722
  %v809 = vunpack.c.l.b16 %v723
  %v810 = vunpack.c.h.b16 %v723
  %v811 = vunpack.c.l.b16 %v724
  %v812 = vunpack.c.h.b16 %v724
  %v813 = vunpack.c.l.b16 %v725
  %v814 = vunpack.c.h.b16 %v725
  %v815 = vunpack.c.l.b16 %v726
  %v816 = vunpack.c.h.b16 %v726
  %v817 = vunpack.c.l.b16 %v727
  %v818 = vunpack.c.h.b16 %v727
  %v819 = vunpack.c.l.b16 %v728
  %v820 = vunpack.c.h.b16 %v728
  %v821 = vunpack.c.l.b16 %v729
  %v822 = vunpack.c.h.b16 %v729
  %v823 = vunpack.c.l.b16 %v730
  %v824 = vunpack.c.h.b16 %v730
  %v825 = vunpack.c.l.b16 %v731
  %v826 = vunpack.c.h.b16 %v731
  %v827 = vunpack.c.l.b16 %v732
  %v828 = vunpack.c.h.b16 %v732
  %v829 = vpack.c.b16 %v765, %v765
  %v830 = vpack.c.b16 %v766, %v766
  %v831 = vpack.c.b16 %v767, %v767
  %v832 = vpack.c.b16 %v768, %v768
  %v833 = vpack.c.b16 %v769, %v769
  %v834 = vpack.c.b16 %v770, %v770
  %v835 = vpack.c.b16 %v771, %v771
  %v836 = vpack.c.b16 %v772, %v772
  %v837 = vpack.c.b16 %v773, %v773
  %v838 = vpack.c.b16 %v774, %v774
  %v839 = vpack.c.b16 %v775, %v775
  %v840 = vpack.c.b16 %v776, %v776
  %v841 = vpack.c.b16 %v777, %v777
  %v842 = vpack.c.b16 %v778, %v778
  %v843 = vpack.c.b16 %v779, %v779
  %v844 = vpack.c.b16 %v780, %v780
  %v845 = vpack.c.b16 %v781, %v781
  %v846 = vpack.c.b16 %v782, %v782
  %v847 = vpack.c.b16 %v783, %v783
  %v848 = vpack.c.b16 %v784, %v784
  %v849 = vpack.c.b16 %v785, %v785
  %v850 = vpack.c.b16 %v786, %v786
  %v851 = vpack.c.b16 %v787, %v787
  %v852 = vpack.c.b16 %v788, %v788
  %v853 = vpack.c.b16 %v789, %v789
  %v854 = vpack.c.b16 %v790, %v790
  %v855 = vpack.c.b16 %v791, %v791
  %v856 = vpack.c.b16 %v792, %v792
  %v857 = vpack.c.b16 %v793, %v793
  %v858 = vpack.c.b16 %v794, %v794
  %v859 = vpack.c.b16 %v795, %v795
  %v860 = vpack.c.b16 %v796, %v796
  %v861 = vpack.c.b16 %v797, %v797
  %v862 = vpack.c.b16 %v798, %v798
  %v863 = vpack.c.b16 %v799, %v799
  %v864 = vpack.c.b16 %v800, %v800
  %v865 = vpack.c.b16 %v801, %v801
  %v866 = vpack.c.b16 %v802, %v802
  %v867 = vpack.c.b16 %v803, %v803
  %v868 = vpack.c.b16 %v804, %v804
  %v869 = vpack.c.b16 %v805, %v805
  %v870 = vpack.c.b16 %v806, %v806
  %v871 = vpack.c.b16 %v807, %v807
  %v872 = vpack.c.b16 %v808, %v808
  %v873 = vpack.c.b16 %v809, %v809
  %v874 = vpack.c.b16 %v810, %v810
  %v875 = vpack.c.b16 %v811, %v811
  %v876 = vpack.c.b16 %v812, %v812
  %v877 = vpack.c.b16 %v813, %v813
  %v878 = vpack.c.b16 %v814, %v814
  %v879 = vpack.c.b16 %v815, %v815
  %v880 = vpack.c.b16 %v816, %v816
  %v881 = vpack.c.b16 %v817, %v817
  %v882 = vpack.c.b16 %v818, %v818
  %v883 = vpack.c.b16 %v819, %v819
  %v884 = vpack.c.b16 %v820, %v820
  %v885 = vpack.c.b16 %v821, %v821
  %v886 = vpack.c.b16 %v822, %v822
  %v887 = vpack.c.b16 %v823, %v823
  %v888 = vpack.c.b16 %v824, %v824
  %v889 = vpack.c.b16 %v825, %v825
  %v890 = vpack.c.b16 %v826, %v826
  %v891 = vpack.c.b16 %v827, %v827
  %v892 = vpack.c.b16 %v828, %v828
  %vm957 = vcmask 158720
  %958 = vst.msk [vmem:[%s3] sm:$0xf] %vm957, %v829
  %959 = vst.msk [vmem:[%s3 + $0x4] sm:$0xf] %vm957, %v830
  %960 = vst.msk [vmem:[%s3 + $0x8] sm:$0xf] %vm957, %v831
  %961 = vst.msk [vmem:[%s3 + $0xc] sm:$0xf] %vm957, %v832
  %962 = vst.msk [vmem:[%s3 + $0x10] sm:$0xf] %vm957, %v833
  %963 = vst.msk [vmem:[%s3 + $0x14] sm:$0xf] %vm957, %v834
  %964 = vst.msk [vmem:[%s3 + $0x18] sm:$0xf] %vm957, %v835
  %965 = vst.msk [vmem:[%s3 + $0x1c] sm:$0xf] %vm957, %v836
  %966 = vst.msk [vmem:[%s3 + $0x20] sm:$0xf] %vm957, %v837
  %967 = vst.msk [vmem:[%s3 + $0x24] sm:$0xf] %vm957, %v838
  %968 = vst.msk [vmem:[%s3 + $0x28] sm:$0xf] %vm957, %v839
  %969 = vst.msk [vmem:[%s3 + $0x2c] sm:$0xf] %vm957, %v840
  %970 = vst.msk [vmem:[%s3 + $0x30] sm:$0xf] %vm957, %v841
  %971 = vst.msk [vmem:[%s3 + $0x34] sm:$0xf] %vm957, %v842
  %972 = vst.msk [vmem:[%s3 + $0x38] sm:$0xf] %vm957, %v843
  %973 = vst.msk [vmem:[%s3 + $0x3c] sm:$0xf] %vm957, %v844
  %974 = vst.msk [vmem:[%s3 + $0x40] sm:$0xf] %vm957, %v845
  %975 = vst.msk [vmem:[%s3 + $0x44] sm:$0xf] %vm957, %v846
  %976 = vst.msk [vmem:[%s3 + $0x48] sm:$0xf] %vm957, %v847
  %977 = vst.msk [vmem:[%s3 + $0x4c] sm:$0xf] %vm957, %v848
  %978 = vst.msk [vmem:[%s3 + $0x50] sm:$0xf] %vm957, %v849
  %979 = vst.msk [vmem:[%s3 + $0x54] sm:$0xf] %vm957, %v850
  %980 = vst.msk [vmem:[%s3 + $0x58] sm:$0xf] %vm957, %v851
  %981 = vst.msk [vmem:[%s3 + $0x5c] sm:$0xf] %vm957, %v852
  %982 = vst.msk [vmem:[%s3 + $0x60] sm:$0xf] %vm957, %v853
  %983 = vst.msk [vmem:[%s3 + $0x64] sm:$0xf] %vm957, %v854
  %984 = vst.msk [vmem:[%s3 + $0x68] sm:$0xf] %vm957, %v855
  %985 = vst.msk [vmem:[%s3 + $0x6c] sm:$0xf] %vm957, %v856
  %986 = vst.msk [vmem:[%s3 + $0x70] sm:$0xf] %vm957, %v857
  %987 = vst.msk [vmem:[%s3 + $0x74] sm:$0xf] %vm957, %v858
  %988 = vst.msk [vmem:[%s3 + $0x78] sm:$0xf] %vm957, %v859
  %989 = vst.msk [vmem:[%s3 + $0x7c] sm:$0xf] %vm957, %v860
  %990 = vst.msk [vmem:[%s3 + $0x80] sm:$0xf] %vm957, %v861
  %991 = vst.msk [vmem:[%s3 + $0x84] sm:$0xf] %vm957, %v862
  %992 = vst.msk [vmem:[%s3 + $0x88] sm:$0xf] %vm957, %v863
  %993 = vst.msk [vmem:[%s3 + $0x8c] sm:$0xf] %vm957, %v864
  %994 = vst.msk [vmem:[%s3 + $0x90] sm:$0xf] %vm957, %v865
  %995 = vst.msk [vmem:[%s3 + $0x94] sm:$0xf] %vm957, %v866
  %996 = vst.msk [vmem:[%s3 + $0x98] sm:$0xf] %vm957, %v867
  %997 = vst.msk [vmem:[%s3 + $0x9c] sm:$0xf] %vm957, %v868
  %998 = vst.msk [vmem:[%s3 + $0xa0] sm:$0xf] %vm957, %v869
  %999 = vst.msk [vmem:[%s3 + $0xa4] sm:$0xf] %vm957, %v870
  %1000 = vst.msk [vmem:[%s3 + $0xa8] sm:$0xf] %vm957, %v871
  %1001 = vst.msk [vmem:[%s3 + $0xac] sm:$0xf] %vm957, %v872
  %1002 = vst.msk [vmem:[%s3 + $0xb0] sm:$0xf] %vm957, %v873
  %1003 = vst.msk [vmem:[%s3 + $0xb4] sm:$0xf] %vm957, %v874
  %1004 = vst.msk [vmem:[%s3 + $0xb8] sm:$0xf] %vm957, %v875
  %1005 = vst.msk [vmem:[%s3 + $0xbc] sm:$0xf] %vm957, %v876
  %1006 = vst.msk [vmem:[%s3 + $0xc0] sm:$0xf] %vm957, %v877
  %1007 = vst.msk [vmem:[%s3 + $0xc4] sm:$0xf] %vm957, %v878
  %1008 = vst.msk [vmem:[%s3 + $0xc8] sm:$0xf] %vm957, %v879
  %1009 = vst.msk [vmem:[%s3 + $0xcc] sm:$0xf] %vm957, %v880
  %1010 = vst.msk [vmem:[%s3 + $0xd0] sm:$0xf] %vm957, %v881
  %1011 = vst.msk [vmem:[%s3 + $0xd4] sm:$0xf] %vm957, %v882
  %1012 = vst.msk [vmem:[%s3 + $0xd8] sm:$0xf] %vm957, %v883
  %1013 = vst.msk [vmem:[%s3 + $0xdc] sm:$0xf] %vm957, %v884
  %1014 = vst.msk [vmem:[%s3 + $0xe0] sm:$0xf] %vm957, %v885
  %1015 = vst.msk [vmem:[%s3 + $0xe4] sm:$0xf] %vm957, %v886
  %1016 = vst.msk [vmem:[%s3 + $0xe8] sm:$0xf] %vm957, %v887
  %1017 = vst.msk [vmem:[%s3 + $0xec] sm:$0xf] %vm957, %v888
  %1018 = vst.msk [vmem:[%s3 + $0xf0] sm:$0xf] %vm957, %v889
  %1019 = vst.msk [vmem:[%s3 + $0xf4] sm:$0xf] %vm957, %v890
  %1020 = vst.msk [vmem:[%s3 + $0xf8] sm:$0xf] %vm957, %v891
  %1021 = vst.msk [vmem:[%s3 + $0xfc] sm:$0xf] %vm957, %v892
  // Predicated region
  $region14: #{inception_forward.2} parent=0 // pred_check
    _
  $region15: #{inception_forward.2} parent=0 // pred_check_branch
    %1023 = sbr.rel (0) target = $region17
  $region16: #{inception_forward.2} parent=0 // pred_region
    _
  $region17: #{inception_forward.2} parent=0 // pred_fallthru
    _
  // Predicated region
  $region18: #{inception_forward.2} parent=0 // pred_check
    _
  $region19: #{inception_forward.2} parent=0 // pred_check_branch
    %1025 = sbr.rel (0) target = $region21
  $region20: #{inception_forward.2} parent=0 // pred_region
    _
  $region21: #{inception_forward.2} parent=0 // pred_fallthru
    _

// kernel: inception_forward.3
$region0: #{inception_forward.3}
  #allocation0 [shape = 'u32[]', space=smem, size = 0x4, offset = 0x4, fixed_abs, tag = 'smem constant byte address 0x4 - core index']
  #allocation1 [shape = 'u32[144,128]{1,0:T(1,128)}', space=vmem, size = 0x12000, scoped, tag = 'internal scratch']
  %s0 = inlined_call_operand.vmem [shape: bf16[2,18,18,20], index: 0, kind: input, shape index: {}]
  %s1 = inlined_call_operand.vmem [shape: bf16[2,18,18,8], index: 1, kind: input, shape index: {}]
  %s2 = inlined_call_operand.vmem [shape: bf16[188,40], index: 2, kind: input, shape index: {}]
  %s3 = inlined_call_operand.vmem [shape: f32[1,40], index: 3, kind: input, shape index: {}]
  %s4 = inlined_call_operand.hbm [shape: f32[2,16,16,40], index: 4, kind: output, shape index: {}]
  %s5 = sld [smem:[#allocation0]]
  $region49: #{inception_forward.3} parent=0
    _
  %s7 = ssub.s32 1, %s5
  %s8 = scalar_select 0, %s7, %s5
  $region1: #{inception_forward.3} parent=0
    #allocation2 [shape = 'u8[262144]{0}', space=vmem, size = 0x40000, scoped, tag = 'output window, operand 0']
    #allocation3 [shape = 's32[2]{0}', space=sflag, size = 0x8, scoped, tag = 'scoped memory for inception_forward.3']
    %9 = vsyncpa [#allocation3], 0
    %s10 = scalar_lea.sflag [#allocation3], 1
    %11 = vsyncpa %s10, 0
    loop: start=0, step=1, limit=4
    $region2: #{inception_forward.3} parent=1 // loop_pre_header
      _
    $region3: #{inception_forward.3} parent=1 // loop_header
      %s13 = sphi 0, %s17
      %p14 = scmp.ge.s32.totalorder %s13, 4
      %s23 = sphi 0, %s25
      %s26 = sphi 0, %s23
      %s27 = sphi 0, %s26
      %s43 = sphi 0, %s27
      %s49 = sphi 0, %s51
      %s52 = sphi 0, %s49
      %s53 = sphi 0, %s52
      %s69 = sphi 0, %s53
      %s73 = sphi 0, %s73
      %s75 = sphi 0, %s73
      %s76 = sphi 0, %s75
      %s90 = sphi 0, %s76
      %s94 = sphi 0, %s94
      %s96 = sphi 0, %s94
      %s97 = sphi 0, %s96
      %s111 = sphi 0, %s97
      %s117 = sphi 0, %s119
      %s120 = sphi 0, %s117
      %s121 = sphi 0, %s120
      %s137 = sphi 0, %s121
    $region4: #{inception_forward.3} parent=1 // loop_header_branch
      %16 = sbr.rel (%p14) target = $region8
    $region5: #{inception_forward.3} parent=1 // loop_body
      %s18 = ssub.s32 %s13, 1
      %s19 = ssub.s32 %s13, 2
      %s20 = sadd.s32 %s13, 1
      %s21 = ssub.s32 %s13, %s20
      %p22 = scmp.eq.s32.totalorder %s21, 0
      %s24 = sadd.s32 %s23, 1
      %s25 = scalar_select %p22, %s23, %s24
      %p28 = pneg %p22
      %p29 = scmp.eq.s32.totalorder %s13, 1
      %p30 = por %p28, %p29
      %p31 = scmp.ne.s32.totalorder %s23, %s26
      %p32 = scmp.eq.s32.totalorder %s13, 0
      %p33 = por %p31, %p32
      %p34 = scmp.ne.s32.totalorder %s23, %s26
      %p35 = scmp.eq.s32.totalorder %s18, 1
      %p36 = por %p34, %p35
      %p37 = scmp.ne.s32.totalorder %s26, %s27
      %p38 = scmp.eq.s32.totalorder %s18, 0
      %p39 = por %p37, %p38
      %p40 = scmp.ne.s32.totalorder %s26, %s27
      %p41 = scmp.eq.s32.totalorder %s19, 1
      %p42 = por %p40, %p41
      %p44 = scmp.ne.s32.totalorder %s27, %s43
      %p45 = scmp.eq.s32.totalorder %s19, 0
      %p46 = por %p44, %p45
      %s47 = ssub.s32 %s13, %s20
      %p48 = scmp.eq.s32.totalorder %s47, 0
      %s50 = sadd.s32 %s49, 1
      %s51 = scalar_select %p48, %s49, %s50
      %p54 = pneg %p48
      %p55 = scmp.eq.s32.totalorder %s13, 1
      %p56 = por %p54, %p55
      %p57 = scmp.ne.s32.totalorder %s49, %s52
      %p58 = scmp.eq.s32.totalorder %s13, 0
      %p59 = por %p57, %p58
      %p60 = scmp.ne.s32.totalorder %s49, %s52
      %p61 = scmp.eq.s32.totalorder %s18, 1
      %p62 = por %p60, %p61
      %p63 = scmp.ne.s32.totalorder %s52, %s53
      %p64 = scmp.eq.s32.totalorder %s18, 0
      %p65 = por %p63, %p64
      %p66 = scmp.ne.s32.totalorder %s52, %s53
      %p67 = scmp.eq.s32.totalorder %s19, 1
      %p68 = por %p66, %p67
      %p70 = scmp.ne.s32.totalorder %s53, %s69
      %p71 = scmp.eq.s32.totalorder %s19, 0
      %p72 = por %p70, %p71
      %s74 = sadd.s32 %s73, 1
      %p77 = scmp.eq.s32.totalorder %s13, 1
      %p78 = scmp.ne.s32.totalorder %s73, %s75
      %p79 = scmp.eq.s32.totalorder %s13, 0
      %p80 = por %p78, %p79
      %p81 = scmp.ne.s32.totalorder %s73, %s75
      %p82 = scmp.eq.s32.totalorder %s18, 1
      %p83 = por %p81, %p82
      %p84 = scmp.ne.s32.totalorder %s75, %s76
      %p85 = scmp.eq.s32.totalorder %s18, 0
      %p86 = por %p84, %p85
      %p87 = scmp.ne.s32.totalorder %s75, %s76
      %p88 = scmp.eq.s32.totalorder %s19, 1
      %p89 = por %p87, %p88
      %p91 = scmp.ne.s32.totalorder %s76, %s90
      %p92 = scmp.eq.s32.totalorder %s19, 0
      %p93 = por %p91, %p92
      %s95 = sadd.s32 %s94, 1
      %p98 = scmp.eq.s32.totalorder %s13, 1
      %p99 = scmp.ne.s32.totalorder %s94, %s96
      %p100 = scmp.eq.s32.totalorder %s13, 0
      %p101 = por %p99, %p100
      %p102 = scmp.ne.s32.totalorder %s94, %s96
      %p103 = scmp.eq.s32.totalorder %s18, 1
      %p104 = por %p102, %p103
      %p105 = scmp.ne.s32.totalorder %s96, %s97
      %p106 = scmp.eq.s32.totalorder %s18, 0
      %p107 = por %p105, %p106
      %p108 = scmp.ne.s32.totalorder %s96, %s97
      %p109 = scmp.eq.s32.totalorder %s19, 1
      %p110 = por %p108, %p109
      %p112 = scmp.ne.s32.totalorder %s97, %s111
      %p113 = scmp.eq.s32.totalorder %s19, 0
      %p114 = por %p112, %p113
      %s115 = ssub.s32 %s13, %s20
      %p116 = scmp.eq.s32.totalorder %s115, 0
      %s118 = sadd.s32 %s117, 1
      %s119 = scalar_select %p116, %s117, %s118
      %p122 = pneg %p116
      %p123 = scmp.eq.s32.totalorder %s13, 1
      %p124 = por %p122, %p123
      %p125 = scmp.ne.s32.totalorder %s117, %s120
      %p126 = scmp.eq.s32.totalorder %s13, 0
      %p127 = por %p125, %p126
      %p128 = scmp.ne.s32.totalorder %s117, %s120
      %p129 = scmp.eq.s32.totalorder %s18, 1
      %p130 = por %p128, %p129
      %p131 = scmp.ne.s32.totalorder %s120, %s121
      %p132 = scmp.eq.s32.totalorder %s18, 0
      %p133 = por %p131, %p132
      %p134 = scmp.ne.s32.totalorder %s120, %s121
      %p135 = scmp.eq.s32.totalorder %s19, 1
      %p136 = por %p134, %p135
      %p138 = scmp.ne.s32.totalorder %s121, %s137
      %p139 = scmp.eq.s32.totalorder %s19, 0
      %p140 = por %p138, %p139
      %p141 = scmp.le.s32.totalorder 1, %s13
      %p142 = scmp.lt.s32.totalorder %s13, 3
      %p143 = pnand %p141, %p142
      %p144 = pneg %p143
      // Predicated region
      $region9: #{inception_forward.3} parent=5 // pred_check
        _
      $region10: #{inception_forward.3} parent=5 // pred_check_branch
        %146 = sbr.rel (%p143) target = $region12
      $region11: #{inception_forward.3} parent=5 // pred_region
        %s147 = ssub.s32 %s13, 1
        // Predicated region
        $region13: #{inception_forward.3} parent=11 // pred_check
          %p148 = pneg %p86
        $region14: #{inception_forward.3} parent=11 // pred_check_branch
          %150 = sbr.rel (%p148) target = $region16
        $region15: #{inception_forward.3} parent=11 // pred_region
          _
        $region16: #{inception_forward.3} parent=11 // pred_fallthru
          _
        // Predicated region
        $region17: #{inception_forward.3} parent=11 // pred_check
          %p151 = pneg %p107
        $region18: #{inception_forward.3} parent=11 // pred_check_branch
          %153 = sbr.rel (%p151) target = $region20
        $region19: #{inception_forward.3} parent=11 // pred_region
          _
        $region20: #{inception_forward.3} parent=11 // pred_fallthru
          _
      $region12: #{inception_forward.3} parent=5 // pred_fallthru
        _
      %p154 = scmp.lt.s32.totalorder %s13, 2
      // Predicated region
      $region21: #{inception_forward.3} parent=5 // pred_check
        %p155 = pneg %p154
      $region22: #{inception_forward.3} parent=5 // pred_check_branch
        %157 = sbr.rel (%p155) target = $region24
      $region23: #{inception_forward.3} parent=5 // pred_region
        // Predicated region
        $region25: #{inception_forward.3} parent=23 // pred_check
          %p158 = pneg %p33
        $region26: #{inception_forward.3} parent=23 // pred_check_branch
          %160 = sbr.rel (%p158) target = $region28
        $region27: #{inception_forward.3} parent=23 // pred_region
          %p161 = scmp.lt.s32.totalorder %s13, 1
          %s162 = scalar_select %p161, %s13, 1
          %s163 = smul.addr %s162, 54
          %s164 = smul.addr %s163, 4
          %s165 = scalar_lea.vmem %s0, %s164
        $region28: #{inception_forward.3} parent=23 // pred_fallthru
          _
        // Predicated region
        $region29: #{inception_forward.3} parent=23 // pred_check
          %p166 = pneg %p59
        $region30: #{inception_forward.3} parent=23 // pred_check_branch
          %168 = sbr.rel (%p166) target = $region32
        $region31: #{inception_forward.3} parent=23 // pred_region
          %p169 = scmp.lt.s32.totalorder %s13, 1
          %s170 = scalar_select %p169, %s13, 1
          %s171 = smul.addr %s170, 54
          %s172 = smul.addr %s171, 4
          %s173 = scalar_lea.vmem %s1, %s172
        $region32: #{inception_forward.3} parent=23 // pred_fallthru
          _
      $region24: #{inception_forward.3} parent=5 // pred_fallthru
        _
      %p174 = scmp.le.s32.totalorder 1, %s13
      %p175 = scmp.lt.s32.totalorder %s13, 3
      %p176 = pnand %p174, %p175
      %p177 = pneg %p176
      // Predicated region
      $region33: #{inception_forward.3} parent=5 // pred_check
        _
      $region34: #{inception_forward.3} parent=5 // pred_check_branch
        %179 = sbr.rel (%p176) target = $region36
      $region35: #{inception_forward.3} parent=5 // pred_region
        %s180 = ssub.s32 %s13, 1
        %p181 = scmp.lt.s32.totalorder %s18, 1
        %s182 = scalar_select %p181, %s18, 1
        %s183 = smul.addr %s182, 54
        %s184 = smul.addr %s183, 4
        %s185 = scalar_lea.vmem %s0, %s184
        %p186 = pneg %p39
        %p187 = pneg %p36
        %p188 = scmp.lt.s32.totalorder %s18, 1
        %s189 = scalar_select %p188, %s18, 1
        %s190 = smul.addr %s189, 54
        %s191 = smul.addr %s190, 4
        %s192 = scalar_lea.vmem %s1, %s191
        %p193 = pneg %p65
        %p194 = pneg %p62
        %p195 = pneg %p86
        %p196 = pneg %p83
        %p197 = pneg %p107
        %p198 = pneg %p104
        %p199 = pneg %p133
        %p200 = pneg %p130
        %s201 = sand.u32 %s120, 1
        %s202 = scalar_lea.sflag [#allocation3], %s201
        %s203 = sand.u32 %s120, 1
        %s204 = smul.addr %s203, 256
        %s205 = scalar_lea.vmem [#allocation2], %s204
        %p206 = scmp.lt.s32.totalorder %s18, 1
        %s207 = scalar_select %p206, %s18, 1
        %s208 = smul.addr %s207, 54
        %s209 = smul.addr %s208, 4
        %s210 = scalar_lea.vmem %s0, %s209
        %p211 = scmp.lt.s32.totalorder %s18, 1
        %s212 = scalar_select %p211, %s18, 1
        %s213 = smul.addr %s212, 54
        %s214 = smul.addr %s213, 4
        %s215 = scalar_lea.vmem %s1, %s214
        %v217 = vld [vmem:[%s210] sm:$0xf]
        %v218 = vld [vmem:[%s210 + $0x4] sm:$0xf]
        %v219 = vld [vmem:[%s210 + $0x8] sm:$0x1]
        %v220 = vld [vmem:[%s210 + $0xc] sm:$0xf]
        %v221 = vld [vmem:[%s210 + $0x10] sm:$0xf]
        %v222 = vld [vmem:[%s210 + $0x14] sm:$0x1]
        %v223 = vld [vmem:[%s210 + $0x18] sm:$0xf]
        %v224 = vld [vmem:[%s210 + $0x1c] sm:$0xf]
        %v225 = vld [vmem:[%s210 + $0x20] sm:$0x1]
        %v226 = vld [vmem:[%s210 + $0x24] sm:$0xf]
        %v227 = vld [vmem:[%s210 + $0x28] sm:$0xf]
        %v228 = vld [vmem:[%s210 + $0x2c] sm:$0x1]
        %v229 = vld [vmem:[%s210 + $0x30] sm:$0xf]
        %v230 = vld [vmem:[%s210 + $0x34] sm:$0xf]
        %v231 = vld [vmem:[%s210 + $0x38] sm:$0x1]
        %v232 = vld [vmem:[%s210 + $0x3c] sm:$0xf]
        %v233 = vld [vmem:[%s210 + $0x40] sm:$0xf]
        %v234 = vld [vmem:[%s210 + $0x44] sm:$0x1]
        %v235 = vld [vmem:[%s210 + $0x48] sm:$0xf]
        %v236 = vld [vmem:[%s210 + $0x4c] sm:$0xf]
        %v237 = vld [vmem:[%s210 + $0x50] sm:$0x1]
        %v238 = vld [vmem:[%s210 + $0x54] sm:$0xf]
        %v239 = vld [vmem:[%s210 + $0x58] sm:$0xf]
        %v240 = vld [vmem:[%s210 + $0x5c] sm:$0x1]
        %v241 = vld [vmem:[%s210 + $0x60] sm:$0xf]
        %v242 = vld [vmem:[%s210 + $0x64] sm:$0xf]
        %v243 = vld [vmem:[%s210 + $0x68] sm:$0x1]
        %v244 = vld [vmem:[%s210 + $0x6c] sm:$0xf]
        %v245 = vld [vmem:[%s210 + $0x70] sm:$0xf]
        %v246 = vld [vmem:[%s210 + $0x74] sm:$0x1]
        %v247 = vld [vmem:[%s210 + $0x78] sm:$0xf]
        %v248 = vld [vmem:[%s210 + $0x7c] sm:$0xf]
        %v249 = vld [vmem:[%s210 + $0x80] sm:$0x1]
        %v250 = vld [vmem:[%s210 + $0x84] sm:$0xf]
        %v251 = vld [vmem:[%s210 + $0x88] sm:$0xf]
        %v252 = vld [vmem:[%s210 + $0x8c] sm:$0x1]
        %v253 = vld [vmem:[%s210 + $0x90] sm:$0xf]
        %v254 = vld [vmem:[%s210 + $0x94] sm:$0xf]
        %v255 = vld [vmem:[%s210 + $0x98] sm:$0x1]
        %v256 = vld [vmem:[%s210 + $0x9c] sm:$0xf]
        %v257 = vld [vmem:[%s210 + $0xa0] sm:$0xf]
        %v258 = vld [vmem:[%s210 + $0xa4] sm:$0x1]
        %v259 = vld [vmem:[%s210 + $0xa8] sm:$0xf]
        %v260 = vld [vmem:[%s210 + $0xac] sm:$0xf]
        %v261 = vld [vmem:[%s210 + $0xb0] sm:$0x1]
        %v262 = vld [vmem:[%s210 + $0xb4] sm:$0xf]
        %v263 = vld [vmem:[%s210 + $0xb8] sm:$0xf]
        %v264 = vld [vmem:[%s210 + $0xbc] sm:$0x1]
        %v265 = vld [vmem:[%s210 + $0xc0] sm:$0xf]
        %v266 = vld [vmem:[%s210 + $0xc4] sm:$0xf]
        %v267 = vld [vmem:[%s210 + $0xc8] sm:$0x1]
        %v268 = vld [vmem:[%s210 + $0xcc] sm:$0xf]
        %v269 = vld [vmem:[%s210 + $0xd0] sm:$0xf]
        %v270 = vld [vmem:[%s210 + $0xd4] sm:$0x1]
        %v271 = vld [vmem:[%s215] sm:$0xf]
        %v272 = vld [vmem:[%s215 + $0x4] sm:$0xf]
        %v273 = vld [vmem:[%s215 + $0x8] sm:$0x1]
        %v274 = vld [vmem:[%s215 + $0xc] sm:$0xf]
        %v275 = vld [vmem:[%s215 + $0x10] sm:$0xf]
        %v276 = vld [vmem:[%s215 + $0x14] sm:$0x1]
        %v277 = vld [vmem:[%s215 + $0x18] sm:$0xf]
        %v278 = vld [vmem:[%s215 + $0x1c] sm:$0xf]
        %v279 = vld [vmem:[%s215 + $0x20] sm:$0x1]
        %v280 = vld [vmem:[%s215 + $0x24] sm:$0xf]
        %v281 = vld [vmem:[%s215 + $0x28] sm:$0xf]
        %v282 = vld [vmem:[%s215 + $0x2c] sm:$0x1]
        %v283 = vld [vmem:[%s215 + $0x30] sm:$0xf]
        %v284 = vld [vmem:[%s215 + $0x34] sm:$0xf]
        %v285 = vld [vmem:[%s215 + $0x38] sm:$0x1]
        %v286 = vld [vmem:[%s215 + $0x3c] sm:$0xf]
        %v287 = vld [vmem:[%s215 + $0x40] sm:$0xf]
        %v288 = vld [vmem:[%s215 + $0x44] sm:$0x1]
        %v289 = vld [vmem:[%s215 + $0x48] sm:$0xf]
        %v290 = vld [vmem:[%s215 + $0x4c] sm:$0xf]
        %v291 = vld [vmem:[%s215 + $0x50] sm:$0x1]
        %v292 = vld [vmem:[%s215 + $0x54] sm:$0xf]
        %v293 = vld [vmem:[%s215 + $0x58] sm:$0xf]
        %v294 = vld [vmem:[%s215 + $0x5c] sm:$0x1]
        %v295 = vld [vmem:[%s215 + $0x60] sm:$0xf]
        %v296 = vld [vmem:[%s215 + $0x64] sm:$0xf]
        %v297 = vld [vmem:[%s215 + $0x68] sm:$0x1]
        %v298 = vld [vmem:[%s215 + $0x6c] sm:$0xf]
        %v299 = vld [vmem:[%s215 + $0x70] sm:$0xf]
        %v300 = vld [vmem:[%s215 + $0x74] sm:$0x1]
        %v301 = vld [vmem:[%s215 + $0x78] sm:$0xf]
        %v302 = vld [vmem:[%s215 + $0x7c] sm:$0xf]
        %v303 = vld [vmem:[%s215 + $0x80] sm:$0x1]
        %v304 = vld [vmem:[%s215 + $0x84] sm:$0xf]
        %v305 = vld [vmem:[%s215 + $0x88] sm:$0xf]
        %v306 = vld [vmem:[%s215 + $0x8c] sm:$0x1]
        %v307 = vld [vmem:[%s215 + $0x90] sm:$0xf]
        %v308 = vld [vmem:[%s215 + $0x94] sm:$0xf]
        %v309 = vld [vmem:[%s215 + $0x98] sm:$0x1]
        %v310 = vld [vmem:[%s215 + $0x9c] sm:$0xf]
        %v311 = vld [vmem:[%s215 + $0xa0] sm:$0xf]
        %v312 = vld [vmem:[%s215 + $0xa4] sm:$0x1]
        %v313 = vld [vmem:[%s215 + $0xa8] sm:$0xf]
        %v314 = vld [vmem:[%s215 + $0xac] sm:$0xf]
        %v315 = vld [vmem:[%s215 + $0xb0] sm:$0x1]
        %v316 = vld [vmem:[%s215 + $0xb4] sm:$0xf]
        %v317 = vld [vmem:[%s215 + $0xb8] sm:$0xf]
        %v318 = vld [vmem:[%s215 + $0xbc] sm:$0x1]
        %v319 = vld [vmem:[%s215 + $0xc0] sm:$0xf]
        %v320 = vld [vmem:[%s215 + $0xc4] sm:$0xf]
        %v321 = vld [vmem:[%s215 + $0xc8] sm:$0x1]
        %v322 = vld [vmem:[%s215 + $0xcc] sm:$0xf]
        %v323 = vld [vmem:[%s215 + $0xd0] sm:$0xf]
        %v324 = vld [vmem:[%s215 + $0xd4] sm:$0x1]
        %v325 = vunpack.c.l.bf16 %v217
        %v326 = vunpack.c.l.bf16 %v218
        %v327 = vunpack.c.l.bf16 %v220
        %v328 = vunpack.c.l.bf16 %v221
        %v329 = vunpack.c.l.bf16 %v223
        %v330 = vunpack.c.l.bf16 %v224
        %v331 = vunpack.c.l.bf16 %v226
        %v332 = vunpack.c.l.bf16 %v227
        %v333 = vunpack.c.l.bf16 %v229
        %v334 = vunpack.c.l.bf16 %v230
        %v335 = vunpack.c.l.bf16 %v232
        %v336 = vunpack.c.l.bf16 %v233
        %v337 = vunpack.c.l.bf16 %v235
        %v338 = vunpack.c.l.bf16 %v236
        %v339 = vunpack.c.l.bf16 %v238
        %v340 = vunpack.c.l.bf16 %v239
        %v341 = vunpack.c.l.bf16 %v241
        %v342 = vunpack.c.l.bf16 %v242
        %v343 = vunpack.c.l.bf16 %v244
        %v344 = vunpack.c.l.bf16 %v245
        %v345 = vunpack.c.l.bf16 %v247
        %v346 = vunpack.c.l.bf16 %v248
        %v347 = vunpack.c.l.bf16 %v250
        %v348 = vunpack.c.l.bf16 %v251
        %v349 = vunpack.c.l.bf16 %v253
        %v350 = vunpack.c.l.bf16 %v254
        %v351 = vunpack.c.l.bf16 %v256
        %v352 = vunpack.c.l.bf16 %v257
        %v353 = vunpack.c.l.bf16 %v259
        %v354 = vunpack.c.l.bf16 %v260
        %v355 = vunpack.c.l.bf16 %v262
        %v356 = vunpack.c.l.bf16 %v263
        %v357 = vunpack.c.l.bf16 %v219
        %v358 = vunpack.c.l.bf16 %v222
        %v359 = vunpack.c.l.bf16 %v225
        %v360 = vunpack.c.l.bf16 %v228
        %v361 = vunpack.c.l.bf16 %v231
        %v362 = vunpack.c.l.bf16 %v234
        %v363 = vunpack.c.l.bf16 %v237
        %v364 = vunpack.c.l.bf16 %v240
        %v365 = vunpack.c.l.bf16 %v243
        %v366 = vunpack.c.l.bf16 %v246
        %v367 = vunpack.c.l.bf16 %v249
        %v368 = vunpack.c.l.bf16 %v252
        %v369 = vunpack.c.l.bf16 %v255
        %v370 = vunpack.c.l.bf16 %v258
        %v371 = vunpack.c.l.bf16 %v261
        %v372 = vunpack.c.l.bf16 %v264
        %vm421 = vcmask 1046528
        %v422 = vrot.slane %v325, 1
        %v423 = vrot.slane %v326, 1
        %v424 = vsel %vm421, %v422, %v423
        %v425 = vrot.slane %v357, 1
        %v426 = vsel %vm421, %v423, %v425
        %v427 = vrot.slane %v327, 1
        %v428 = vrot.slane %v328, 1
        %v429 = vsel %vm421, %v427, %v428
        %v430 = vrot.slane %v358, 1
        %v431 = vsel %vm421, %v428, %v430
        %v432 = vrot.slane %v329, 1
        %v433 = vrot.slane %v330, 1
        %v434 = vsel %vm421, %v432, %v433
        %v435 = vrot.slane %v359, 1
        %v436 = vsel %vm421, %v433, %v435
        %v437 = vrot.slane %v331, 1
        %v438 = vrot.slane %v332, 1
        %v439 = vsel %vm421, %v437, %v438
        %v440 = vrot.slane %v360, 1
        %v441 = vsel %vm421, %v438, %v440
        %v442 = vrot.slane %v333, 1
        %v443 = vrot.slane %v334, 1
        %v444 = vsel %vm421, %v442, %v443
        %v445 = vrot.slane %v361, 1
        %v446 = vsel %vm421, %v443, %v445
        %v447 = vrot.slane %v335, 1
        %v448 = vrot.slane %v336, 1
        %v449 = vsel %vm421, %v447, %v448
        %v450 = vrot.slane %v362, 1
        %v451 = vsel %vm421, %v448, %v450
        %v452 = vrot.slane %v337, 1
        %v453 = vrot.slane %v338, 1
        %v454 = vsel %vm421, %v452, %v453
        %v455 = vrot.slane %v363, 1
        %v456 = vsel %vm421, %v453, %v455
        %v457 = vrot.slane %v339, 1
        %v458 = vrot.slane %v340, 1
        %v459 = vsel %vm421, %v457, %v458
        %v460 = vrot.slane %v364, 1
        %v461 = vsel %vm421, %v458, %v460
        %v462 = vrot.slane %v341, 1
        %v463 = vrot.slane %v342, 1
        %v464 = vsel %vm421, %v462, %v463
        %v465 = vrot.slane %v365, 1
        %v466 = vsel %vm421, %v463, %v465
        %v467 = vrot.slane %v343, 1
        %v468 = vrot.slane %v344, 1
        %v469 = vsel %vm421, %v467, %v468
        %v470 = vrot.slane %v366, 1
        %v471 = vsel %vm421, %v468, %v470
        %v472 = vrot.slane %v345, 1
        %v473 = vrot.slane %v346, 1
        %v474 = vsel %vm421, %v472, %v473
        %v475 = vrot.slane %v367, 1
        %v476 = vsel %vm421, %v473, %v475
        %v477 = vrot.slane %v347, 1
        %v478 = vrot.slane %v348, 1
        %v479 = vsel %vm421, %v477, %v478
        %v480 = vrot.slane %v368, 1
        %v481 = vsel %vm421, %v478, %v480
        %v482 = vrot.slane %v349, 1
        %v483 = vrot.slane %v350, 1
        %v484 = vsel %vm421, %v482, %v483
        %v485 = vrot.slane %v369, 1
        %v486 = vsel %vm421, %v483, %v485
        %v487 = vrot.slane %v351, 1
        %v488 = vrot.slane %v352, 1
        %v489 = vsel %vm421, %v487, %v488
        %v490 = vrot.slane %v370, 1
        %v491 = vsel %vm421, %v488, %v490
        %v492 = vrot.slane %v353, 1
        %v493 = vrot.slane %v354, 1
        %v494 = vsel %vm421, %v492, %v493
        %v495 = vrot.slane %v371, 1
        %v496 = vsel %vm421, %v493, %v495
        %v497 = vrot.slane %v355, 1
        %v498 = vrot.slane %v356, 1
        %v499 = vsel %vm421, %v497, %v498
        %v500 = vrot.slane %v372, 1
        %v501 = vsel %vm421, %v498, %v500
        %vm502 = vcmask 1045504
        %v503 = vrot.slane %v325, 2
        %v504 = vrot.slane %v326, 2
        %v505 = vsel %vm502, %v503, %v504
        %v506 = vrot.slane %v357, 2
        %v507 = vsel %vm502, %v504, %v506
        %v508 = vrot.slane %v327, 2
        %v509 = vrot.slane %v328, 2
        %v510 = vsel %vm502, %v508, %v509
        %v511 = vrot.slane %v358, 2
        %v512 = vsel %vm502, %v509, %v511
        %v513 = vrot.slane %v329, 2
        %v514 = vrot.slane %v330, 2
        %v515 = vsel %vm502, %v513, %v514
        %v516 = vrot.slane %v359, 2
        %v517 = vsel %vm502, %v514, %v516
        %v518 = vrot.slane %v331, 2
        %v519 = vrot.slane %v332, 2
        %v520 = vsel %vm502, %v518, %v519
        %v521 = vrot.slane %v360, 2
        %v522 = vsel %vm502, %v519, %v521
        %v523 = vrot.slane %v333, 2
        %v524 = vrot.slane %v334, 2
        %v525 = vsel %vm502, %v523, %v524
        %v526 = vrot.slane %v361, 2
        %v527 = vsel %vm502, %v524, %v526
        %v528 = vrot.slane %v335, 2
        %v529 = vrot.slane %v336, 2
        %v530 = vsel %vm502, %v528, %v529
        %v531 = vrot.slane %v362, 2
        %v532 = vsel %vm502, %v529, %v531
        %v533 = vrot.slane %v337, 2
        %v534 = vrot.slane %v338, 2
        %v535 = vsel %vm502, %v533, %v534
        %v536 = vrot.slane %v363, 2
        %v537 = vsel %vm502, %v534, %v536
        %v538 = vrot.slane %v339, 2
        %v539 = vrot.slane %v340, 2
        %v540 = vsel %vm502, %v538, %v539
        %v541 = vrot.slane %v364, 2
        %v542 = vsel %vm502, %v539, %v541
        %v543 = vrot.slane %v341, 2
        %v544 = vrot.slane %v342, 2
        %v545 = vsel %vm502, %v543, %v544
        %v546 = vrot.slane %v365, 2
        %v547 = vsel %vm502, %v544, %v546
        %v548 = vrot.slane %v343, 2
        %v549 = vrot.slane %v344, 2
        %v550 = vsel %vm502, %v548, %v549
        %v551 = vrot.slane %v366, 2
        %v552 = vsel %vm502, %v549, %v551
        %v553 = vrot.slane %v345, 2
        %v554 = vrot.slane %v346, 2
        %v555 = vsel %vm502, %v553, %v554
        %v556 = vrot.slane %v367, 2
        %v557 = vsel %vm502, %v554, %v556
        %v558 = vrot.slane %v347, 2
        %v559 = vrot.slane %v348, 2
        %v560 = vsel %vm502, %v558, %v559
        %v561 = vrot.slane %v368, 2
        %v562 = vsel %vm502, %v559, %v561
        %v563 = vrot.slane %v349, 2
        %v564 = vrot.slane %v350, 2
        %v565 = vsel %vm502, %v563, %v564
        %v566 = vrot.slane %v369, 2
        %v567 = vsel %vm502, %v564, %v566
        %v568 = vrot.slane %v351, 2
        %v569 = vrot.slane %v352, 2
        %v570 = vsel %vm502, %v568, %v569
        %v571 = vrot.slane %v370, 2
        %v572 = vsel %vm502, %v569, %v571
        %v573 = vrot.slane %v353, 2
        %v574 = vrot.slane %v354, 2
        %v575 = vsel %vm502, %v573, %v574
        %v576 = vrot.slane %v371, 2
        %v577 = vsel %vm502, %v574, %v576
        %v578 = vrot.slane %v355, 2
        %v579 = vrot.slane %v356, 2
        %v580 = vsel %vm502, %v578, %v579
        %v581 = vrot.slane %v372, 2
        %v582 = vsel %vm502, %v579, %v581
        %v583 = vunpack.c.l.bf16 %v265
        %v584 = vunpack.c.l.bf16 %v266
        %v585 = vunpack.c.l.bf16 %v267
        %v589 = vrot.slane %v583, 1
        %v590 = vrot.slane %v584, 1
        %v591 = vsel %vm421, %v589, %v590
        %v592 = vrot.slane %v585, 1
        %v593 = vsel %vm421, %v590, %v592
        %v594 = vrot.slane %v583, 2
        %v595 = vrot.slane %v584, 2
        %v596 = vsel %vm502, %v594, %v595
        %v597 = vrot.slane %v585, 2
        %v598 = vsel %vm502, %v595, %v597
        %v599 = vunpack.c.l.bf16 %v268
        %v600 = vunpack.c.l.bf16 %v269
        %v601 = vunpack.c.l.bf16 %v270
        %v605 = vrot.slane %v599, 1
        %v606 = vrot.slane %v600, 1
        %v607 = vsel %vm421, %v605, %v606
        %v608 = vrot.slane %v601, 1
        %v609 = vsel %vm421, %v606, %v608
        %v610 = vrot.slane %v599, 2
        %v611 = vrot.slane %v600, 2
        %v612 = vsel %vm502, %v610, %v611
        %v613 = vrot.slane %v601, 2
        %v614 = vsel %vm502, %v611, %v613
        %vm615 = vsmask.f32 3328
        %vm616 = vsmask.f32 7440
        %vm617 = vmor %vm615, %vm616
        %v619 = vshrl.u32 %v271, 16
        %v621 = vrot.slane %v619, 4
        %v622 = vshll.u32 %v271, 16
        %v624 = vrot.slane %v622, 5
        %v625 = vor.u32 %v621, %v624
        %v626 = vrot.slane %v625, 4
        %v628 = vshll.u32 %v272, 16
        %v630 = vrot.slane %v628, 5
        %v631 = vsel %vm617, %v626, %v630
        %v632 = vshrl.u32 %v272, 16
        %v634 = vrot.slane %v632, 4
        %v635 = vor.u32 %v634, %v630
        %v636 = vrot.slane %v635, 4
        %v638 = vshll.u32 %v273, 16
        %v640 = vrot.slane %v638, 5
        %v641 = vsel %vm617, %v636, %v640
        %v643 = vshrl.u32 %v274, 16
        %v645 = vrot.slane %v643, 4
        %v646 = vshll.u32 %v274, 16
        %v648 = vrot.slane %v646, 5
        %v649 = vor.u32 %v645, %v648
        %v650 = vrot.slane %v649, 4
        %v652 = vshll.u32 %v275, 16
        %v654 = vrot.slane %v652, 5
        %v655 = vsel %vm617, %v650, %v654
        %v656 = vshrl.u32 %v275, 16
        %v658 = vrot.slane %v656, 4
        %v659 = vor.u32 %v658, %v654
        %v660 = vrot.slane %v659, 4
        %v662 = vshll.u32 %v276, 16
        %v664 = vrot.slane %v662, 5
        %v665 = vsel %vm617, %v660, %v664
        %v667 = vshrl.u32 %v277, 16
        %v669 = vrot.slane %v667, 4
        %v670 = vshll.u32 %v277, 16
        %v672 = vrot.slane %v670, 5
        %v673 = vor.u32 %v669, %v672
        %v674 = vrot.slane %v673, 4
        %v676 = vshll.u32 %v278, 16
        %v678 = vrot.slane %v676, 5
        %v679 = vsel %vm617, %v674, %v678
        %v680 = vshrl.u32 %v278, 16
        %v682 = vrot.slane %v680, 4
        %v683 = vor.u32 %v682, %v678
        %v684 = vrot.slane %v683, 4
        %v686 = vshll.u32 %v279, 16
        %v688 = vrot.slane %v686, 5
        %v689 = vsel %vm617, %v684, %v688
        %v691 = vshrl.u32 %v280, 16
        %v693 = vrot.slane %v691, 4
        %v694 = vshll.u32 %v280, 16
        %v696 = vrot.slane %v694, 5
        %v697 = vor.u32 %v693, %v696
        %v698 = vrot.slane %v697, 4
        %v700 = vshll.u32 %v281, 16
        %v702 = vrot.slane %v700, 5
        %v703 = vsel %vm617, %v698, %v702
        %v704 = vshrl.u32 %v281, 16
        %v706 = vrot.slane %v704, 4
        %v707 = vor.u32 %v706, %v702
        %v708 = vrot.slane %v707, 4
        %v710 = vshll.u32 %v282, 16
        %v712 = vrot.slane %v710, 5
        %v713 = vsel %vm617, %v708, %v712
        %v715 = vshrl.u32 %v283, 16
        %v717 = vrot.slane %v715, 4
        %v718 = vshll.u32 %v283, 16
        %v720 = vrot.slane %v718, 5
        %v721 = vor.u32 %v717, %v720
        %v722 = vrot.slane %v721, 4
        %v724 = vshll.u32 %v284, 16
        %v726 = vrot.slane %v724, 5
        %v727 = vsel %vm617, %v722, %v726
        %v728 = vshrl.u32 %v284, 16
        %v730 = vrot.slane %v728, 4
        %v731 = vor.u32 %v730, %v726
        %v732 = vrot.slane %v731, 4
        %v734 = vshll.u32 %v285, 16
        %v736 = vrot.slane %v734, 5
        %v737 = vsel %vm617, %v732, %v736
        %v739 = vshrl.u32 %v286, 16
        %v741 = vrot.slane %v739, 4
        %v742 = vshll.u32 %v286, 16
        %v744 = vrot.slane %v742, 5
        %v745 = vor.u32 %v741, %v744
        %v746 = vrot.slane %v745, 4
        %v748 = vshll.u32 %v287, 16
        %v750 = vrot.slane %v748, 5
        %v751 = vsel %vm617, %v746, %v750
        %v752 = vshrl.u32 %v287, 16
        %v754 = vrot.slane %v752, 4
        %v755 = vor.u32 %v754, %v750
        %v756 = vrot.slane %v755, 4
        %v758 = vshll.u32 %v288, 16
        %v760 = vrot.slane %v758, 5
        %v761 = vsel %vm617, %v756, %v760
        %v763 = vshrl.u32 %v289, 16
        %v765 = vrot.slane %v763, 4
        %v766 = vshll.u32 %v289, 16
        %v768 = vrot.slane %v766, 5
        %v769 = vor.u32 %v765, %v768
        %v770 = vrot.slane %v769, 4
        %v772 = vshll.u32 %v290, 16
        %v774 = vrot.slane %v772, 5
        %v775 = vsel %vm617, %v770, %v774
        %v776 = vshrl.u32 %v290, 16
        %v778 = vrot.slane %v776, 4
        %v779 = vor.u32 %v778, %v774
        %v780 = vrot.slane %v779, 4
        %v782 = vshll.u32 %v291, 16
        %v784 = vrot.slane %v782, 5
        %v785 = vsel %vm617, %v780, %v784
        %v787 = vshrl.u32 %v292, 16
        %v789 = vrot.slane %v787, 4
        %v790 = vshll.u32 %v292, 16
        %v792 = vrot.slane %v790, 5
        %v793 = vor.u32 %v789, %v792
        %v794 = vrot.slane %v793, 4
        %v796 = vshll.u32 %v293, 16
        %v798 = vrot.slane %v796, 5
        %v799 = vsel %vm617, %v794, %v798
        %v800 = vshrl.u32 %v293, 16
        %v802 = vrot.slane %v800, 4
        %v803 = vor.u32 %v802, %v798
        %v804 = vrot.slane %v803, 4
        %v806 = vshll.u32 %v294, 16
        %v808 = vrot.slane %v806, 5
        %v809 = vsel %vm617, %v804, %v808
        %v811 = vshrl.u32 %v295, 16
        %v813 = vrot.slane %v811, 4
        %v814 = vshll.u32 %v295, 16
        %v816 = vrot.slane %v814, 5
        %v817 = vor.u32 %v813, %v816
        %v818 = vrot.slane %v817, 4
        %v820 = vshll.u32 %v296, 16
        %v822 = vrot.slane %v820, 5
        %v823 = vsel %vm617, %v818, %v822
        %v824 = vshrl.u32 %v296, 16
        %v826 = vrot.slane %v824, 4
        %v827 = vor.u32 %v826, %v822
        %v828 = vrot.slane %v827, 4
        %v830 = vshll.u32 %v297, 16
        %v832 = vrot.slane %v830, 5
        %v833 = vsel %vm617, %v828, %v832
        %v835 = vshrl.u32 %v298, 16
        %v837 = vrot.slane %v835, 4
        %v838 = vshll.u32 %v298, 16
        %v840 = vrot.slane %v838, 5
        %v841 = vor.u32 %v837, %v840
        %v842 = vrot.slane %v841, 4
        %v844 = vshll.u32 %v299, 16
        %v846 = vrot.slane %v844, 5
        %v847 = vsel %vm617, %v842, %v846
        %v848 = vshrl.u32 %v299, 16
        %v850 = vrot.slane %v848, 4
        %v851 = vor.u32 %v850, %v846
        %v852 = vrot.slane %v851, 4
        %v854 = vshll.u32 %v300, 16
        %v856 = vrot.slane %v854, 5
        %v857 = vsel %vm617, %v852, %v856
        %v859 = vshrl.u32 %v301, 16
        %v861 = vrot.slane %v859, 4
        %v862 = vshll.u32 %v301, 16
        %v864 = vrot.slane %v862, 5
        %v865 = vor.u32 %v861, %v864
        %v866 = vrot.slane %v865, 4
        %v868 = vshll.u32 %v302, 16
        %v870 = vrot.slane %v868, 5
        %v871 = vsel %vm617, %v866, %v870
        %v872 = vshrl.u32 %v302, 16
        %v874 = vrot.slane %v872, 4
        %v875 = vor.u32 %v874, %v870
        %v876 = vrot.slane %v875, 4
        %v878 = vshll.u32 %v303, 16
        %v880 = vrot.slane %v878, 5
        %v881 = vsel %vm617, %v876, %v880
        %v883 = vshrl.u32 %v304, 16
        %v885 = vrot.slane %v883, 4
        %v886 = vshll.u32 %v304, 16
        %v888 = vrot.slane %v886, 5
        %v889 = vor.u32 %v885, %v888
        %v890 = vrot.slane %v889, 4
        %v892 = vshll.u32 %v305, 16
        %v894 = vrot.slane %v892, 5
        %v895 = vsel %vm617, %v890, %v894
        %v896 = vshrl.u32 %v305, 16
        %v898 = vrot.slane %v896, 4
        %v899 = vor.u32 %v898, %v894
        %v900 = vrot.slane %v899, 4
        %v902 = vshll.u32 %v306, 16
        %v904 = vrot.slane %v902, 5
        %v905 = vsel %vm617, %v900, %v904
        %v907 = vshrl.u32 %v307, 16
        %v909 = vrot.slane %v907, 4
        %v910 = vshll.u32 %v307, 16
        %v912 = vrot.slane %v910, 5
        %v913 = vor.u32 %v909, %v912
        %v914 = vrot.slane %v913, 4
        %v916 = vshll.u32 %v308, 16
        %v918 = vrot.slane %v916, 5
        %v919 = vsel %vm617, %v914, %v918
        %v920 = vshrl.u32 %v308, 16
        %v922 = vrot.slane %v920, 4
        %v923 = vor.u32 %v922, %v918
        %v924 = vrot.slane %v923, 4
        %v926 = vshll.u32 %v309, 16
        %v928 = vrot.slane %v926, 5
        %v929 = vsel %vm617, %v924, %v928
        %v931 = vshrl.u32 %v310, 16
        %v933 = vrot.slane %v931, 4
        %v934 = vshll.u32 %v310, 16
        %v936 = vrot.slane %v934, 5
        %v937 = vor.u32 %v933, %v936
        %v938 = vrot.slane %v937, 4
        %v940 = vshll.u32 %v311, 16
        %v942 = vrot.slane %v940, 5
        %v943 = vsel %vm617, %v938, %v942
        %v944 = vshrl.u32 %v311, 16
        %v946 = vrot.slane %v944, 4
        %v947 = vor.u32 %v946, %v942
        %v948 = vrot.slane %v947, 4
        %v950 = vshll.u32 %v312, 16
        %v952 = vrot.slane %v950, 5
        %v953 = vsel %vm617, %v948, %v952
        %v955 = vshrl.u32 %v313, 16
        %v957 = vrot.slane %v955, 4
        %v958 = vshll.u32 %v313, 16
        %v960 = vrot.slane %v958, 5
        %v961 = vor.u32 %v957, %v960
        %v962 = vrot.slane %v961, 4
        %v964 = vshll.u32 %v314, 16
        %v966 = vrot.slane %v964, 5
        %v967 = vsel %vm617, %v962, %v966
        %v968 = vshrl.u32 %v314, 16
        %v970 = vrot.slane %v968, 4
        %v971 = vor.u32 %v970, %v966
        %v972 = vrot.slane %v971, 4
        %v974 = vshll.u32 %v315, 16
        %v976 = vrot.slane %v974, 5
        %v977 = vsel %vm617, %v972, %v976
        %v979 = vshrl.u32 %v316, 16
        %v981 = vrot.slane %v979, 4
        %v982 = vshll.u32 %v316, 16
        %v984 = vrot.slane %v982, 5
        %v985 = vor.u32 %v981, %v984
        %v986 = vrot.slane %v985, 4
        %v988 = vshll.u32 %v317, 16
        %v990 = vrot.slane %v988, 5
        %v991 = vsel %vm617, %v986, %v990
        %v992 = vshrl.u32 %v317, 16
        %v994 = vrot.slane %v992, 4
        %v995 = vor.u32 %v994, %v990
        %v996 = vrot.slane %v995, 4
        %v998 = vshll.u32 %v318, 16
        %v1000 = vrot.slane %v998, 5
        %v1001 = vsel %vm617, %v996, %v1000
        %v1034 = vmax.bf16 %v271, %v631
        %v1035 = vmax.bf16 %v272, %v641
        %v1036 = vmax.bf16 %v274, %v655
        %v1037 = vmax.bf16 %v275, %v665
        %v1038 = vmax.bf16 %v277, %v679
        %v1039 = vmax.bf16 %v278, %v689
        %v1040 = vmax.bf16 %v280, %v703
        %v1041 = vmax.bf16 %v281, %v713
        %v1042 = vmax.bf16 %v283, %v727
        %v1043 = vmax.bf16 %v284, %v737
        %v1044 = vmax.bf16 %v286, %v751
        %v1045 = vmax.bf16 %v287, %v761
        %v1046 = vmax.bf16 %v289, %v775
        %v1047 = vmax.bf16 %v290, %v785
        %v1048 = vmax.bf16 %v292, %v799
        %v1049 = vmax.bf16 %v293, %v809
        %v1050 = vmax.bf16 %v295, %v823
        %v1051 = vmax.bf16 %v296, %v833
        %v1052 = vmax.bf16 %v298, %v847
        %v1053 = vmax.bf16 %v299, %v857
        %v1054 = vmax.bf16 %v301, %v871
        %v1055 = vmax.bf16 %v302, %v881
        %v1056 = vmax.bf16 %v304, %v895
        %v1057 = vmax.bf16 %v305, %v905
        %v1058 = vmax.bf16 %v307, %v919
        %v1059 = vmax.bf16 %v308, %v929
        %v1060 = vmax.bf16 %v310, %v943
        %v1061 = vmax.bf16 %v311, %v953
        %v1062 = vmax.bf16 %v313, %v967
        %v1063 = vmax.bf16 %v314, %v977
        %v1064 = vmax.bf16 %v316, %v991
        %v1065 = vmax.bf16 %v317, %v1001
        %vm1114 = vcmask 1042432
        %vm1115 = vcmask 1046532
        %vm1116 = vmor %vm1114, %vm1115
        %v1117 = vrot.slane %v271, 5
        %v1118 = vrot.slane %v1117, 4
        %v1119 = vrot.slane %v272, 5
        %v1120 = vsel %vm1116, %v1118, %v1119
        %v1121 = vrot.slane %v1119, 4
        %v1122 = vrot.slane %v273, 5
        %v1123 = vsel %vm1116, %v1121, %v1122
        %v1124 = vrot.slane %v274, 5
        %v1125 = vrot.slane %v1124, 4
        %v1126 = vrot.slane %v275, 5
        %v1127 = vsel %vm1116, %v1125, %v1126
        %v1128 = vrot.slane %v1126, 4
        %v1129 = vrot.slane %v276, 5
        %v1130 = vsel %vm1116, %v1128, %v1129
        %v1131 = vrot.slane %v277, 5
        %v1132 = vrot.slane %v1131, 4
        %v1133 = vrot.slane %v278, 5
        %v1134 = vsel %vm1116, %v1132, %v1133
        %v1135 = vrot.slane %v1133, 4
        %v1136 = vrot.slane %v279, 5
        %v1137 = vsel %vm1116, %v1135, %v1136
        %v1138 = vrot.slane %v280, 5
        %v1139 = vrot.slane %v1138, 4
        %v1140 = vrot.slane %v281, 5
        %v1141 = vsel %vm1116, %v1139, %v1140
        %v1142 = vrot.slane %v1140, 4
        %v1143 = vrot.slane %v282, 5
        %v1144 = vsel %vm1116, %v1142, %v1143
        %v1145 = vrot.slane %v283, 5
        %v1146 = vrot.slane %v1145, 4
        %v1147 = vrot.slane %v284, 5
        %v1148 = vsel %vm1116, %v1146, %v1147
        %v1149 = vrot.slane %v1147, 4
        %v1150 = vrot.slane %v285, 5
        %v1151 = vsel %vm1116, %v1149, %v1150
        %v1152 = vrot.slane %v286, 5
        %v1153 = vrot.slane %v1152, 4
        %v1154 = vrot.slane %v287, 5
        %v1155 = vsel %vm1116, %v1153, %v1154
        %v1156 = vrot.slane %v1154, 4
        %v1157 = vrot.slane %v288, 5
        %v1158 = vsel %vm1116, %v1156, %v1157
        %v1159 = vrot.slane %v289, 5
        %v1160 = vrot.slane %v1159, 4
        %v1161 = vrot.slane %v290, 5
        %v1162 = vsel %vm1116, %v1160, %v1161
        %v1163 = vrot.slane %v1161, 4
        %v1164 = vrot.slane %v291, 5
        %v1165 = vsel %vm1116, %v1163, %v1164
        %v1166 = vrot.slane %v292, 5
        %v1167 = vrot.slane %v1166, 4
        %v1168 = vrot.slane %v293, 5
        %v1169 = vsel %vm1116, %v1167, %v1168
        %v1170 = vrot.slane %v1168, 4
        %v1171 = vrot.slane %v294, 5
        %v1172 = vsel %vm1116, %v1170, %v1171
        %v1173 = vrot.slane %v295, 5
        %v1174 = vrot.slane %v1173, 4
        %v1175 = vrot.slane %v296, 5
        %v1176 = vsel %vm1116, %v1174, %v1175
        %v1177 = vrot.slane %v1175, 4
        %v1178 = vrot.slane %v297, 5
        %v1179 = vsel %vm1116, %v1177, %v1178
        %v1180 = vrot.slane %v298, 5
        %v1181 = vrot.slane %v1180, 4
        %v1182 = vrot.slane %v299, 5
        %v1183 = vsel %vm1116, %v1181, %v1182
        %v1184 = vrot.slane %v1182, 4
        %v1185 = vrot.slane %v300, 5
        %v1186 = vsel %vm1116, %v1184, %v1185
        %v1187 = vrot.slane %v301, 5
        %v1188 = vrot.slane %v1187, 4
        %v1189 = vrot.slane %v302, 5
        %v1190 = vsel %vm1116, %v1188, %v1189
        %v1191 = vrot.slane %v1189, 4
        %v1192 = vrot.slane %v303, 5
        %v1193 = vsel %vm1116, %v1191, %v1192
        %v1194 = vrot.slane %v304, 5
        %v1195 = vrot.slane %v1194, 4
        %v1196 = vrot.slane %v305, 5
        %v1197 = vsel %vm1116, %v1195, %v1196
        %v1198 = vrot.slane %v1196, 4
        %v1199 = vrot.slane %v306, 5
        %v1200 = vsel %vm1116, %v1198, %v1199
        %v1201 = vrot.slane %v307, 5
        %v1202 = vrot.slane %v1201, 4
        %v1203 = vrot.slane %v308, 5
        %v1204 = vsel %vm1116, %v1202, %v1203
        %v1205 = vrot.slane %v1203, 4
        %v1206 = vrot.slane %v309, 5
        %v1207 = vsel %vm1116, %v1205, %v1206
        %v1208 = vrot.slane %v310, 5
        %v1209 = vrot.slane %v1208, 4
        %v1210 = vrot.slane %v311, 5
        %v1211 = vsel %vm1116, %v1209, %v1210
        %v1212 = vrot.slane %v1210, 4
        %v1213 = vrot.slane %v312, 5
        %v1214 = vsel %vm1116, %v1212, %v1213
        %v1215 = vrot.slane %v313, 5
        %v1216 = vrot.slane %v1215, 4
        %v1217 = vrot.slane %v314, 5
        %v1218 = vsel %vm1116, %v1216, %v1217
        %v1219 = vrot.slane %v1217, 4
        %v1220 = vrot.slane %v315, 5
        %v1221 = vsel %vm1116, %v1219, %v1220
        %v1222 = vrot.slane %v316, 5
        %v1223 = vrot.slane %v1222, 4
        %v1224 = vrot.slane %v317, 5
        %v1225 = vsel %vm1116, %v1223, %v1224
        %v1226 = vrot.slane %v1224, 4
        %v1227 = vrot.slane %v318, 5
        %v1228 = vsel %vm1116, %v1226, %v1227
        %v1261 = vmax.bf16 %v1034, %v1120
        %v1262 = vmax.bf16 %v1035, %v1123
        %v1263 = vmax.bf16 %v1036, %v1127
        %v1264 = vmax.bf16 %v1037, %v1130
        %v1265 = vmax.bf16 %v1038, %v1134
        %v1266 = vmax.bf16 %v1039, %v1137
        %v1267 = vmax.bf16 %v1040, %v1141
        %v1268 = vmax.bf16 %v1041, %v1144
        %v1269 = vmax.bf16 %v1042, %v1148
        %v1270 = vmax.bf16 %v1043, %v1151
        %v1271 = vmax.bf16 %v1044, %v1155
        %v1272 = vmax.bf16 %v1045, %v1158
        %v1273 = vmax.bf16 %v1046, %v1162
        %v1274 = vmax.bf16 %v1047, %v1165
        %v1275 = vmax.bf16 %v1048, %v1169
        %v1276 = vmax.bf16 %v1049, %v1172
        %v1277 = vmax.bf16 %v1050, %v1176
        %v1278 = vmax.bf16 %v1051, %v1179
        %v1279 = vmax.bf16 %v1052, %v1183
        %v1280 = vmax.bf16 %v1053, %v1186
        %v1281 = vmax.bf16 %v1054, %v1190
        %v1282 = vmax.bf16 %v1055, %v1193
        %v1283 = vmax.bf16 %v1056, %v1197
        %v1284 = vmax.bf16 %v1057, %v1200
        %v1285 = vmax.bf16 %v1058, %v1204
        %v1286 = vmax.bf16 %v1059, %v1207
        %v1287 = vmax.bf16 %v1060, %v1211
        %v1288 = vmax.bf16 %v1061, %v1214
        %v1289 = vmax.bf16 %v1062, %v1218
        %v1290 = vmax.bf16 %v1063, %v1221
        %v1291 = vmax.bf16 %v1064, %v1225
        %v1292 = vmax.bf16 %v1065, %v1228
        %v1293 = vmax.bf16 %v1261, %v274
        %v1294 = vmax.bf16 %v1262, %v275
        %v1295 = vmax.bf16 %v1263, %v277
        %v1296 = vmax.bf16 %v1264, %v278
        %v1297 = vmax.bf16 %v1265, %v280
        %v1298 = vmax.bf16 %v1266, %v281
        %v1299 = vmax.bf16 %v1267, %v283
        %v1300 = vmax.bf16 %v1268, %v284
        %v1301 = vmax.bf16 %v1269, %v286
        %v1302 = vmax.bf16 %v1270, %v287
        %v1303 = vmax.bf16 %v1271, %v289
        %v1304 = vmax.bf16 %v1272, %v290
        %v1305 = vmax.bf16 %v1273, %v292
        %v1306 = vmax.bf16 %v1274, %v293
        %v1307 = vmax.bf16 %v1275, %v295
        %v1308 = vmax.bf16 %v1276, %v296
        %v1309 = vmax.bf16 %v1277, %v298
        %v1310 = vmax.bf16 %v1278, %v299
        %v1311 = vmax.bf16 %v1279, %v301
        %v1312 = vmax.bf16 %v1280, %v302
        %v1313 = vmax.bf16 %v1281, %v304
        %v1314 = vmax.bf16 %v1282, %v305
        %v1315 = vmax.bf16 %v1283, %v307
        %v1316 = vmax.bf16 %v1284, %v308
        %v1317 = vmax.bf16 %v1285, %v310
        %v1318 = vmax.bf16 %v1286, %v311
        %v1319 = vmax.bf16 %v1287, %v313
        %v1320 = vmax.bf16 %v1288, %v314
        %v1321 = vmax.bf16 %v1289, %v316
        %v1322 = vmax.bf16 %v1290, %v317
        %v1323 = vmax.bf16 %v1291, %v319
        %v1324 = vmax.bf16 %v1292, %v320
        %v1326 = vshrl.u32 %v319, 16
        %v1328 = vrot.slane %v1326, 4
        %v1329 = vshll.u32 %v319, 16
        %v1331 = vrot.slane %v1329, 5
        %v1332 = vor.u32 %v1328, %v1331
        %v1333 = vrot.slane %v1332, 4
        %v1335 = vshll.u32 %v320, 16
        %v1337 = vrot.slane %v1335, 5
        %v1338 = vsel %vm617, %v1333, %v1337
        %v1339 = vshrl.u32 %v320, 16
        %v1341 = vrot.slane %v1339, 4
        %v1342 = vor.u32 %v1341, %v1337
        %v1343 = vrot.slane %v1342, 4
        %v1345 = vshll.u32 %v321, 16
        %v1347 = vrot.slane %v1345, 5
        %v1348 = vsel %vm617, %v1343, %v1347
        %v1351 = vmax.bf16 %v1293, %v655
        %v1352 = vmax.bf16 %v1294, %v665
        %v1353 = vmax.bf16 %v1295, %v679
        %v1354 = vmax.bf16 %v1296, %v689
        %v1355 = vmax.bf16 %v1297, %v703
        %v1356 = vmax.bf16 %v1298, %v713
        %v1357 = vmax.bf16 %v1299, %v727
        %v1358 = vmax.bf16 %v1300, %v737
        %v1359 = vmax.bf16 %v1301, %v751
        %v1360 = vmax.bf16 %v1302, %v761
        %v1361 = vmax.bf16 %v1303, %v775
        %v1362 = vmax.bf16 %v1304, %v785
        %v1363 = vmax.bf16 %v1305, %v799
        %v1364 = vmax.bf16 %v1306, %v809
        %v1365 = vmax.bf16 %v1307, %v823
        %v1366 = vmax.bf16 %v1308, %v833
        %v1367 = vmax.bf16 %v1309, %v847
        %v1368 = vmax.bf16 %v1310, %v857
        %v1369 = vmax.bf16 %v1311, %v871
        %v1370 = vmax.bf16 %v1312, %v881
        %v1371 = vmax.bf16 %v1313, %v895
        %v1372 = vmax.bf16 %v1314, %v905
        %v1373 = vmax.bf16 %v1315, %v919
        %v1374 = vmax.bf16 %v1316, %v929
        %v1375 = vmax.bf16 %v1317, %v943
        %v1376 = vmax.bf16 %v1318, %v953
        %v1377 = vmax.bf16 %v1319, %v967
        %v1378 = vmax.bf16 %v1320, %v977
        %v1379 = vmax.bf16 %v1321, %v991
        %v1380 = vmax.bf16 %v1322, %v1001
        %v1381 = vmax.bf16 %v1323, %v1338
        %v1382 = vmax.bf16 %v1324, %v1348
        %v1386 = vrot.slane %v319, 5
        %v1387 = vrot.slane %v1386, 4
        %v1388 = vrot.slane %v320, 5
        %v1389 = vsel %vm1116, %v1387, %v1388
        %v1390 = vrot.slane %v1388, 4
        %v1391 = vrot.slane %v321, 5
        %v1392 = vsel %vm1116, %v1390, %v1391
        %v1395 = vmax.bf16 %v1351, %v1127
        %v1396 = vmax.bf16 %v1352, %v1130
        %v1397 = vmax.bf16 %v1353, %v1134
        %v1398 = vmax.bf16 %v1354, %v1137
        %v1399 = vmax.bf16 %v1355, %v1141
        %v1400 = vmax.bf16 %v1356, %v1144
        %v1401 = vmax.bf16 %v1357, %v1148
        %v1402 = vmax.bf16 %v1358, %v1151
        %v1403 = vmax.bf16 %v1359, %v1155
        %v1404 = vmax.bf16 %v1360, %v1158
        %v1405 = vmax.bf16 %v1361, %v1162
        %v1406 = vmax.bf16 %v1362, %v1165
        %v1407 = vmax.bf16 %v1363, %v1169
        %v1408 = vmax.bf16 %v1364, %v1172
        %v1409 = vmax.bf16 %v1365, %v1176
        %v1410 = vmax.bf16 %v1366, %v1179
        %v1411 = vmax.bf16 %v1367, %v1183
        %v1412 = vmax.bf16 %v1368, %v1186
        %v1413 = vmax.bf16 %v1369, %v1190
        %v1414 = vmax.bf16 %v1370, %v1193
        %v1415 = vmax.bf16 %v1371, %v1197
        %v1416 = vmax.bf16 %v1372, %v1200
        %v1417 = vmax.bf16 %v1373, %v1204
        %v1418 = vmax.bf16 %v1374, %v1207
        %v1419 = vmax.bf16 %v1375, %v1211
        %v1420 = vmax.bf16 %v1376, %v1214
        %v1421 = vmax.bf16 %v1377, %v1218
        %v1422 = vmax.bf16 %v1378, %v1221
        %v1423 = vmax.bf16 %v1379, %v1225
        %v1424 = vmax.bf16 %v1380, %v1228
        %v1425 = vmax.bf16 %v1381, %v1389
        %v1426 = vmax.bf16 %v1382, %v1392
        %v1427 = vmax.bf16 %v1395, %v277
        %v1428 = vmax.bf16 %v1396, %v278
        %v1429 = vmax.bf16 %v1397, %v280
        %v1430 = vmax.bf16 %v1398, %v281
        %v1431 = vmax.bf16 %v1399, %v283
        %v1432 = vmax.bf16 %v1400, %v284
        %v1433 = vmax.bf16 %v1401, %v286
        %v1434 = vmax.bf16 %v1402, %v287
        %v1435 = vmax.bf16 %v1403, %v289
        %v1436 = vmax.bf16 %v1404, %v290
        %v1437 = vmax.bf16 %v1405, %v292
        %v1438 = vmax.bf16 %v1406, %v293
        %v1439 = vmax.bf16 %v1407, %v295
        %v1440 = vmax.bf16 %v1408, %v296
        %v1441 = vmax.bf16 %v1409, %v298
        %v1442 = vmax.bf16 %v1410, %v299
        %v1443 = vmax.bf16 %v1411, %v301
        %v1444 = vmax.bf16 %v1412, %v302
        %v1445 = vmax.bf16 %v1413, %v304
        %v1446 = vmax.bf16 %v1414, %v305
        %v1447 = vmax.bf16 %v1415, %v307
        %v1448 = vmax.bf16 %v1416, %v308
        %v1449 = vmax.bf16 %v1417, %v310
        %v1450 = vmax.bf16 %v1418, %v311
        %v1451 = vmax.bf16 %v1419, %v313
        %v1452 = vmax.bf16 %v1420, %v314
        %v1453 = vmax.bf16 %v1421, %v316
        %v1454 = vmax.bf16 %v1422, %v317
        %v1455 = vmax.bf16 %v1423, %v319
        %v1456 = vmax.bf16 %v1424, %v320
        %v1457 = vmax.bf16 %v1425, %v322
        %v1458 = vmax.bf16 %v1426, %v323
        %v1460 = vshrl.u32 %v322, 16
        %v1462 = vrot.slane %v1460, 4
        %v1463 = vshll.u32 %v322, 16
        %v1465 = vrot.slane %v1463, 5
        %v1466 = vor.u32 %v1462, %v1465
        %v1467 = vrot.slane %v1466, 4
        %v1469 = vshll.u32 %v323, 16
        %v1471 = vrot.slane %v1469, 5
        %v1472 = vsel %vm617, %v1467, %v1471
        %v1473 = vshrl.u32 %v323, 16
        %v1475 = vrot.slane %v1473, 4
        %v1476 = vor.u32 %v1475, %v1471
        %v1477 = vrot.slane %v1476, 4
        %v1479 = vshll.u32 %v324, 16
        %v1481 = vrot.slane %v1479, 5
        %v1482 = vsel %vm617, %v1477, %v1481
        %v1485 = vmax.bf16 %v1427, %v679
        %v1486 = vmax.bf16 %v1428, %v689
        %v1487 = vmax.bf16 %v1429, %v703
        %v1488 = vmax.bf16 %v1430, %v713
        %v1489 = vmax.bf16 %v1431, %v727
        %v1490 = vmax.bf16 %v1432, %v737
        %v1491 = vmax.bf16 %v1433, %v751
        %v1492 = vmax.bf16 %v1434, %v761
        %v1493 = vmax.bf16 %v1435, %v775
        %v1494 = vmax.bf16 %v1436, %v785
        %v1495 = vmax.bf16 %v1437, %v799
        %v1496 = vmax.bf16 %v1438, %v809
        %v1497 = vmax.bf16 %v1439, %v823
        %v1498 = vmax.bf16 %v1440, %v833
        %v1499 = vmax.bf16 %v1441, %v847
        %v1500 = vmax.bf16 %v1442, %v857
        %v1501 = vmax.bf16 %v1443, %v871
        %v1502 = vmax.bf16 %v1444, %v881
        %v1503 = vmax.bf16 %v1445, %v895
        %v1504 = vmax.bf16 %v1446, %v905
        %v1505 = vmax.bf16 %v1447, %v919
        %v1506 = vmax.bf16 %v1448, %v929
        %v1507 = vmax.bf16 %v1449, %v943
        %v1508 = vmax.bf16 %v1450, %v953
        %v1509 = vmax.bf16 %v1451, %v967
        %v1510 = vmax.bf16 %v1452, %v977
        %v1511 = vmax.bf16 %v1453, %v991
        %v1512 = vmax.bf16 %v1454, %v1001
        %v1513 = vmax.bf16 %v1455, %v1338
        %v1514 = vmax.bf16 %v1456, %v1348
        %v1515 = vmax.bf16 %v1457, %v1472
        %v1516 = vmax.bf16 %v1458, %v1482
        %v1520 = vrot.slane %v322, 5
        %v1521 = vrot.slane %v1520, 4
        %v1522 = vrot.slane %v323, 5
        %v1523 = vsel %vm1116, %v1521, %v1522
        %v1524 = vrot.slane %v1522, 4
        %v1525 = vrot.slane %v324, 5
        %v1526 = vsel %vm1116, %v1524, %v1525
        %v1529 = vmax.bf16 %v1485, %v1134
        %v1530 = vmax.bf16 %v1486, %v1137
        %v1531 = vmax.bf16 %v1487, %v1141
        %v1532 = vmax.bf16 %v1488, %v1144
        %v1533 = vmax.bf16 %v1489, %v1148
        %v1534 = vmax.bf16 %v1490, %v1151
        %v1535 = vmax.bf16 %v1491, %v1155
        %v1536 = vmax.bf16 %v1492, %v1158
        %v1537 = vmax.bf16 %v1493, %v1162
        %v1538 = vmax.bf16 %v1494, %v1165
        %v1539 = vmax.bf16 %v1495, %v1169
        %v1540 = vmax.bf16 %v1496, %v1172
        %v1541 = vmax.bf16 %v1497, %v1176
        %v1542 = vmax.bf16 %v1498, %v1179
        %v1543 = vmax.bf16 %v1499, %v1183
        %v1544 = vmax.bf16 %v1500, %v1186
        %v1545 = vmax.bf16 %v1501, %v1190
        %v1546 = vmax.bf16 %v1502, %v1193
        %v1547 = vmax.bf16 %v1503, %v1197
        %v1548 = vmax.bf16 %v1504, %v1200
        %v1549 = vmax.bf16 %v1505, %v1204
        %v1550 = vmax.bf16 %v1506, %v1207
        %v1551 = vmax.bf16 %v1507, %v1211
        %v1552 = vmax.bf16 %v1508, %v1214
        %v1553 = vmax.bf16 %v1509, %v1218
        %v1554 = vmax.bf16 %v1510, %v1221
        %v1555 = vmax.bf16 %v1511, %v1225
        %v1556 = vmax.bf16 %v1512, %v1228
        %v1557 = vmax.bf16 %v1513, %v1389
        %v1558 = vmax.bf16 %v1514, %v1392
        %v1559 = vmax.bf16 %v1515, %v1523
        %v1560 = vmax.bf16 %v1516, %v1526
        %v1561 = vunpack.c.l.bf16 %v1529
        %v1562 = vunpack.c.l.bf16 %v1530
        %v1563 = vunpack.c.l.bf16 %v1531
        %v1564 = vunpack.c.l.bf16 %v1532
        %v1565 = vunpack.c.l.bf16 %v1533
        %v1566 = vunpack.c.l.bf16 %v1534
        %v1567 = vunpack.c.l.bf16 %v1535
        %v1568 = vunpack.c.l.bf16 %v1536
        %v1569 = vunpack.c.l.bf16 %v1537
        %v1570 = vunpack.c.l.bf16 %v1538
        %v1571 = vunpack.c.l.bf16 %v1539
        %v1572 = vunpack.c.l.bf16 %v1540
        %v1573 = vunpack.c.l.bf16 %v1541
        %v1574 = vunpack.c.l.bf16 %v1542
        %v1575 = vunpack.c.l.bf16 %v1543
        %v1576 = vunpack.c.l.bf16 %v1544
        %v1577 = vunpack.c.l.bf16 %v1545
        %v1578 = vunpack.c.l.bf16 %v1546
        %v1579 = vunpack.c.l.bf16 %v1547
        %v1580 = vunpack.c.l.bf16 %v1548
        %v1581 = vunpack.c.l.bf16 %v1549
        %v1582 = vunpack.c.l.bf16 %v1550
        %v1583 = vunpack.c.l.bf16 %v1551
        %v1584 = vunpack.c.l.bf16 %v1552
        %v1585 = vunpack.c.l.bf16 %v1553
        %v1586 = vunpack.c.l.bf16 %v1554
        %v1587 = vunpack.c.l.bf16 %v1555
        %v1588 = vunpack.c.l.bf16 %v1556
        %v1589 = vunpack.c.l.bf16 %v1557
        %v1590 = vunpack.c.l.bf16 %v1558
        %v1591 = vunpack.c.l.bf16 %v1559
        %v1592 = vunpack.c.l.bf16 %v1560
        %1593 = vrot.lane.b32.xlu0 %v424, 20
        %v1594 = vpop.permute.xlu0 %1593
        %1595 = vrot.lane.b32.xlu0 %v426, 20
        %v1596 = vpop.permute.xlu0 %1595
        %1597 = vrot.lane.b32.xlu0 %v429, 20
        %v1598 = vpop.permute.xlu0 %1597
        %1599 = vrot.lane.b32.xlu0 %v431, 20
        %v1600 = vpop.permute.xlu0 %1599
        %1601 = vrot.lane.b32.xlu0 %v434, 20
        %v1602 = vpop.permute.xlu0 %1601
        %1603 = vrot.lane.b32.xlu0 %v436, 20
        %v1604 = vpop.permute.xlu0 %1603
        %1605 = vrot.lane.b32.xlu0 %v439, 20
        %v1606 = vpop.permute.xlu0 %1605
        %1607 = vrot.lane.b32.xlu0 %v441, 20
        %v1608 = vpop.permute.xlu0 %1607
        %1609 = vrot.lane.b32.xlu0 %v444, 20
        %v1610 = vpop.permute.xlu0 %1609
        %1611 = vrot.lane.b32.xlu0 %v446, 20
        %v1612 = vpop.permute.xlu0 %1611
        %1613 = vrot.lane.b32.xlu0 %v449, 20
        %v1614 = vpop.permute.xlu0 %1613
        %1615 = vrot.lane.b32.xlu0 %v451, 20
        %v1616 = vpop.permute.xlu0 %1615
        %1617 = vrot.lane.b32.xlu0 %v454, 20
        %v1618 = vpop.permute.xlu0 %1617
        %1619 = vrot.lane.b32.xlu0 %v456, 20
        %v1620 = vpop.permute.xlu0 %1619
        %1621 = vrot.lane.b32.xlu0 %v459, 20
        %v1622 = vpop.permute.xlu0 %1621
        %1623 = vrot.lane.b32.xlu0 %v461, 20
        %v1624 = vpop.permute.xlu0 %1623
        %1625 = vrot.lane.b32.xlu0 %v464, 20
        %v1626 = vpop.permute.xlu0 %1625
        %1627 = vrot.lane.b32.xlu0 %v466, 20
        %v1628 = vpop.permute.xlu0 %1627
        %1629 = vrot.lane.b32.xlu0 %v469, 20
        %v1630 = vpop.permute.xlu0 %1629
        %1631 = vrot.lane.b32.xlu0 %v471, 20
        %v1632 = vpop.permute.xlu0 %1631
        %1633 = vrot.lane.b32.xlu0 %v474, 20
        %v1634 = vpop.permute.xlu0 %1633
        %1635 = vrot.lane.b32.xlu0 %v476, 20
        %v1636 = vpop.permute.xlu0 %1635
        %1637 = vrot.lane.b32.xlu0 %v479, 20
        %v1638 = vpop.permute.xlu0 %1637
        %1639 = vrot.lane.b32.xlu0 %v481, 20
        %v1640 = vpop.permute.xlu0 %1639
        %1641 = vrot.lane.b32.xlu0 %v484, 20
        %v1642 = vpop.permute.xlu0 %1641
        %1643 = vrot.lane.b32.xlu0 %v486, 20
        %v1644 = vpop.permute.xlu0 %1643
        %1645 = vrot.lane.b32.xlu0 %v489, 20
        %v1646 = vpop.permute.xlu0 %1645
        %1647 = vrot.lane.b32.xlu0 %v491, 20
        %v1648 = vpop.permute.xlu0 %1647
        %1649 = vrot.lane.b32.xlu0 %v494, 20
        %v1650 = vpop.permute.xlu0 %1649
        %1651 = vrot.lane.b32.xlu0 %v496, 20
        %v1652 = vpop.permute.xlu0 %1651
        %1653 = vrot.lane.b32.xlu0 %v499, 20
        %v1654 = vpop.permute.xlu0 %1653
        %1655 = vrot.lane.b32.xlu0 %v501, 20
        %v1656 = vpop.permute.xlu0 %1655
        %1689 = vrot.lane.b32.xlu0 %v505, 40
        %v1690 = vpop.permute.xlu0 %1689
        %1691 = vrot.lane.b32.xlu0 %v507, 40
        %v1692 = vpop.permute.xlu0 %1691
        %1693 = vrot.lane.b32.xlu0 %v510, 40
        %v1694 = vpop.permute.xlu0 %1693
        %1695 = vrot.lane.b32.xlu0 %v512, 40
        %v1696 = vpop.permute.xlu0 %1695
        %1697 = vrot.lane.b32.xlu0 %v515, 40
        %v1698 = vpop.permute.xlu0 %1697
        %1699 = vrot.lane.b32.xlu0 %v517, 40
        %v1700 = vpop.permute.xlu0 %1699
        %1701 = vrot.lane.b32.xlu0 %v520, 40
        %v1702 = vpop.permute.xlu0 %1701
        %1703 = vrot.lane.b32.xlu0 %v522, 40
        %v1704 = vpop.permute.xlu0 %1703
        %1705 = vrot.lane.b32.xlu0 %v525, 40
        %v1706 = vpop.permute.xlu0 %1705
        %1707 = vrot.lane.b32.xlu0 %v527, 40
        %v1708 = vpop.permute.xlu0 %1707
        %1709 = vrot.lane.b32.xlu0 %v530, 40
        %v1710 = vpop.permute.xlu0 %1709
        %1711 = vrot.lane.b32.xlu0 %v532, 40
        %v1712 = vpop.permute.xlu0 %1711
        %1713 = vrot.lane.b32.xlu0 %v535, 40
        %v1714 = vpop.permute.xlu0 %1713
        %1715 = vrot.lane.b32.xlu0 %v537, 40
        %v1716 = vpop.permute.xlu0 %1715
        %1717 = vrot.lane.b32.xlu0 %v540, 40
        %v1718 = vpop.permute.xlu0 %1717
        %1719 = vrot.lane.b32.xlu0 %v542, 40
        %v1720 = vpop.permute.xlu0 %1719
        %1721 = vrot.lane.b32.xlu0 %v545, 40
        %v1722 = vpop.permute.xlu0 %1721
        %1723 = vrot.lane.b32.xlu0 %v547, 40
        %v1724 = vpop.permute.xlu0 %1723
        %1725 = vrot.lane.b32.xlu0 %v550, 40
        %v1726 = vpop.permute.xlu0 %1725
        %1727 = vrot.lane.b32.xlu0 %v552, 40
        %v1728 = vpop.permute.xlu0 %1727
        %1729 = vrot.lane.b32.xlu0 %v555, 40
        %v1730 = vpop.permute.xlu0 %1729
        %1731 = vrot.lane.b32.xlu0 %v557, 40
        %v1732 = vpop.permute.xlu0 %1731
        %1733 = vrot.lane.b32.xlu0 %v560, 40
        %v1734 = vpop.permute.xlu0 %1733
        %1735 = vrot.lane.b32.xlu0 %v562, 40
        %v1736 = vpop.permute.xlu0 %1735
        %1737 = vrot.lane.b32.xlu0 %v565, 40
        %v1738 = vpop.permute.xlu0 %1737
        %1739 = vrot.lane.b32.xlu0 %v567, 40
        %v1740 = vpop.permute.xlu0 %1739
        %1741 = vrot.lane.b32.xlu0 %v570, 40
        %v1742 = vpop.permute.xlu0 %1741
        %1743 = vrot.lane.b32.xlu0 %v572, 40
        %v1744 = vpop.permute.xlu0 %1743
        %1745 = vrot.lane.b32.xlu0 %v575, 40
        %v1746 = vpop.permute.xlu0 %1745
        %1747 = vrot.lane.b32.xlu0 %v577, 40
        %v1748 = vpop.permute.xlu0 %1747
        %1749 = vrot.lane.b32.xlu0 %v580, 40
        %v1750 = vpop.permute.xlu0 %1749
        %1751 = vrot.lane.b32.xlu0 %v582, 40
        %v1752 = vpop.permute.xlu0 %1751
        %1785 = vrot.lane.b32.xlu0 %v327, 60
        %v1786 = vpop.permute.xlu0 %1785
        %1787 = vrot.lane.b32.xlu0 %v328, 60
        %v1788 = vpop.permute.xlu0 %1787
        %1789 = vrot.lane.b32.xlu0 %v329, 60
        %v1790 = vpop.permute.xlu0 %1789
        %1791 = vrot.lane.b32.xlu0 %v330, 60
        %v1792 = vpop.permute.xlu0 %1791
        %1793 = vrot.lane.b32.xlu0 %v331, 60
        %v1794 = vpop.permute.xlu0 %1793
        %1795 = vrot.lane.b32.xlu0 %v332, 60
        %v1796 = vpop.permute.xlu0 %1795
        %1797 = vrot.lane.b32.xlu0 %v333, 60
        %v1798 = vpop.permute.xlu0 %1797
        %1799 = vrot.lane.b32.xlu0 %v334, 60
        %v1800 = vpop.permute.xlu0 %1799
        %1801 = vrot.lane.b32.xlu0 %v335, 60
        %v1802 = vpop.permute.xlu0 %1801
        %1803 = vrot.lane.b32.xlu0 %v336, 60
        %v1804 = vpop.permute.xlu0 %1803
        %1805 = vrot.lane.b32.xlu0 %v337, 60
        %v1806 = vpop.permute.xlu0 %1805
        %1807 = vrot.lane.b32.xlu0 %v338, 60
        %v1808 = vpop.permute.xlu0 %1807
        %1809 = vrot.lane.b32.xlu0 %v339, 60
        %v1810 = vpop.permute.xlu0 %1809
        %1811 = vrot.lane.b32.xlu0 %v340, 60
        %v1812 = vpop.permute.xlu0 %1811
        %1813 = vrot.lane.b32.xlu0 %v341, 60
        %v1814 = vpop.permute.xlu0 %1813
        %1815 = vrot.lane.b32.xlu0 %v342, 60
        %v1816 = vpop.permute.xlu0 %1815
        %1817 = vrot.lane.b32.xlu0 %v343, 60
        %v1818 = vpop.permute.xlu0 %1817
        %1819 = vrot.lane.b32.xlu0 %v344, 60
        %v1820 = vpop.permute.xlu0 %1819
        %1821 = vrot.lane.b32.xlu0 %v345, 60
        %v1822 = vpop.permute.xlu0 %1821
        %1823 = vrot.lane.b32.xlu0 %v346, 60
        %v1824 = vpop.permute.xlu0 %1823
        %1825 = vrot.lane.b32.xlu0 %v347, 60
        %v1826 = vpop.permute.xlu0 %1825
        %1827 = vrot.lane.b32.xlu0 %v348, 60
        %v1828 = vpop.permute.xlu0 %1827
        %1829 = vrot.lane.b32.xlu0 %v349, 60
        %v1830 = vpop.permute.xlu0 %1829
        %1831 = vrot.lane.b32.xlu0 %v350, 60
        %v1832 = vpop.permute.xlu0 %1831
        %1833 = vrot.lane.b32.xlu0 %v351, 60
        %v1834 = vpop.permute.xlu0 %1833
        %1835 = vrot.lane.b32.xlu0 %v352, 60
        %v1836 = vpop.permute.xlu0 %1835
        %1837 = vrot.lane.b32.xlu0 %v353, 60
        %v1838 = vpop.permute.xlu0 %1837
        %1839 = vrot.lane.b32.xlu0 %v354, 60
        %v1840 = vpop.permute.xlu0 %1839
        %1841 = vrot.lane.b32.xlu0 %v355, 60
        %v1842 = vpop.permute.xlu0 %1841
        %1843 = vrot.lane.b32.xlu0 %v356, 60
        %v1844 = vpop.permute.xlu0 %1843
        %1845 = vrot.lane.b32.xlu0 %v583, 60
        %v1846 = vpop.permute.xlu0 %1845
        %1847 = vrot.lane.b32.xlu0 %v584, 60
        %v1848 = vpop.permute.xlu0 %1847
        %1881 = vrot.lane.b32.xlu0 %v429, 80
        %v1882 = vpop.permute.xlu0 %1881
        %1883 = vrot.lane.b32.xlu0 %v431, 80
        %v1884 = vpop.permute.xlu0 %1883
        %1885 = vrot.lane.b32.xlu0 %v434, 80
        %v1886 = vpop.permute.xlu0 %1885
        %1887 = vrot.lane.b32.xlu0 %v436, 80
        %v1888 = vpop.permute.xlu0 %1887
        %1889 = vrot.lane.b32.xlu0 %v439, 80
        %v1890 = vpop.permute.xlu0 %1889
        %1891 = vrot.lane.b32.xlu0 %v441, 80
        %v1892 = vpop.permute.xlu0 %1891
        %1893 = vrot.lane.b32.xlu0 %v444, 80
        %v1894 = vpop.permute.xlu0 %1893
        %1895 = vrot.lane.b32.xlu0 %v446, 80
        %v1896 = vpop.permute.xlu0 %1895
        %1897 = vrot.lane.b32.xlu0 %v449, 80
        %v1898 = vpop.permute.xlu0 %1897
        %1899 = vrot.lane.b32.xlu0 %v451, 80
        %v1900 = vpop.permute.xlu0 %1899
        %1901 = vrot.lane.b32.xlu0 %v454, 80
        %v1902 = vpop.permute.xlu0 %1901
        %1903 = vrot.lane.b32.xlu0 %v456, 80
        %v1904 = vpop.permute.xlu0 %1903
        %1905 = vrot.lane.b32.xlu0 %v459, 80
        %v1906 = vpop.permute.xlu0 %1905
        %1907 = vrot.lane.b32.xlu0 %v461, 80
        %v1908 = vpop.permute.xlu0 %1907
        %1909 = vrot.lane.b32.xlu0 %v464, 80
        %v1910 = vpop.permute.xlu0 %1909
        %1911 = vrot.lane.b32.xlu0 %v466, 80
        %v1912 = vpop.permute.xlu0 %1911
        %1913 = vrot.lane.b32.xlu0 %v469, 80
        %v1914 = vpop.permute.xlu0 %1913
        %1915 = vrot.lane.b32.xlu0 %v471, 80
        %v1916 = vpop.permute.xlu0 %1915
        %1917 = vrot.lane.b32.xlu0 %v474, 80
        %v1918 = vpop.permute.xlu0 %1917
        %1919 = vrot.lane.b32.xlu0 %v476, 80
        %v1920 = vpop.permute.xlu0 %1919
        %1921 = vrot.lane.b32.xlu0 %v479, 80
        %v1922 = vpop.permute.xlu0 %1921
        %1923 = vrot.lane.b32.xlu0 %v481, 80
        %v1924 = vpop.permute.xlu0 %1923
        %1925 = vrot.lane.b32.xlu0 %v484, 80
        %v1926 = vpop.permute.xlu0 %1925
        %1927 = vrot.lane.b32.xlu0 %v486, 80
        %v1928 = vpop.permute.xlu0 %1927
        %1929 = vrot.lane.b32.xlu0 %v489, 80
        %v1930 = vpop.permute.xlu0 %1929
        %1931 = vrot.lane.b32.xlu0 %v491, 80
        %v1932 = vpop.permute.xlu0 %1931
        %1933 = vrot.lane.b32.xlu0 %v494, 80
        %v1934 = vpop.permute.xlu0 %1933
        %1935 = vrot.lane.b32.xlu0 %v496, 80
        %v1936 = vpop.permute.xlu0 %1935
        %1937 = vrot.lane.b32.xlu0 %v499, 80
        %v1938 = vpop.permute.xlu0 %1937
        %1939 = vrot.lane.b32.xlu0 %v501, 80
        %v1940 = vpop.permute.xlu0 %1939
        %1941 = vrot.lane.b32.xlu0 %v591, 80
        %v1942 = vpop.permute.xlu0 %1941
        %1943 = vrot.lane.b32.xlu0 %v593, 80
        %v1944 = vpop.permute.xlu0 %1943
        %1977 = vrot.lane.b32.xlu0 %v510, 100
        %v1978 = vpop.permute.xlu0 %1977
        %1979 = vrot.lane.b32.xlu0 %v512, 100
        %v1980 = vpop.permute.xlu0 %1979
        %1981 = vrot.lane.b32.xlu0 %v515, 100
        %v1982 = vpop.permute.xlu0 %1981
        %1983 = vrot.lane.b32.xlu0 %v517, 100
        %v1984 = vpop.permute.xlu0 %1983
        %1985 = vrot.lane.b32.xlu0 %v520, 100
        %v1986 = vpop.permute.xlu0 %1985
        %1987 = vrot.lane.b32.xlu0 %v522, 100
        %v1988 = vpop.permute.xlu0 %1987
        %1989 = vrot.lane.b32.xlu0 %v525, 100
        %v1990 = vpop.permute.xlu0 %1989
        %1991 = vrot.lane.b32.xlu0 %v527, 100
        %v1992 = vpop.permute.xlu0 %1991
        %1993 = vrot.lane.b32.xlu0 %v530, 100
        %v1994 = vpop.permute.xlu0 %1993
        %1995 = vrot.lane.b32.xlu0 %v532, 100
        %v1996 = vpop.permute.xlu0 %1995
        %1997 = vrot.lane.b32.xlu0 %v535, 100
        %v1998 = vpop.permute.xlu0 %1997
        %1999 = vrot.lane.b32.xlu0 %v537, 100
        %v2000 = vpop.permute.xlu0 %1999
        %2001 = vrot.lane.b32.xlu0 %v540, 100
        %v2002 = vpop.permute.xlu0 %2001
        %2003 = vrot.lane.b32.xlu0 %v542, 100
        %v2004 = vpop.permute.xlu0 %2003
        %2005 = vrot.lane.b32.xlu0 %v545, 100
        %v2006 = vpop.permute.xlu0 %2005
        %2007 = vrot.lane.b32.xlu0 %v547, 100
        %v2008 = vpop.permute.xlu0 %2007
        %2009 = vrot.lane.b32.xlu0 %v550, 100
        %v2010 = vpop.permute.xlu0 %2009
        %2011 = vrot.lane.b32.xlu0 %v552, 100
        %v2012 = vpop.permute.xlu0 %2011
        %2013 = vrot.lane.b32.xlu0 %v555, 100
        %v2014 = vpop.permute.xlu0 %2013
        %2015 = vrot.lane.b32.xlu0 %v557, 100
        %v2016 = vpop.permute.xlu0 %2015
        %2017 = vrot.lane.b32.xlu0 %v560, 100
        %v2018 = vpop.permute.xlu0 %2017
        %2019 = vrot.lane.b32.xlu0 %v562, 100
        %v2020 = vpop.permute.xlu0 %2019
        %2021 = vrot.lane.b32.xlu0 %v565, 100
        %v2022 = vpop.permute.xlu0 %2021
        %2023 = vrot.lane.b32.xlu0 %v567, 100
        %v2024 = vpop.permute.xlu0 %2023
        %2025 = vrot.lane.b32.xlu0 %v570, 100
        %v2026 = vpop.permute.xlu0 %2025
        %2027 = vrot.lane.b32.xlu0 %v572, 100
        %v2028 = vpop.permute.xlu0 %2027
        %2029 = vrot.lane.b32.xlu0 %v575, 100
        %v2030 = vpop.permute.xlu0 %2029
        %2031 = vrot.lane.b32.xlu0 %v577, 100
        %v2032 = vpop.permute.xlu0 %2031
        %2033 = vrot.lane.b32.xlu0 %v580, 100
        %v2034 = vpop.permute.xlu0 %2033
        %2035 = vrot.lane.b32.xlu0 %v582, 100
        %v2036 = vpop.permute.xlu0 %2035
        %2037 = vrot.lane.b32.xlu0 %v596, 100
        %v2038 = vpop.permute.xlu0 %2037
        %2039 = vrot.lane.b32.xlu0 %v598, 100
        %v2040 = vpop.permute.xlu0 %2039
        %2073 = vrot.lane.b32.xlu0 %v329, 120
        %v2074 = vpop.permute.xlu0 %2073
        %2075 = vrot.lane.b32.xlu0 %v330, 120
        %v2076 = vpop.permute.xlu0 %2075
        %2077 = vrot.lane.b32.xlu0 %v331, 120
        %v2078 = vpop.permute.xlu0 %2077
        %2079 = vrot.lane.b32.xlu0 %v332, 120
        %v2080 = vpop.permute.xlu0 %2079
        %2081 = vrot.lane.b32.xlu0 %v333, 120
        %v2082 = vpop.permute.xlu0 %2081
        %2083 = vrot.lane.b32.xlu0 %v334, 120
        %v2084 = vpop.permute.xlu0 %2083
        %2085 = vrot.lane.b32.xlu0 %v335, 120
        %v2086 = vpop.permute.xlu0 %2085
        %2087 = vrot.lane.b32.xlu0 %v336, 120
        %v2088 = vpop.permute.xlu0 %2087
        %2089 = vrot.lane.b32.xlu0 %v337, 120
        %v2090 = vpop.permute.xlu0 %2089
        %2091 = vrot.lane.b32.xlu0 %v338, 120
        %v2092 = vpop.permute.xlu0 %2091
        %2093 = vrot.lane.b32.xlu0 %v339, 120
        %v2094 = vpop.permute.xlu0 %2093
        %2095 = vrot.lane.b32.xlu0 %v340, 120
        %v2096 = vpop.permute.xlu0 %2095
        %2097 = vrot.lane.b32.xlu0 %v341, 120
        %v2098 = vpop.permute.xlu0 %2097
        %2099 = vrot.lane.b32.xlu0 %v342, 120
        %v2100 = vpop.permute.xlu0 %2099
        %2101 = vrot.lane.b32.xlu0 %v343, 120
        %v2102 = vpop.permute.xlu0 %2101
        %2103 = vrot.lane.b32.xlu0 %v344, 120
        %v2104 = vpop.permute.xlu0 %2103
        %2105 = vrot.lane.b32.xlu0 %v345, 120
        %v2106 = vpop.permute.xlu0 %2105
        %2107 = vrot.lane.b32.xlu0 %v346, 120
        %v2108 = vpop.permute.xlu0 %2107
        %2109 = vrot.lane.b32.xlu0 %v347, 120
        %v2110 = vpop.permute.xlu0 %2109
        %2111 = vrot.lane.b32.xlu0 %v348, 120
        %v2112 = vpop.permute.xlu0 %2111
        %2113 = vrot.lane.b32.xlu0 %v349, 120
        %v2114 = vpop.permute.xlu0 %2113
        %2115 = vrot.lane.b32.xlu0 %v350, 120
        %v2116 = vpop.permute.xlu0 %2115
        %2117 = vrot.lane.b32.xlu0 %v351, 120
        %v2118 = vpop.permute.xlu0 %2117
        %2119 = vrot.lane.b32.xlu0 %v352, 120
        %v2120 = vpop.permute.xlu0 %2119
        %2121 = vrot.lane.b32.xlu0 %v353, 120
        %v2122 = vpop.permute.xlu0 %2121
        %2123 = vrot.lane.b32.xlu0 %v354, 120
        %v2124 = vpop.permute.xlu0 %2123
        %2125 = vrot.lane.b32.xlu0 %v355, 120
        %v2126 = vpop.permute.xlu0 %2125
        %2127 = vrot.lane.b32.xlu0 %v356, 120
        %v2128 = vpop.permute.xlu0 %2127
        %2129 = vrot.lane.b32.xlu0 %v583, 120
        %v2130 = vpop.permute.xlu0 %2129
        %2131 = vrot.lane.b32.xlu0 %v584, 120
        %v2132 = vpop.permute.xlu0 %2131
        %2133 = vrot.lane.b32.xlu0 %v599, 120
        %v2134 = vpop.permute.xlu0 %2133
        %2135 = vrot.lane.b32.xlu0 %v600, 120
        %v2136 = vpop.permute.xlu0 %2135
        %2169 = vrot.lane.b32.xlu0 %v434, 12
        %v2170 = vpop.permute.xlu0 %2169
        %2171 = vrot.lane.b32.xlu0 %v436, 12
        %v2172 = vpop.permute.xlu0 %2171
        %2173 = vrot.lane.b32.xlu0 %v439, 12
        %v2174 = vpop.permute.xlu0 %2173
        %2175 = vrot.lane.b32.xlu0 %v441, 12
        %v2176 = vpop.permute.xlu0 %2175
        %2177 = vrot.lane.b32.xlu0 %v444, 12
        %v2178 = vpop.permute.xlu0 %2177
        %2179 = vrot.lane.b32.xlu0 %v446, 12
        %v2180 = vpop.permute.xlu0 %2179
        %2181 = vrot.lane.b32.xlu0 %v449, 12
        %v2182 = vpop.permute.xlu0 %2181
        %2183 = vrot.lane.b32.xlu0 %v451, 12
        %v2184 = vpop.permute.xlu0 %2183
        %2185 = vrot.lane.b32.xlu0 %v454, 12
        %v2186 = vpop.permute.xlu0 %2185
        %2187 = vrot.lane.b32.xlu0 %v456, 12
        %v2188 = vpop.permute.xlu0 %2187
        %2189 = vrot.lane.b32.xlu0 %v459, 12
        %v2190 = vpop.permute.xlu0 %2189
        %2191 = vrot.lane.b32.xlu0 %v461, 12
        %v2192 = vpop.permute.xlu0 %2191
        %2193 = vrot.lane.b32.xlu0 %v464, 12
        %v2194 = vpop.permute.xlu0 %2193
        %2195 = vrot.lane.b32.xlu0 %v466, 12
        %v2196 = vpop.permute.xlu0 %2195
        %2197 = vrot.lane.b32.xlu0 %v469, 12
        %v2198 = vpop.permute.xlu0 %2197
        %2199 = vrot.lane.b32.xlu0 %v471, 12
        %v2200 = vpop.permute.xlu0 %2199
        %2201 = vrot.lane.b32.xlu0 %v474, 12
        %v2202 = vpop.permute.xlu0 %2201
        %2203 = vrot.lane.b32.xlu0 %v476, 12
        %v2204 = vpop.permute.xlu0 %2203
        %2205 = vrot.lane.b32.xlu0 %v479, 12
        %v2206 = vpop.permute.xlu0 %2205
        %2207 = vrot.lane.b32.xlu0 %v481, 12
        %v2208 = vpop.permute.xlu0 %2207
        %2209 = vrot.lane.b32.xlu0 %v484, 12
        %v2210 = vpop.permute.xlu0 %2209
        %2211 = vrot.lane.b32.xlu0 %v486, 12
        %v2212 = vpop.permute.xlu0 %2211
        %2213 = vrot.lane.b32.xlu0 %v489, 12
        %v2214 = vpop.permute.xlu0 %2213
        %2215 = vrot.lane.b32.xlu0 %v491, 12
        %v2216 = vpop.permute.xlu0 %2215
        %2217 = vrot.lane.b32.xlu0 %v494, 12
        %v2218 = vpop.permute.xlu0 %2217
        %2219 = vrot.lane.b32.xlu0 %v496, 12
        %v2220 = vpop.permute.xlu0 %2219
        %2221 = vrot.lane.b32.xlu0 %v499, 12
        %v2222 = vpop.permute.xlu0 %2221
        %2223 = vrot.lane.b32.xlu0 %v501, 12
        %v2224 = vpop.permute.xlu0 %2223
        %2225 = vrot.lane.b32.xlu0 %v591, 12
        %v2226 = vpop.permute.xlu0 %2225
        %2227 = vrot.lane.b32.xlu0 %v593, 12
        %v2228 = vpop.permute.xlu0 %2227
        %2229 = vrot.lane.b32.xlu0 %v607, 12
        %v2230 = vpop.permute.xlu0 %2229
        %2231 = vrot.lane.b32.xlu0 %v609, 12
        %v2232 = vpop.permute.xlu0 %2231
        %2265 = vrot.lane.b32.xlu0 %v515, 32
        %v2266 = vpop.permute.xlu0 %2265
        %2267 = vrot.lane.b32.xlu0 %v517, 32
        %v2268 = vpop.permute.xlu0 %2267
        %2269 = vrot.lane.b32.xlu0 %v520, 32
        %v2270 = vpop.permute.xlu0 %2269
        %2271 = vrot.lane.b32.xlu0 %v522, 32
        %v2272 = vpop.permute.xlu0 %2271
        %2273 = vrot.lane.b32.xlu0 %v525, 32
        %v2274 = vpop.permute.xlu0 %2273
        %2275 = vrot.lane.b32.xlu0 %v527, 32
        %v2276 = vpop.permute.xlu0 %2275
        %2277 = vrot.lane.b32.xlu0 %v530, 32
        %v2278 = vpop.permute.xlu0 %2277
        %2279 = vrot.lane.b32.xlu0 %v532, 32
        %v2280 = vpop.permute.xlu0 %2279
        %2281 = vrot.lane.b32.xlu0 %v535, 32
        %v2282 = vpop.permute.xlu0 %2281
        %2283 = vrot.lane.b32.xlu0 %v537, 32
        %v2284 = vpop.permute.xlu0 %2283
        %2285 = vrot.lane.b32.xlu0 %v540, 32
        %v2286 = vpop.permute.xlu0 %2285
        %2287 = vrot.lane.b32.xlu0 %v542, 32
        %v2288 = vpop.permute.xlu0 %2287
        %2289 = vrot.lane.b32.xlu0 %v545, 32
        %v2290 = vpop.permute.xlu0 %2289
        %2291 = vrot.lane.b32.xlu0 %v547, 32
        %v2292 = vpop.permute.xlu0 %2291
        %2293 = vrot.lane.b32.xlu0 %v550, 32
        %v2294 = vpop.permute.xlu0 %2293
        %2295 = vrot.lane.b32.xlu0 %v552, 32
        %v2296 = vpop.permute.xlu0 %2295
        %2297 = vrot.lane.b32.xlu0 %v555, 32
        %v2298 = vpop.permute.xlu0 %2297
        %2299 = vrot.lane.b32.xlu0 %v557, 32
        %v2300 = vpop.permute.xlu0 %2299
        %2301 = vrot.lane.b32.xlu0 %v560, 32
        %v2302 = vpop.permute.xlu0 %2301
        %2303 = vrot.lane.b32.xlu0 %v562, 32
        %v2304 = vpop.permute.xlu0 %2303
        %2305 = vrot.lane.b32.xlu0 %v565, 32
        %v2306 = vpop.permute.xlu0 %2305
        %2307 = vrot.lane.b32.xlu0 %v567, 32
        %v2308 = vpop.permute.xlu0 %2307
        %2309 = vrot.lane.b32.xlu0 %v570, 32
        %v2310 = vpop.permute.xlu0 %2309
        %2311 = vrot.lane.b32.xlu0 %v572, 32
        %v2312 = vpop.permute.xlu0 %2311
        %2313 = vrot.lane.b32.xlu0 %v575, 32
        %v2314 = vpop.permute.xlu0 %2313
        %2315 = vrot.lane.b32.xlu0 %v577, 32
        %v2316 = vpop.permute.xlu0 %2315
        %2317 = vrot.lane.b32.xlu0 %v580, 32
        %v2318 = vpop.permute.xlu0 %2317
        %2319 = vrot.lane.b32.xlu0 %v582, 32
        %v2320 = vpop.permute.xlu0 %2319
        %2321 = vrot.lane.b32.xlu0 %v596, 32
        %v2322 = vpop.permute.xlu0 %2321
        %2323 = vrot.lane.b32.xlu0 %v598, 32
        %v2324 = vpop.permute.xlu0 %2323
        %2325 = vrot.lane.b32.xlu0 %v612, 32
        %v2326 = vpop.permute.xlu0 %2325
        %2327 = vrot.lane.b32.xlu0 %v614, 32
        %v2328 = vpop.permute.xlu0 %2327
        %2393 = vrot.lane.b32.xlu0 %v1561, 52
        %v2394 = vpop.permute.xlu0 %2393
        %2395 = vrot.lane.b32.xlu0 %v1562, 52
        %v2396 = vpop.permute.xlu0 %2395
        %2397 = vrot.lane.b32.xlu0 %v1563, 52
        %v2398 = vpop.permute.xlu0 %2397
        %2399 = vrot.lane.b32.xlu0 %v1564, 52
        %v2400 = vpop.permute.xlu0 %2399
        %2401 = vrot.lane.b32.xlu0 %v1565, 52
        %v2402 = vpop.permute.xlu0 %2401
        %2403 = vrot.lane.b32.xlu0 %v1566, 52
        %v2404 = vpop.permute.xlu0 %2403
        %2405 = vrot.lane.b32.xlu0 %v1567, 52
        %v2406 = vpop.permute.xlu0 %2405
        %2407 = vrot.lane.b32.xlu0 %v1568, 52
        %v2408 = vpop.permute.xlu0 %2407
        %2409 = vrot.lane.b32.xlu0 %v1569, 52
        %v2410 = vpop.permute.xlu0 %2409
        %2411 = vrot.lane.b32.xlu0 %v1570, 52
        %v2412 = vpop.permute.xlu0 %2411
        %2413 = vrot.lane.b32.xlu0 %v1571, 52
        %v2414 = vpop.permute.xlu0 %2413
        %2415 = vrot.lane.b32.xlu0 %v1572, 52
        %v2416 = vpop.permute.xlu0 %2415
        %2417 = vrot.lane.b32.xlu0 %v1573, 52
        %v2418 = vpop.permute.xlu0 %2417
        %2419 = vrot.lane.b32.xlu0 %v1574, 52
        %v2420 = vpop.permute.xlu0 %2419
        %2421 = vrot.lane.b32.xlu0 %v1575, 52
        %v2422 = vpop.permute.xlu0 %2421
        %2423 = vrot.lane.b32.xlu0 %v1576, 52
        %v2424 = vpop.permute.xlu0 %2423
        %2425 = vrot.lane.b32.xlu0 %v1577, 52
        %v2426 = vpop.permute.xlu0 %2425
        %2427 = vrot.lane.b32.xlu0 %v1578, 52
        %v2428 = vpop.permute.xlu0 %2427
        %2429 = vrot.lane.b32.xlu0 %v1579, 52
        %v2430 = vpop.permute.xlu0 %2429
        %2431 = vrot.lane.b32.xlu0 %v1580, 52
        %v2432 = vpop.permute.xlu0 %2431
        %2433 = vrot.lane.b32.xlu0 %v1581, 52
        %v2434 = vpop.permute.xlu0 %2433
        %2435 = vrot.lane.b32.xlu0 %v1582, 52
        %v2436 = vpop.permute.xlu0 %2435
        %2437 = vrot.lane.b32.xlu0 %v1583, 52
        %v2438 = vpop.permute.xlu0 %2437
        %2439 = vrot.lane.b32.xlu0 %v1584, 52
        %v2440 = vpop.permute.xlu0 %2439
        %2441 = vrot.lane.b32.xlu0 %v1585, 52
        %v2442 = vpop.permute.xlu0 %2441
        %2443 = vrot.lane.b32.xlu0 %v1586, 52
        %v2444 = vpop.permute.xlu0 %2443
        %2445 = vrot.lane.b32.xlu0 %v1587, 52
        %v2446 = vpop.permute.xlu0 %2445
        %2447 = vrot.lane.b32.xlu0 %v1588, 52
        %v2448 = vpop.permute.xlu0 %2447
        %2449 = vrot.lane.b32.xlu0 %v1589, 52
        %v2450 = vpop.permute.xlu0 %2449
        %2451 = vrot.lane.b32.xlu0 %v1590, 52
        %v2452 = vpop.permute.xlu0 %2451
        %2453 = vrot.lane.b32.xlu0 %v1591, 52
        %v2454 = vpop.permute.xlu0 %2453
        %2455 = vrot.lane.b32.xlu0 %v1592, 52
        %v2456 = vpop.permute.xlu0 %2455
        %vm2489 = vcmask 162816
        %v2490 = vsel %vm2489, %v325, %v1594
        %v2491 = vsel %vm2489, %v326, %v1596
        %v2492 = vsel %vm2489, %v327, %v1598
        %v2493 = vsel %vm2489, %v328, %v1600
        %v2494 = vsel %vm2489, %v329, %v1602
        %v2495 = vsel %vm2489, %v330, %v1604
        %v2496 = vsel %vm2489, %v331, %v1606
        %v2497 = vsel %vm2489, %v332, %v1608
        %v2498 = vsel %vm2489, %v333, %v1610
        %v2499 = vsel %vm2489, %v334, %v1612
        %v2500 = vsel %vm2489, %v335, %v1614
        %v2501 = vsel %vm2489, %v336, %v1616
        %v2502 = vsel %vm2489, %v337, %v1618
        %v2503 = vsel %vm2489, %v338, %v1620
        %v2504 = vsel %vm2489, %v339, %v1622
        %v2505 = vsel %vm2489, %v340, %v1624
        %v2506 = vsel %vm2489, %v341, %v1626
        %v2507 = vsel %vm2489, %v342, %v1628
        %v2508 = vsel %vm2489, %v343, %v1630
        %v2509 = vsel %vm2489, %v344, %v1632
        %v2510 = vsel %vm2489, %v345, %v1634
        %v2511 = vsel %vm2489, %v346, %v1636
        %v2512 = vsel %vm2489, %v347, %v1638
        %v2513 = vsel %vm2489, %v348, %v1640
        %v2514 = vsel %vm2489, %v349, %v1642
        %v2515 = vsel %vm2489, %v350, %v1644
        %v2516 = vsel %vm2489, %v351, %v1646
        %v2517 = vsel %vm2489, %v352, %v1648
        %v2518 = vsel %vm2489, %v353, %v1650
        %v2519 = vsel %vm2489, %v354, %v1652
        %v2520 = vsel %vm2489, %v355, %v1654
        %v2521 = vsel %vm2489, %v356, %v1656
        %vm2522 = vcmask 326656
        %v2523 = vsel %vm2522, %v2490, %v1690
        %v2524 = vsel %vm2522, %v2491, %v1692
        %v2525 = vsel %vm2522, %v2492, %v1694
        %v2526 = vsel %vm2522, %v2493, %v1696
        %v2527 = vsel %vm2522, %v2494, %v1698
        %v2528 = vsel %vm2522, %v2495, %v1700
        %v2529 = vsel %vm2522, %v2496, %v1702
        %v2530 = vsel %vm2522, %v2497, %v1704
        %v2531 = vsel %vm2522, %v2498, %v1706
        %v2532 = vsel %vm2522, %v2499, %v1708
        %v2533 = vsel %vm2522, %v2500, %v1710
        %v2534 = vsel %vm2522, %v2501, %v1712
        %v2535 = vsel %vm2522, %v2502, %v1714
        %v2536 = vsel %vm2522, %v2503, %v1716
        %v2537 = vsel %vm2522, %v2504, %v1718
        %v2538 = vsel %vm2522, %v2505, %v1720
        %v2539 = vsel %vm2522, %v2506, %v1722
        %v2540 = vsel %vm2522, %v2507, %v1724
        %v2541 = vsel %vm2522, %v2508, %v1726
        %v2542 = vsel %vm2522, %v2509, %v1728
        %v2543 = vsel %vm2522, %v2510, %v1730
        %v2544 = vsel %vm2522, %v2511, %v1732
        %v2545 = vsel %vm2522, %v2512, %v1734
        %v2546 = vsel %vm2522, %v2513, %v1736
        %v2547 = vsel %vm2522, %v2514, %v1738
        %v2548 = vsel %vm2522, %v2515, %v1740
        %v2549 = vsel %vm2522, %v2516, %v1742
        %v2550 = vsel %vm2522, %v2517, %v1744
        %v2551 = vsel %vm2522, %v2518, %v1746
        %v2552 = vsel %vm2522, %v2519, %v1748
        %v2553 = vsel %vm2522, %v2520, %v1750
        %v2554 = vsel %vm2522, %v2521, %v1752
        %vm2555 = vcmask 490496
        %v2556 = vsel %vm2555, %v2523, %v1786
        %v2557 = vsel %vm2555, %v2524, %v1788
        %v2558 = vsel %vm2555, %v2525, %v1790
        %v2559 = vsel %vm2555, %v2526, %v1792
        %v2560 = vsel %vm2555, %v2527, %v1794
        %v2561 = vsel %vm2555, %v2528, %v1796
        %v2562 = vsel %vm2555, %v2529, %v1798
        %v2563 = vsel %vm2555, %v2530, %v1800
        %v2564 = vsel %vm2555, %v2531, %v1802
        %v2565 = vsel %vm2555, %v2532, %v1804
        %v2566 = vsel %vm2555, %v2533, %v1806
        %v2567 = vsel %vm2555, %v2534, %v1808
        %v2568 = vsel %vm2555, %v2535, %v1810
        %v2569 = vsel %vm2555, %v2536, %v1812
        %v2570 = vsel %vm2555, %v2537, %v1814
        %v2571 = vsel %vm2555, %v2538, %v1816
        %v2572 = vsel %vm2555, %v2539, %v1818
        %v2573 = vsel %vm2555, %v2540, %v1820
        %v2574 = vsel %vm2555, %v2541, %v1822
        %v2575 = vsel %vm2555, %v2542, %v1824
        %v2576 = vsel %vm2555, %v2543, %v1826
        %v2577 = vsel %vm2555, %v2544, %v1828
        %v2578 = vsel %vm2555, %v2545, %v1830
        %v2579 = vsel %vm2555, %v2546, %v1832
        %v2580 = vsel %vm2555, %v2547, %v1834
        %v2581 = vsel %vm2555, %v2548, %v1836
        %v2582 = vsel %vm2555, %v2549, %v1838
        %v2583 = vsel %vm2555, %v2550, %v1840
        %v2584 = vsel %vm2555, %v2551, %v1842
        %v2585 = vsel %vm2555, %v2552, %v1844
        %v2586 = vsel %vm2555, %v2553, %v1846
        %v2587 = vsel %vm2555, %v2554, %v1848
        %vm2588 = vcmask 654336
        %v2589 = vsel %vm2588, %v2556, %v1882
        %v2590 = vsel %vm2588, %v2557, %v1884
        %v2591 = vsel %vm2588, %v2558, %v1886
        %v2592 = vsel %vm2588, %v2559, %v1888
        %v2593 = vsel %vm2588, %v2560, %v1890
        %v2594 = vsel %vm2588, %v2561, %v1892
        %v2595 = vsel %vm2588, %v2562, %v1894
        %v2596 = vsel %vm2588, %v2563, %v1896
        %v2597 = vsel %vm2588, %v2564, %v1898
        %v2598 = vsel %vm2588, %v2565, %v1900
        %v2599 = vsel %vm2588, %v2566, %v1902
        %v2600 = vsel %vm2588, %v2567, %v1904
        %v2601 = vsel %vm2588, %v2568, %v1906
        %v2602 = vsel %vm2588, %v2569, %v1908
        %v2603 = vsel %vm2588, %v2570, %v1910
        %v2604 = vsel %vm2588, %v2571, %v1912
        %v2605 = vsel %vm2588, %v2572, %v1914
        %v2606 = vsel %vm2588, %v2573, %v1916
        %v2607 = vsel %vm2588, %v2574, %v1918
        %v2608 = vsel %vm2588, %v2575, %v1920
        %v2609 = vsel %vm2588, %v2576, %v1922
        %v2610 = vsel %vm2588, %v2577, %v1924
        %v2611 = vsel %vm2588, %v2578, %v1926
        %v2612 = vsel %vm2588, %v2579, %v1928
        %v2613 = vsel %vm2588, %v2580, %v1930
        %v2614 = vsel %vm2588, %v2581, %v1932
        %v2615 = vsel %vm2588, %v2582, %v1934
        %v2616 = vsel %vm2588, %v2583, %v1936
        %v2617 = vsel %vm2588, %v2584, %v1938
        %v2618 = vsel %vm2588, %v2585, %v1940
        %v2619 = vsel %vm2588, %v2586, %v1942
        %v2620 = vsel %vm2588, %v2587, %v1944
        %vm2621 = vcmask 818176
        %v2622 = vsel %vm2621, %v2589, %v1978
        %v2623 = vsel %vm2621, %v2590, %v1980
        %v2624 = vsel %vm2621, %v2591, %v1982
        %v2625 = vsel %vm2621, %v2592, %v1984
        %v2626 = vsel %vm2621, %v2593, %v1986
        %v2627 = vsel %vm2621, %v2594, %v1988
        %v2628 = vsel %vm2621, %v2595, %v1990
        %v2629 = vsel %vm2621, %v2596, %v1992
        %v2630 = vsel %vm2621, %v2597, %v1994
        %v2631 = vsel %vm2621, %v2598, %v1996
        %v2632 = vsel %vm2621, %v2599, %v1998
        %v2633 = vsel %vm2621, %v2600, %v2000
        %v2634 = vsel %vm2621, %v2601, %v2002
        %v2635 = vsel %vm2621, %v2602, %v2004
        %v2636 = vsel %vm2621, %v2603, %v2006
        %v2637 = vsel %vm2621, %v2604, %v2008
        %v2638 = vsel %vm2621, %v2605, %v2010
        %v2639 = vsel %vm2621, %v2606, %v2012
        %v2640 = vsel %vm2621, %v2607, %v2014
        %v2641 = vsel %vm2621, %v2608, %v2016
        %v2642 = vsel %vm2621, %v2609, %v2018
        %v2643 = vsel %vm2621, %v2610, %v2020
        %v2644 = vsel %vm2621, %v2611, %v2022
        %v2645 = vsel %vm2621, %v2612, %v2024
        %v2646 = vsel %vm2621, %v2613, %v2026
        %v2647 = vsel %vm2621, %v2614, %v2028
        %v2648 = vsel %vm2621, %v2615, %v2030
        %v2649 = vsel %vm2621, %v2616, %v2032
        %v2650 = vsel %vm2621, %v2617, %v2034
        %v2651 = vsel %vm2621, %v2618, %v2036
        %v2652 = vsel %vm2621, %v2619, %v2038
        %v2653 = vsel %vm2621, %v2620, %v2040
        %vm2654 = vcmask 982016
        %v2655 = vsel %vm2654, %v2622, %v2074
        %v2656 = vsel %vm2654, %v2623, %v2076
        %v2657 = vsel %vm2654, %v2624, %v2078
        %v2658 = vsel %vm2654, %v2625, %v2080
        %v2659 = vsel %vm2654, %v2626, %v2082
        %v2660 = vsel %vm2654, %v2627, %v2084
        %v2661 = vsel %vm2654, %v2628, %v2086
        %v2662 = vsel %vm2654, %v2629, %v2088
        %v2663 = vsel %vm2654, %v2630, %v2090
        %v2664 = vsel %vm2654, %v2631, %v2092
        %v2665 = vsel %vm2654, %v2632, %v2094
        %v2666 = vsel %vm2654, %v2633, %v2096
        %v2667 = vsel %vm2654, %v2634, %v2098
        %v2668 = vsel %vm2654, %v2635, %v2100
        %v2669 = vsel %vm2654, %v2636, %v2102
        %v2670 = vsel %vm2654, %v2637, %v2104
        %v2671 = vsel %vm2654, %v2638, %v2106
        %v2672 = vsel %vm2654, %v2639, %v2108
        %v2673 = vsel %vm2654, %v2640, %v2110
        %v2674 = vsel %vm2654, %v2641, %v2112
        %v2675 = vsel %vm2654, %v2642, %v2114
        %v2676 = vsel %vm2654, %v2643, %v2116
        %v2677 = vsel %vm2654, %v2644, %v2118
        %v2678 = vsel %vm2654, %v2645, %v2120
        %v2679 = vsel %vm2654, %v2646, %v2122
        %v2680 = vsel %vm2654, %v2647, %v2124
        %v2681 = vsel %vm2654, %v2648, %v2126
        %v2682 = vsel %vm2654, %v2649, %v2128
        %v2683 = vsel %vm2654, %v2650, %v2130
        %v2684 = vsel %vm2654, %v2651, %v2132
        %v2685 = vsel %vm2654, %v2652, %v2134
        %v2686 = vsel %vm2654, %v2653, %v2136
        %vm2687 = vcmask 97280
        %v2688 = vsel %vm2687, %v2074, %v2170
        %v2689 = vsel %vm2687, %v2076, %v2172
        %v2690 = vsel %vm2687, %v2078, %v2174
        %v2691 = vsel %vm2687, %v2080, %v2176
        %v2692 = vsel %vm2687, %v2082, %v2178
        %v2693 = vsel %vm2687, %v2084, %v2180
        %v2694 = vsel %vm2687, %v2086, %v2182
        %v2695 = vsel %vm2687, %v2088, %v2184
        %v2696 = vsel %vm2687, %v2090, %v2186
        %v2697 = vsel %vm2687, %v2092, %v2188
        %v2698 = vsel %vm2687, %v2094, %v2190
        %v2699 = vsel %vm2687, %v2096, %v2192
        %v2700 = vsel %vm2687, %v2098, %v2194
        %v2701 = vsel %vm2687, %v2100, %v2196
        %v2702 = vsel %vm2687, %v2102, %v2198
        %v2703 = vsel %vm2687, %v2104, %v2200
        %v2704 = vsel %vm2687, %v2106, %v2202
        %v2705 = vsel %vm2687, %v2108, %v2204
        %v2706 = vsel %vm2687, %v2110, %v2206
        %v2707 = vsel %vm2687, %v2112, %v2208
        %v2708 = vsel %vm2687, %v2114, %v2210
        %v2709 = vsel %vm2687, %v2116, %v2212
        %v2710 = vsel %vm2687, %v2118, %v2214
        %v2711 = vsel %vm2687, %v2120, %v2216
        %v2712 = vsel %vm2687, %v2122, %v2218
        %v2713 = vsel %vm2687, %v2124, %v2220
        %v2714 = vsel %vm2687, %v2126, %v2222
        %v2715 = vsel %vm2687, %v2128, %v2224
        %v2716 = vsel %vm2687, %v2130, %v2226
        %v2717 = vsel %vm2687, %v2132, %v2228
        %v2718 = vsel %vm2687, %v2134, %v2230
        %v2719 = vsel %vm2687, %v2136, %v2232
        %vm2720 = vcmask 261120
        %v2721 = vsel %vm2720, %v2688, %v2266
        %v2722 = vsel %vm2720, %v2689, %v2268
        %v2723 = vsel %vm2720, %v2690, %v2270
        %v2724 = vsel %vm2720, %v2691, %v2272
        %v2725 = vsel %vm2720, %v2692, %v2274
        %v2726 = vsel %vm2720, %v2693, %v2276
        %v2727 = vsel %vm2720, %v2694, %v2278
        %v2728 = vsel %vm2720, %v2695, %v2280
        %v2729 = vsel %vm2720, %v2696, %v2282
        %v2730 = vsel %vm2720, %v2697, %v2284
        %v2731 = vsel %vm2720, %v2698, %v2286
        %v2732 = vsel %vm2720, %v2699, %v2288
        %v2733 = vsel %vm2720, %v2700, %v2290
        %v2734 = vsel %vm2720, %v2701, %v2292
        %v2735 = vsel %vm2720, %v2702, %v2294
        %v2736 = vsel %vm2720, %v2703, %v2296
        %v2737 = vsel %vm2720, %v2704, %v2298
        %v2738 = vsel %vm2720, %v2705, %v2300
        %v2739 = vsel %vm2720, %v2706, %v2302
        %v2740 = vsel %vm2720, %v2707, %v2304
        %v2741 = vsel %vm2720, %v2708, %v2306
        %v2742 = vsel %vm2720, %v2709, %v2308
        %v2743 = vsel %vm2720, %v2710, %v2310
        %v2744 = vsel %vm2720, %v2711, %v2312
        %v2745 = vsel %vm2720, %v2712, %v2314
        %v2746 = vsel %vm2720, %v2713, %v2316
        %v2747 = vsel %vm2720, %v2714, %v2318
        %v2748 = vsel %vm2720, %v2715, %v2320
        %v2749 = vsel %vm2720, %v2716, %v2322
        %v2750 = vsel %vm2720, %v2717, %v2324
        %v2751 = vsel %vm2720, %v2718, %v2326
        %v2752 = vsel %vm2720, %v2719, %v2328
        %vm2753 = vcmask 424960
        %v2754 = vsel %vm2753, %v2721, %v2394
        %v2755 = vsel %vm2753, %v2722, %v2396
        %v2756 = vsel %vm2753, %v2723, %v2398
        %v2757 = vsel %vm2753, %v2724, %v2400
        %v2758 = vsel %vm2753, %v2725, %v2402
        %v2759 = vsel %vm2753, %v2726, %v2404
        %v2760 = vsel %vm2753, %v2727, %v2406
        %v2761 = vsel %vm2753, %v2728, %v2408
        %v2762 = vsel %vm2753, %v2729, %v2410
        %v2763 = vsel %vm2753, %v2730, %v2412
        %v2764 = vsel %vm2753, %v2731, %v2414
        %v2765 = vsel %vm2753, %v2732, %v2416
        %v2766 = vsel %vm2753, %v2733, %v2418
        %v2767 = vsel %vm2753, %v2734, %v2420
        %v2768 = vsel %vm2753, %v2735, %v2422
        %v2769 = vsel %vm2753, %v2736, %v2424
        %v2770 = vsel %vm2753, %v2737, %v2426
        %v2771 = vsel %vm2753, %v2738, %v2428
        %v2772 = vsel %vm2753, %v2739, %v2430
        %v2773 = vsel %vm2753, %v2740, %v2432
        %v2774 = vsel %vm2753, %v2741, %v2434
        %v2775 = vsel %vm2753, %v2742, %v2436
        %v2776 = vsel %vm2753, %v2743, %v2438
        %v2777 = vsel %vm2753, %v2744, %v2440
        %v2778 = vsel %vm2753, %v2745, %v2442
        %v2779 = vsel %vm2753, %v2746, %v2444
        %v2780 = vsel %vm2753, %v2747, %v2446
        %v2781 = vsel %vm2753, %v2748, %v2448
        %v2782 = vsel %vm2753, %v2749, %v2450
        %v2783 = vsel %vm2753, %v2750, %v2452
        %v2784 = vsel %vm2753, %v2751, %v2454
        %v2785 = vsel %vm2753, %v2752, %v2456
        %v2786 = vpack.c.bf16 %v2656, %v2655
        %v2787 = vpack.c.bf16 %v2755, %v2754
        %v2788 = vpack.c.bf16 %v2658, %v2657
        %v2789 = vpack.c.bf16 %v2757, %v2756
        %v2790 = vpack.c.bf16 %v2660, %v2659
        %v2791 = vpack.c.bf16 %v2759, %v2758
        %v2792 = vpack.c.bf16 %v2662, %v2661
        %v2793 = vpack.c.bf16 %v2761, %v2760
        %v2794 = vpack.c.bf16 %v2664, %v2663
        %v2795 = vpack.c.bf16 %v2763, %v2762
        %v2796 = vpack.c.bf16 %v2666, %v2665
        %v2797 = vpack.c.bf16 %v2765, %v2764
        %v2798 = vpack.c.bf16 %v2668, %v2667
        %v2799 = vpack.c.bf16 %v2767, %v2766
        %v2800 = vpack.c.bf16 %v2670, %v2669
        %v2801 = vpack.c.bf16 %v2769, %v2768
        %v2802 = vpack.c.bf16 %v2672, %v2671
        %v2803 = vpack.c.bf16 %v2771, %v2770
        %v2804 = vpack.c.bf16 %v2674, %v2673
        %v2805 = vpack.c.bf16 %v2773, %v2772
        %v2806 = vpack.c.bf16 %v2676, %v2675
        %v2807 = vpack.c.bf16 %v2775, %v2774
        %v2808 = vpack.c.bf16 %v2678, %v2677
        %v2809 = vpack.c.bf16 %v2777, %v2776
        %v2810 = vpack.c.bf16 %v2680, %v2679
        %v2811 = vpack.c.bf16 %v2779, %v2778
        %v2812 = vpack.c.bf16 %v2682, %v2681
        %v2813 = vpack.c.bf16 %v2781, %v2780
        %v2814 = vpack.c.bf16 %v2684, %v2683
        %v2815 = vpack.c.bf16 %v2783, %v2782
        %v2816 = vpack.c.bf16 %v2686, %v2685
        %v2817 = vpack.c.bf16 %v2785, %v2784
        %v2818 = vld [vmem:[%s2] sm:$0xf]
        %v2819 = vld [vmem:[%s2 + $0x4] sm:$0xf]
        %v2820 = vld [vmem:[%s2 + $0x8] sm:$0xf]
        %v2821 = vld [vmem:[%s2 + $0xc] sm:$0xf]
        %v2822 = vld [vmem:[%s2 + $0x10] sm:$0xf]
        %v2823 = vld [vmem:[%s2 + $0x14] sm:$0xf]
        %v2824 = vld [vmem:[%s2 + $0x18] sm:$0xf]
        %v2825 = vld [vmem:[%s2 + $0x1c] sm:$0xf]
        %v2826 = vld [vmem:[%s2 + $0x20] sm:$0xf]
        %v2827 = vld [vmem:[%s2 + $0x24] sm:$0xf]
        %v2828 = vld [vmem:[%s2 + $0x28] sm:$0xf]
        %v2829 = vld [vmem:[%s2 + $0x2c] sm:$0xf]
        %v2830 = vld [vmem:[%s2 + $0x30] sm:$0xf]
        %v2831 = vld [vmem:[%s2 + $0x34] sm:$0xf]
        %v2832 = vld [vmem:[%s2 + $0x38] sm:$0xf]
        %v2833 = vld [vmem:[%s2 + $0x3c] sm:$0xf]
        %v2834 = vld [vmem:[%s2 + $0x40] sm:$0xf]
        %v2835 = vld [vmem:[%s2 + $0x44] sm:$0xf]
        %v2836 = vld [vmem:[%s2 + $0x48] sm:$0xf]
        %v2837 = vld [vmem:[%s2 + $0x4c] sm:$0xf]
        %v2838 = vld [vmem:[%s2 + $0x50] sm:$0xf]
        %v2839 = vld [vmem:[%s2 + $0x54] sm:$0xf]
        %v2840 = vld [vmem:[%s2 + $0x58] sm:$0xf]
        %v2841 = vld [vmem:[%s2 + $0x5c] sm:$0x3]
        %v2842 = vld [vmem:[%s3] sm:$0x1]
        %v2844 = vlaneseq
        %v2845 = vshrl.u32 %v2844, 7
        %v2846 = vsub.s32 0, %v2845
        %v2847 = vrot.slane %v2842, %v2846
        %v2873 = vunpack.c.l.b16 %v2818
        %v2874 = vunpack.c.l.b16 %v2819
        %v2875 = vunpack.c.l.b16 %v2820
        %v2876 = vunpack.c.l.b16 %v2821
        %v2877 = vunpack.c.l.b16 %v2822
        %v2878 = vunpack.c.l.b16 %v2823
        %v2879 = vunpack.c.l.b16 %v2824
        %v2880 = vunpack.c.l.b16 %v2825
        %v2881 = vunpack.c.l.b16 %v2826
        %v2882 = vunpack.c.l.b16 %v2827
        %v2883 = vunpack.c.l.b16 %v2828
        %v2884 = vunpack.c.l.b16 %v2829
        %v2885 = vunpack.c.l.b16 %v2830
        %v2886 = vunpack.c.l.b16 %v2831
        %v2887 = vunpack.c.l.b16 %v2832
        %v2888 = vunpack.c.l.b16 %v2833
        %v2889 = vunpack.c.l.b16 %v2834
        %v2890 = vunpack.c.l.b16 %v2835
        %v2891 = vunpack.c.l.b16 %v2836
        %v2892 = vunpack.c.l.b16 %v2837
        %v2893 = vunpack.c.l.b16 %v2838
        %v2894 = vunpack.c.l.b16 %v2839
        %v2895 = vunpack.c.l.b16 %v2840
        %v2896 = vunpack.c.l.b16 %v2841
        %v2897 = vpack.c.b16 %v2874, %v2873
        %v2898 = vpack.c.b16 %v2876, %v2875
        %v2899 = vpack.c.b16 %v2878, %v2877
        %v2900 = vpack.c.b16 %v2880, %v2879
        %v2901 = vpack.c.b16 %v2882, %v2881
        %v2902 = vpack.c.b16 %v2884, %v2883
        %v2903 = vpack.c.b16 %v2886, %v2885
        %v2904 = vpack.c.b16 %v2888, %v2887
        %v2905 = vpack.c.b16 %v2890, %v2889
        %v2906 = vpack.c.b16 %v2892, %v2891
        %v2907 = vpack.c.b16 %v2894, %v2893
        %v2908 = vpack.c.b16 %v2896, %v2895
        %v2921 = vsel %vm2555, %v2787, 0
        %v2924 = vsel %vm2555, %v2789, 0
        %v2927 = vsel %vm2555, %v2791, 0
        %v2930 = vsel %vm2555, %v2793, 0
        %v2933 = vsel %vm2555, %v2795, 0
        %v2936 = vsel %vm2555, %v2797, 0
        %v2939 = vsel %vm2555, %v2799, 0
        %v2942 = vsel %vm2555, %v2801, 0
        %v2945 = vsel %vm2555, %v2803, 0
        %v2948 = vsel %vm2555, %v2805, 0
        %v2951 = vsel %vm2555, %v2807, 0
        %v2954 = vsel %vm2555, %v2809, 0
        %v2957 = vsel %vm2555, %v2811, 0
        %v2960 = vsel %vm2555, %v2813, 0
        %v2963 = vsel %vm2555, %v2815, 0
        %v2966 = vsel %vm2555, %v2817, 0
        %v2969 = vsel %vm502, %v2908, 0
        %2971 = vmatprep.subr.bf16.mxu0 0
        %2972 = vmatpush1.bf16.msra.mxu0 %v2897
        %2973 = vmatprep.subr.bf16.mxu0 0
        %2974 = vmatpush1.bf16.msra.mxu0 %v2898
        %2975 = vmatprep.subr.bf16.mxu0 0
        %2976 = vmatpush1.bf16.msra.mxu0 %v2899
        %2977 = vmatprep.subr.bf16.mxu0 0
        %2978 = vmatpush1.bf16.msra.mxu0 %v2900
        %2979 = vmatprep.subr.bf16.mxu0 0
        %2980 = vmatpush1.bf16.msra.mxu0 %v2901
        %2981 = vmatprep.subr.bf16.mxu0 0
        %2982 = vmatpush1.bf16.msra.mxu0 %v2902
        %2983 = vmatprep.subr.bf16.mxu0 0
        %2984 = vmatpush1.bf16.msra.mxu0 %v2903
        %2985 = vmatprep.subr.bf16.mxu0 0
        %2986 = vmatpush1.bf16.msra.mxu0 %v2904
        %2987 = vmatprep.subr.bf16.mxu0 0
        %2988 = vmatpush1.bf16.msra.mxu0 %v2905
        %2989 = vmatprep.subr.bf16.mxu0 0
        %2990 = vmatpush1.bf16.msra.mxu0 %v2906
        %2991 = vmatprep.subr.bf16.mxu0 0
        %2992 = vmatpush1.bf16.msra.mxu0 %v2907
        %2993 = vmatprep.subr.bf16.mxu0 0
        %2994 = vmatpush1.bf16.msra.mxu0 %v2969
        %2995 = vmatprep.subr.bf16.mxu0 0
        %2996 = vmatpush1.bf16.msra.mxu0 0
        %2997 = vmatprep.subr.bf16.mxu0 0
        %2998 = vmatpush1.bf16.msra.mxu0 0
        %2999 = vmatprep.subr.bf16.mxu0 0
        %3000 = vmatpush1.bf16.msra.mxu0 0
        %3001 = vmatprep.subr.bf16.mxu0 0
        %3002 = vmatpush1.bf16.msra.mxu0 0
        %3003 = vmatprep.mubr.bf16.mxu0 %v2921
        %3004 = vmatmul.mubr.bf16.gmra.mrb[0].mxu0 %v2786
        %v3005 = vpop.f32.mrb[0].mxu0
        %v3006 = vadd.f32 %v2847, %v3005
        %v3007 = vpop.f32.mrb[0].mxu0
        %v3008 = vpop.f32.mrb[0].mxu0
        %v3009 = vadd.f32 %v2847, %v3008
        %v3010 = vpop.f32.mrb[0].mxu0
        %3011 = vmatprep.mubr.bf16.mxu0 %v2924
        %3012 = vmatmul.mubr.bf16.gmra.mrb[0].mxu0 %v2788
        %v3013 = vpop.f32.mrb[0].mxu0
        %v3014 = vadd.f32 %v2847, %v3013
        %v3015 = vpop.f32.mrb[0].mxu0
        %v3016 = vpop.f32.mrb[0].mxu0
        %v3017 = vadd.f32 %v2847, %v3016
        %v3018 = vpop.f32.mrb[0].mxu0
        %3019 = vmatprep.mubr.bf16.mxu0 %v2927
        %3020 = vmatmul.mubr.bf16.gmra.mrb[0].mxu0 %v2790
        %v3021 = vpop.f32.mrb[0].mxu0
        %v3022 = vadd.f32 %v2847, %v3021
        %v3023 = vpop.f32.mrb[0].mxu0
        %v3024 = vpop.f32.mrb[0].mxu0
        %v3025 = vadd.f32 %v2847, %v3024
        %v3026 = vpop.f32.mrb[0].mxu0
        %3027 = vmatprep.mubr.bf16.mxu0 %v2930
        %3028 = vmatmul.mubr.bf16.gmra.mrb[0].mxu0 %v2792
        %v3029 = vpop.f32.mrb[0].mxu0
        %v3030 = vadd.f32 %v2847, %v3029
        %v3031 = vpop.f32.mrb[0].mxu0
        %v3032 = vpop.f32.mrb[0].mxu0
        %v3033 = vadd.f32 %v2847, %v3032
        %v3034 = vpop.f32.mrb[0].mxu0
        %3035 = vmatprep.mubr.bf16.mxu0 %v2933
        %3036 = vmatmul.mubr.bf16.gmra.mrb[0].mxu0 %v2794
        %v3037 = vpop.f32.mrb[0].mxu0
        %v3038 = vadd.f32 %v2847, %v3037
        %v3039 = vpop.f32.mrb[0].mxu0
        %v3040 = vpop.f32.mrb[0].mxu0
        %v3041 = vadd.f32 %v2847, %v3040
        %v3042 = vpop.f32.mrb[0].mxu0
        %3043 = vmatprep.mubr.bf16.mxu0 %v2936
        %3044 = vmatmul.mubr.bf16.gmra.mrb[0].mxu0 %v2796
        %v3045 = vpop.f32.mrb[0].mxu0
        %v3046 = vadd.f32 %v2847, %v3045
        %v3047 = vpop.f32.mrb[0].mxu0
        %v3048 = vpop.f32.mrb[0].mxu0
        %v3049 = vadd.f32 %v2847, %v3048
        %v3050 = vpop.f32.mrb[0].mxu0
        %3051 = vmatprep.mubr.bf16.mxu0 %v2939
        %3052 = vmatmul.mubr.bf16.gmra.mrb[0].mxu0 %v2798
        %v3053 = vpop.f32.mrb[0].mxu0
        %v3054 = vadd.f32 %v2847, %v3053
        %v3055 = vpop.f32.mrb[0].mxu0
        %v3056 = vpop.f32.mrb[0].mxu0
        %v3057 = vadd.f32 %v2847, %v3056
        %v3058 = vpop.f32.mrb[0].mxu0
        %3059 = vmatprep.mubr.bf16.mxu0 %v2942
        %3060 = vmatmul.mubr.bf16.gmra.mrb[0].mxu0 %v2800
        %v3061 = vpop.f32.mrb[0].mxu0
        %v3062 = vadd.f32 %v2847, %v3061
        %v3063 = vpop.f32.mrb[0].mxu0
        %v3064 = vpop.f32.mrb[0].mxu0
        %v3065 = vadd.f32 %v2847, %v3064
        %v3066 = vpop.f32.mrb[0].mxu0
        %3067 = vmatprep.mubr.bf16.mxu0 %v2945
        %3068 = vmatmul.mubr.bf16.gmra.mrb[0].mxu0 %v2802
        %v3069 = vpop.f32.mrb[0].mxu0
        %v3070 = vadd.f32 %v2847, %v3069
        %v3071 = vpop.f32.mrb[0].mxu0
        %v3072 = vpop.f32.mrb[0].mxu0
        %v3073 = vadd.f32 %v2847, %v3072
        %v3074 = vpop.f32.mrb[0].mxu0
        %3075 = vmatprep.mubr.bf16.mxu0 %v2948
        %3076 = vmatmul.mubr.bf16.gmra.mrb[0].mxu0 %v2804
        %v3077 = vpop.f32.mrb[0].mxu0
        %v3078 = vadd.f32 %v2847, %v3077
        %v3079 = vpop.f32.mrb[0].mxu0
        %v3080 = vpop.f32.mrb[0].mxu0
        %v3081 = vadd.f32 %v2847, %v3080
        %v3082 = vpop.f32.mrb[0].mxu0
        %3083 = vmatprep.mubr.bf16.mxu0 %v2951
        %3084 = vmatmul.mubr.bf16.gmra.mrb[0].mxu0 %v2806
        %v3085 = vpop.f32.mrb[0].mxu0
        %v3086 = vadd.f32 %v2847, %v3085
        %v3087 = vpop.f32.mrb[0].mxu0
        %v3088 = vpop.f32.mrb[0].mxu0
        %v3089 = vadd.f32 %v2847, %v3088
        %v3090 = vpop.f32.mrb[0].mxu0
        %3091 = vmatprep.mubr.bf16.mxu0 %v2954
        %3092 = vmatmul.mubr.bf16.gmra.mrb[0].mxu0 %v2808
        %v3093 = vpop.f32.mrb[0].mxu0
        %v3094 = vadd.f32 %v2847, %v3093
        %v3095 = vpop.f32.mrb[0].mxu0
        %v3096 = vpop.f32.mrb[0].mxu0
        %v3097 = vadd.f32 %v2847, %v3096
        %v3098 = vpop.f32.mrb[0].mxu0
        %3099 = vmatprep.mubr.bf16.mxu0 %v2957
        %3100 = vmatmul.mubr.bf16.gmra.mrb[0].mxu0 %v2810
        %v3101 = vpop.f32.mrb[0].mxu0
        %v3102 = vadd.f32 %v2847, %v3101
        %v3103 = vpop.f32.mrb[0].mxu0
        %v3104 = vpop.f32.mrb[0].mxu0
        %v3105 = vadd.f32 %v2847, %v3104
        %v3106 = vpop.f32.mrb[0].mxu0
        %3107 = vmatprep.mubr.bf16.mxu0 %v2960
        %3108 = vmatmul.mubr.bf16.gmra.mrb[0].mxu0 %v2812
        %v3109 = vpop.f32.mrb[0].mxu0
        %v3110 = vadd.f32 %v2847, %v3109
        %v3111 = vpop.f32.mrb[0].mxu0
        %v3112 = vpop.f32.mrb[0].mxu0
        %v3113 = vadd.f32 %v2847, %v3112
        %v3114 = vpop.f32.mrb[0].mxu0
        %3115 = vmatprep.mubr.bf16.mxu0 %v2963
        %3116 = vmatmul.mubr.bf16.gmra.mrb[0].mxu0 %v2814
        %v3117 = vpop.f32.mrb[0].mxu0
        %v3118 = vadd.f32 %v2847, %v3117
        %v3119 = vpop.f32.mrb[0].mxu0
        %v3120 = vpop.f32.mrb[0].mxu0
        %v3121 = vadd.f32 %v2847, %v3120
        %v3122 = vpop.f32.mrb[0].mxu0
        %3123 = vmatprep.mubr.bf16.mxu0 %v2966
        %3124 = vmatmul.mubr.bf16.gmra.mrb[0].mxu0 %v2816
        %v3125 = vpop.f32.mrb[0].mxu0
        %v3126 = vadd.f32 %v2847, %v3125
        %v3127 = vpop.f32.mrb[0].mxu0
        %v3128 = vpop.f32.mrb[0].mxu0
        %v3129 = vadd.f32 %v2847, %v3128
        %v3130 = vpop.f32.mrb[0].mxu0
        %3131 = vdwg.mxu0
        %v3132 = vmax.f32 %v3006, 0.0
        %v3133 = vmax.f32 %v3009, 0.0
        %v3134 = vmax.f32 %v3014, 0.0
        %v3135 = vmax.f32 %v3017, 0.0
        %v3136 = vmax.f32 %v3022, 0.0
        %v3137 = vmax.f32 %v3025, 0.0
        %v3138 = vmax.f32 %v3030, 0.0
        %v3139 = vmax.f32 %v3033, 0.0
        %v3140 = vmax.f32 %v3038, 0.0
        %v3141 = vmax.f32 %v3041, 0.0
        %v3142 = vmax.f32 %v3046, 0.0
        %v3143 = vmax.f32 %v3049, 0.0
        %v3144 = vmax.f32 %v3054, 0.0
        %v3145 = vmax.f32 %v3057, 0.0
        %v3146 = vmax.f32 %v3062, 0.0
        %v3147 = vmax.f32 %v3065, 0.0
        %v3148 = vmax.f32 %v3070, 0.0
        %v3149 = vmax.f32 %v3073, 0.0
        %v3150 = vmax.f32 %v3078, 0.0
        %v3151 = vmax.f32 %v3081, 0.0
        %v3152 = vmax.f32 %v3086, 0.0
        %v3153 = vmax.f32 %v3089, 0.0
        %v3154 = vmax.f32 %v3094, 0.0
        %v3155 = vmax.f32 %v3097, 0.0
        %v3156 = vmax.f32 %v3102, 0.0
        %v3157 = vmax.f32 %v3105, 0.0
        %v3158 = vmax.f32 %v3110, 0.0
        %v3159 = vmax.f32 %v3113, 0.0
        %v3160 = vmax.f32 %v3118, 0.0
        %v3161 = vmax.f32 %v3121, 0.0
        %v3162 = vmax.f32 %v3126, 0.0
        %v3163 = vmax.f32 %v3129, 0.0
        %3164 = vst.msk [vmem:[%s205] sm:$0xff] %vm2522, %v3132
        %3165 = vst.msk [vmem:[%s205 + $0x8] sm:$0xff] %vm2522, %v3133
        %3166 = vst.msk [vmem:[%s205 + $0x10] sm:$0xff] %vm2522, %v3134
        %3167 = vst.msk [vmem:[%s205 + $0x18] sm:$0xff] %vm2522, %v3135
        %3168 = vst.msk [vmem:[%s205 + $0x20] sm:$0xff] %vm2522, %v3136
        %3169 = vst.msk [vmem:[%s205 + $0x28] sm:$0xff] %vm2522, %v3137
        %3170 = vst.msk [vmem:[%s205 + $0x30] sm:$0xff] %vm2522, %v3138
        %3171 = vst.msk [vmem:[%s205 + $0x38] sm:$0xff] %vm2522, %v3139
        %3172 = vst.msk [vmem:[%s205 + $0x40] sm:$0xff] %vm2522, %v3140
        %3173 = vst.msk [vmem:[%s205 + $0x48] sm:$0xff] %vm2522, %v3141
        %3174 = vst.msk [vmem:[%s205 + $0x50] sm:$0xff] %vm2522, %v3142
        %3175 = vst.msk [vmem:[%s205 + $0x58] sm:$0xff] %vm2522, %v3143
        %3176 = vst.msk [vmem:[%s205 + $0x60] sm:$0xff] %vm2522, %v3144
        %3177 = vst.msk [vmem:[%s205 + $0x68] sm:$0xff] %vm2522, %v3145
        %3178 = vst.msk [vmem:[%s205 + $0x70] sm:$0xff] %vm2522, %v3146
        %3179 = vst.msk [vmem:[%s205 + $0x78] sm:$0xff] %vm2522, %v3147
        %3180 = vst.msk [vmem:[%s205 + $0x80] sm:$0xff] %vm2522, %v3148
        %3181 = vst.msk [vmem:[%s205 + $0x88] sm:$0xff] %vm2522, %v3149
        %3182 = vst.msk [vmem:[%s205 + $0x90] sm:$0xff] %vm2522, %v3150
        %3183 = vst.msk [vmem:[%s205 + $0x98] sm:$0xff] %vm2522, %v3151
        %3184 = vst.msk [vmem:[%s205 + $0xa0] sm:$0xff] %vm2522, %v3152
        %3185 = vst.msk [vmem:[%s205 + $0xa8] sm:$0xff] %vm2522, %v3153
        %3186 = vst.msk [vmem:[%s205 + $0xb0] sm:$0xff] %vm2522, %v3154
        %3187 = vst.msk [vmem:[%s205 + $0xb8] sm:$0xff] %vm2522, %v3155
        %3188 = vst.msk [vmem:[%s205 + $0xc0] sm:$0xff] %vm2522, %v3156
        %3189 = vst.msk [vmem:[%s205 + $0xc8] sm:$0xff] %vm2522, %v3157
        %3190 = vst.msk [vmem:[%s205 + $0xd0] sm:$0xff] %vm2522, %v3158
        %3191 = vst.msk [vmem:[%s205 + $0xd8] sm:$0xff] %vm2522, %v3159
        %3192 = vst.msk [vmem:[%s205 + $0xe0] sm:$0xff] %vm2522, %v3160
        %3193 = vst.msk [vmem:[%s205 + $0xe8] sm:$0xff] %vm2522, %v3161
        %3194 = vst.msk [vmem:[%s205 + $0xf0] sm:$0xff] %vm2522, %v3162
        %3195 = vst.msk [vmem:[%s205 + $0xf8] sm:$0xff] %vm2522, %v3163
        %s3196 = sand.u32 %s120, 1
        %s3197 = scalar_lea.sflag [#allocation3], %s3196
        %s3198 = sand.u32 %s120, 1
        %s3199 = smul.addr %s3198, 256
        %s3200 = scalar_lea.vmem [#allocation2], %s3199
        // Predicated region
        $region37: #{inception_forward.3} parent=35 // pred_check
          %p3201 = pneg %p130
        $region38: #{inception_forward.3} parent=35 // pred_check_branch
          %3203 = sbr.rel (%p3201) target = $region40
        $region39: #{inception_forward.3} parent=35 // pred_region
          %s3205 = ssub.s32 4096, 4096
          %3206 = vsyncadd %s3197, %s3205
          %s3207 = smul.addr %s18, 32
          %s3208 = smul.addr %s3207, 128
          %s3209 = scalar_lea.hbm %s4, %s3208
          %s3210 = sshll.u32 %s3200, 4
          %s3211 = int_to_ptr.vmem [resolvable:$true] %s3210
          %3216 = dma.vmem_to_hbm [thread:$0]  %s3211, 4096, %s3209, %s3197, 128, 128, 8
        $region40: #{inception_forward.3} parent=35 // pred_fallthru
          _
      $region36: #{inception_forward.3} parent=5 // pred_fallthru
        _
      %p3217 = scmp.le.s32.totalorder 2, %s13
      // Predicated region
      $region41: #{inception_forward.3} parent=5 // pred_check
        %p3218 = pneg %p3217
      $region42: #{inception_forward.3} parent=5 // pred_check_branch
        %3220 = sbr.rel (%p3218) target = $region44
      $region43: #{inception_forward.3} parent=5 // pred_region
        %s3221 = ssub.s32 %s13, 2
        // Predicated region
        $region45: #{inception_forward.3} parent=43 // pred_check
          %p3222 = pneg %p136
        $region46: #{inception_forward.3} parent=43 // pred_check_branch
          %3224 = sbr.rel (%p3222) target = $region48
        $region47: #{inception_forward.3} parent=43 // pred_region
          %s3225 = sand.u32 %s121, 1
          %s3226 = scalar_lea.sflag [#allocation3], %s3225
          %s3227 = sand.u32 %s121, 1
          %s3228 = smul.addr %s3227, 256
          %s3229 = scalar_lea.vmem [#allocation2], %s3228
          %3230 = dma.done %s3226, 4096
        $region48: #{inception_forward.3} parent=43 // pred_fallthru
          _
      $region44: #{inception_forward.3} parent=5 // pred_fallthru
        _
    $region6: #{inception_forward.3} parent=1 // loop_footer
      %s17 = sadd.s32 1, %s13
    $region7: #{inception_forward.3} parent=1 // loop_footer_branch
      %12 = sbr.rel target = $region3
    $region8: #{inception_forward.3} parent=1 // loop_exit
      _
    %3231 = vsyncpa [#allocation3], 1
    %s3232 = scalar_lea.sflag [#allocation3], 1
    %3233 = vsyncpa %s3232, 1

</llo_original>
